<compile_context>
chip_gen: v5e
topology: v5e:2x2
jax: 0.10.0
libtpu: 0.0.40
codegen_flags: <defaults>
</compile_context>

<pallas_src>
import functools

import jax
import jax.numpy as jnp
from jax.experimental import pallas as pl
from jax.experimental.pallas import tpu as pltpu

_BN_EPS = 1e-5
_ACT_DTYPE = jnp.bfloat16           # inter-kernel activation / MXU input dtype
_PATCH_BUDGET = 3 * 1024 * 1024     # bytes allowed for the staged im2col patch


def _round_up(x, m):
    return (x + m - 1) // m * m


@functools.lru_cache(maxsize=None)
def _vmem_limit_bytes():
    # Leave headroom below physical VMEM (v7x has only 64 MiB per TensorCore).
    try:
        cap = int(pltpu.get_tpu_info().vmem_capacity_bytes)
        return min(cap * 3 // 4, 96 * 1024 * 1024)
    except Exception:
        return 48 * 1024 * 1024


def _pick_stripe(H, Wb, K, Cin):
    """Output rows per grid step: keeps the im2col patch under budget and gives
    >= 2 grid steps per image so DMA/compute overlap (and both v7x cores stay
    busy at small batch)."""
    budget_rows = max(1, _PATCH_BUDGET // (Wb * K * K * Cin * 2))
    best = 1
    for sh in range(1, H + 1):
        if H % sh or sh > 32 or sh > budget_rows:
            continue
        if H >= 16 and H // sh < 2:
            continue
        best = sh
    return best


# ----------------------------------------------------------------------------
# Conv kernel: stride-1 "same" conv, one image per outer grid index, one row
# stripe per inner grid index.  Optional fused prologue on the input
# (BN+ReLU, or BN+residual-add with the result also emitted as the "carry"
# output), optional per-image BN stats of the raw conv output, optional
# epilogue activation.
# ----------------------------------------------------------------------------
def _make_conv_kernel(N, H, W, K, Cin, Cout, Wb, Hp, stripe_h,
                      prologue, emit_carry, emit_stats, epilogue, count):
    pad = (K - 1) // 2
    rows = stripe_h * Wb

    def kernel(*refs):
        it = iter(refs)
        x_ref = next(it)                          # (1, H, W, Cin)  bf16
        w_ref = next(it)                          # (K*K*Cin, Cout) bf16
        b_ref = next(it)                          # (1, Cout)       f32
        stats_in_ref = gamma_ref = beta_ref = res_ref = None
        if prologue is not None:
            stats_in_ref = next(it)               # (N, 2, Cin) f32
            gamma_ref = next(it)                  # (1, Cin)    f32
            beta_ref = next(it)                   # (1, Cin)    f32
        if prologue == "bn_add":
            res_ref = next(it)                    # (1, H, W, Cin) bf16
        o_ref = next(it)                          # (1, stripe_h, W, Cout)
        carry_ref = next(it) if emit_carry else None
        stats_out_ref = next(it) if emit_stats else None    # (1, 2, Cout) f32
        xbuf_ref = next(it)                       # VMEM (Hp, Wb, Cin) bf16
        patch_ref = next(it)                      # VMEM (rows, K*K*Cin) bf16

        s = pl.program_id(1)

        # ---- whole-image staging (+ fused BN prologue), once per image ----
        @pl.when(s == 0)
        def _stage():
            x = x_ref[0]                                       # (H, W, Cin)
            if prologue is None:
                xin = x                                        # no f32 round trip
            else:
                st = jnp.sum(stats_in_ref[...], axis=0)        # (2, Cin) f32
                mean = st[0:1, :] * (1.0 / count)
                var = jnp.maximum(st[1:2, :] * (1.0 / count) - mean * mean, 0.0)
                inv = jax.lax.rsqrt(var + _BN_EPS)
                scale = gamma_ref[...] * inv                   # (1, Cin)
                shift = beta_ref[...] - mean * scale
                y = (x.astype(jnp.float32) * scale.reshape(1, 1, Cin)
                     + shift.reshape(1, 1, Cin))
                if prologue == "bn_relu":
                    y = jnp.maximum(y, 0.0)
                else:                                          # "bn_add"
                    y = y + res_ref[0].astype(jnp.float32)
                xin = y.astype(xbuf_ref.dtype)
            # Zero only the padded halo (interior is fully overwritten).
            xbuf_ref[0:pad, :, :] = jnp.zeros((pad, Wb, Cin), xbuf_ref.dtype)
            xbuf_ref[pad + H:Hp, :, :] = jnp.zeros((Hp - pad - H, Wb, Cin),
                                                   xbuf_ref.dtype)
            xbuf_ref[pad:pad + H, 0:pad, :] = jnp.zeros((H, pad, Cin),
                                                        xbuf_ref.dtype)
            xbuf_ref[pad:pad + H, pad + W:Wb, :] = jnp.zeros((H, Wb - pad - W, Cin),
                                                             xbuf_ref.dtype)
            xbuf_ref[pad:pad + H, pad:pad + W, :] = xin

        row0 = s * stripe_h

        # Carry output (prologue result = residual carry for the next block),
        # read back from the staging buffer for this stripe's rows.
        if emit_carry:
            cr = xbuf_ref[pl.ds(pad + row0, stripe_h), pl.ds(pad, W), :]
            carry_ref[...] = cr.reshape(1, stripe_h, W, Cin).astype(carry_ref.dtype)

        # ---- stage the folded im2col patch for this stripe ----
        # Per kernel row kh: load a contiguous (stripe_h+1, Wb, Cin) slab
        # (layout-preserving flatten, Wb % 8 == 0); the kw shift is a static
        # sublane slice of the flat slab.  Wrap/garbage only lands in output
        # columns >= W, which are discarded below.
        for kh in range(K):
            big = xbuf_ref[pl.ds(row0 + kh, stripe_h + 1), :, :]
            big = big.reshape((stripe_h + 1) * Wb, Cin)
            for kw in range(K):
                j = (kh * K + kw) * Cin
                patch_ref[:, j:j + Cin] = big[kw:kw + rows, :]

        # One MXU dot of depth K*K*Cin for the whole stripe (f32 accumulate).
        acc = jnp.dot(patch_ref[...], w_ref[...],
                      preferred_element_type=jnp.float32)          # (rows, Cout)
        acc = acc.reshape(stripe_h, Wb, Cout)[:, :W, :]             # drop halo cols
        acc = acc + b_ref[...].reshape(1, 1, Cout)

        if emit_stats:
            flat = acc.reshape(stripe_h * W, Cout)
            s1 = jnp.sum(flat, axis=0, keepdims=True)               # (1, Cout)
            s2 = jnp.sum(flat * flat, axis=0, keepdims=True)
            st_out = jnp.concatenate([s1, s2], axis=0).reshape(1, 2, Cout)

            @pl.when(s == 0)
            def _init_stats():
                stats_out_ref[...] = jnp.zeros_like(stats_out_ref)

            stats_out_ref[...] += st_out

        if epilogue == "relu":
            acc = jnp.maximum(acc, 0.0)
        elif epilogue == "tanh":
            acc = jnp.tanh(acc)
        o_ref[...] = acc.reshape(1, stripe_h, W, Cout).astype(o_ref.dtype)

    return kernel


@functools.cache
def _build_conv(N, H, W, Cin, Cout, K, prologue, emit_carry, emit_stats,
                epilogue, out_dtype):
    pad = (K - 1) // 2
    Wb = _round_up(W + 2 * pad, 8)          # padded row width (sublane aligned)
    Hp = H + K                              # +1 extra zero row for flat shifts
    stripe_h = _pick_stripe(H, Wb, K, Cin)
    n_stripes = H // stripe_h
    rows = stripe_h * Wb
    count = float(N * H * W)                # BN count for the prologue stats

    kernel = _make_conv_kernel(N, H, W, K, Cin, Cout, Wb, Hp, stripe_h,
                               prologue, emit_carry, emit_stats, epilogue, count)

    in_specs = [
        pl.BlockSpec((1, H, W, Cin), lambda n, s: (n, 0, 0, 0)),
        pl.BlockSpec((K * K * Cin, Cout), lambda n, s: (0, 0)),
        pl.BlockSpec((1, Cout), lambda n, s: (0, 0)),
    ]
    if prologue is not None:
        in_specs += [
            pl.BlockSpec((N, 2, Cin), lambda n, s: (0, 0, 0)),
            pl.BlockSpec((1, Cin), lambda n, s: (0, 0)),
            pl.BlockSpec((1, Cin), lambda n, s: (0, 0)),
        ]
    if prologue == "bn_add":
        in_specs.append(pl.BlockSpec((1, H, W, Cin), lambda n, s: (n, 0, 0, 0)))

    out_shape = [jax.ShapeDtypeStruct((N, H, W, Cout), out_dtype)]
    out_specs = [pl.BlockSpec((1, stripe_h, W, Cout), lambda n, s: (n, s, 0, 0))]
    if emit_carry:
        out_shape.append(jax.ShapeDtypeStruct((N, H, W, Cin), _ACT_DTYPE))
        out_specs.append(pl.BlockSpec((1, stripe_h, W, Cin),
                                      lambda n, s: (n, s, 0, 0)))
    if emit_stats:
        out_shape.append(jax.ShapeDtypeStruct((N, 2, Cout), jnp.float32))
        out_specs.append(pl.BlockSpec((1, 2, Cout), lambda n, s: (n, 0, 0)))

    return pl.pallas_call(
        kernel,
        grid=(N, n_stripes),
        in_specs=in_specs,
        out_specs=tuple(out_specs),
        out_shape=tuple(out_shape),
        scratch_shapes=[
            pltpu.VMEM((Hp, Wb, Cin), _ACT_DTYPE),          # padded image
            pltpu.VMEM((rows, K * K * Cin), _ACT_DTYPE),    # folded im2col patch
        ],
        compiler_params=pltpu.CompilerParams(
            dimension_semantics=("parallel", "arbitrary"),
            vmem_limit_bytes=_vmem_limit_bytes()),
    )


def conv2d(x, w, b, K, *, prologue=None, stats_in=None, gamma=None, beta=None,
           residual=None, emit_carry=False, emit_stats=False, epilogue=None,
           out_dtype=_ACT_DTYPE):
    """x: (N,H,W,Cin) bf16, w: (K*K*Cin, Cout) bf16, b: (1,Cout) f32.
    Returns a tuple: (y, [carry], [stats])."""
    N, H, W, Cin = x.shape
    Cout = w.shape[-1]
    call = _build_conv(N, H, W, Cin, Cout, K, prologue, emit_carry, emit_stats,
                       epilogue, out_dtype)
    args = [x, w, b]
    if prologue is not None:
        args += [stats_in, gamma, beta]
    if prologue == "bn_add":
        args.append(residual)
    return call(*args)


# ----------------------------------------------------------------------------
# XLA-side glue: BN scale/shift for the upsample stages, fused BN+ReLU+shuffle,
# parameter construction.
# ----------------------------------------------------------------------------
def _bn_scale_shift(stats, count, gamma, beta):
    """stats: (N,2,C) per-image [sum; sumsq] of the raw conv output."""
    s = jnp.sum(stats.astype(jnp.float32), axis=0)
    mean = s[0] / count
    var = jnp.maximum(s[1] / count - mean * mean, 0.0)     # biased variance
    inv = jax.lax.rsqrt(var + _BN_EPS)
    scale = gamma.reshape(-1) * inv
    shift = beta.reshape(-1) - mean * scale
    return scale, shift


def pixel_shuffle_nhwc(x, r):
    N, H, W, Cr2 = x.shape
    C = Cr2 // (r * r)
    x = x.reshape(N, H, W, C, r, r)
    x = jnp.transpose(x, (0, 1, 4, 2, 5, 3))
    return x.reshape(N, H * r, W * r, C)


def _bn_relu_shuffle(x_raw, stats, gamma, beta, r=2):
    """BN + ReLU + PixelShuffle as a single fused XLA pass.
    # TODO(synk): move into the conv epilogue / a Pallas kernel with
    # sublane-strided stores to also remove this one HBM round trip."""
    Nn, H, W, C = x_raw.shape
    scale, shift = _bn_scale_shift(stats, float(Nn * H * W), gamma, beta)
    t = jnp.maximum(x_raw.astype(jnp.float32) * scale.reshape(1, 1, 1, C)
                    + shift.reshape(1, 1, 1, C), 0.0).astype(_ACT_DTYPE)
    return pixel_shuffle_nhwc(t, r)         # ReLU commutes with the shuffle


def _init_conv(key, Cin, Cout, K):
    kw_, kb = jax.random.split(key)
    fan_in = Cin * K * K
    std = 1.0 / jnp.sqrt(jnp.float32(fan_in))
    w_oihw = jax.random.normal(kw_, (Cout, Cin, K, K), jnp.float32) * std
    b = jax.random.normal(kb, (Cout,), jnp.float32) * std
    w_hwio = jnp.transpose(w_oihw, (2, 3, 1, 0))            # (K, K, Cin, Cout)
    w_folded = w_hwio.reshape(K * K * Cin, Cout).astype(_ACT_DTYPE)
    return w_folded, b.reshape(1, Cout)


def init_generator_params(key, in_channels=3, out_channels=3,
                          number_of_residual_blocks=16):
    n_keys = 5 + 2 * number_of_residual_blocks
    keys = iter(jax.random.split(key, n_keys))
    ones = lambda c: jnp.ones((1, c), jnp.float32)
    zeros = lambda c: jnp.zeros((1, c), jnp.float32)

    params = {"conv1": _init_conv(next(keys), in_channels, 64, 9)}
    res = []
    for _ in range(number_of_residual_blocks):
        c1 = _init_conv(next(keys), 64, 64, 3)
        c2 = _init_conv(next(keys), 64, 64, 3)
        res.append((c1, ones(64), zeros(64), c2, ones(64), zeros(64)))
    params["res"] = res
    params["conv2"] = _init_conv(next(keys), 64, 64, 3)
    params["bn2"] = (ones(64), zeros(64))
    ups = []
    for _ in range(2):
        c = _init_conv(next(keys), 64, 256, 3)
        ups.append((c, ones(256), zeros(256)))
    params["ups"] = ups
    params["conv3"] = _init_conv(next(keys), 64, out_channels, 9)
    return params


def generator_forward(params, x_nchw):
    """Matches GeneratorResNet.forward.  Input NCHW, output NCHW."""
    x = jnp.transpose(x_nchw, (0, 2, 3, 1)).astype(_ACT_DTYPE)      # NHWC bf16

    # conv1: Conv2d(in,64,9,1,4) + ReLU (fused epilogue)
    w, b = params["conv1"]
    (out1,) = conv2d(x, w, b, 9, epilogue="relu")

    # Residual blocks: r_{i+1} = r_i + BN2(Conv2(ReLU(BN1(Conv1(r_i))))).
    # The trailing BN2 + residual-add of each block is folded into the NEXT
    # conv's prologue, which also emits the materialized carry r_i.
    res_carry = out1        # r_0
    pend = None             # (raw, stats, gamma, beta): next input = BN(raw)+res_carry
    for (c1, g1, be1, c2, g2, be2) in params["res"]:
        if pend is None:
            a_raw, a_stats = conv2d(res_carry, c1[0], c1[1], 3, emit_stats=True)
        else:
            p_raw, p_stats, p_g, p_be = pend
            a_raw, res_carry, a_stats = conv2d(
                p_raw, c1[0], c1[1], 3, prologue="bn_add",
                stats_in=p_stats, gamma=p_g, beta=p_be, residual=res_carry,
                emit_carry=True, emit_stats=True)
        c_raw, c_stats = conv2d(a_raw, c2[0], c2[1], 3, prologue="bn_relu",
                                stats_in=a_stats, gamma=g1, beta=be1,
                                emit_stats=True)
        pend = (c_raw, c_stats, g2, be2)

    # conv2: Conv2d(64,64,3,1,1) + BN.  Its input is the last block's pending
    # BN + residual add (fused prologue); its own BN + "out1 + out2" add is
    # fused into the first upsample conv's prologue.
    p_raw, p_stats, p_g, p_be = pend
    w2, b2 = params["conv2"]
    t_raw, t_stats = conv2d(p_raw, w2, b2, 3, prologue="bn_add",
                            stats_in=p_stats, gamma=p_g, beta=p_be,
                            residual=res_carry, emit_stats=True)

    # Upsampling x2: Conv(64,256,3) + BN + PixelShuffle(2) + ReLU, twice.
    (wu, bu), gu, beu = params["ups"][0]
    g2b, be2b = params["bn2"]
    u_raw, u_stats = conv2d(t_raw, wu, bu, 3, prologue="bn_add",
                            stats_in=t_stats, gamma=g2b, beta=be2b,
                            residual=out1, emit_stats=True)
    s1 = _bn_relu_shuffle(u_raw, u_stats, gu, beu)

    (wu, bu), gu, beu = params["ups"][1]
    u_raw, u_stats = conv2d(s1, wu, bu, 3, emit_stats=True)
    s2 = _bn_relu_shuffle(u_raw, u_stats, gu, beu)

    # conv3: Conv2d(64,out,9,1,4) + Tanh (fused epilogue).
    w3, b3 = params["conv3"]
    (y,) = conv2d(s2, w3, b3, 9, epilogue="tanh", out_dtype=jnp.float32)

    return jnp.transpose(y, (0, 3, 1, 2))                            # NCHW


if __name__ == "__main__":
    key = jax.random.PRNGKey(0)
    kp, kx, kc = jax.random.split(key, 3)

    N, C_IN, C_OUT, HW, N_RES = 2, 3, 3, 16, 16
    params = init_generator_params(kp, in_channels=C_IN, out_channels=C_OUT,
                                   number_of_residual_blocks=N_RES)
    x = jax.random.normal(kx, (N, C_IN, HW, HW), jnp.float32)        # NCHW

    # Spot-check the conv kernel against XLA's conv (3x3, 64 -> 64, "same").
    xc = jax.random.normal(kc, (N, HW, HW, 64), jnp.float32).astype(_ACT_DTYPE)
    wf, bf_ = _init_conv(jax.random.PRNGKey(7), 64, 64, 3)
    (yk,) = conv2d(xc, wf, bf_, 3)
    ref = jax.lax.conv_general_dilated(
        xc.astype(jnp.float32), wf.astype(jnp.float32).reshape(3, 3, 64, 64),
        window_strides=(1, 1), padding="SAME",
        dimension_numbers=("NHWC", "HWIO", "NHWC")) + bf_.reshape(1, 1, 1, 64)
    err = float(jnp.max(jnp.abs(yk.astype(jnp.float32) - ref)))
    assert err < 0.1, f"conv kernel mismatch: max abs err {err}"

    y = jax.jit(generator_forward)(params, x)
    y = jax.block_until_ready(y)

    assert y.shape == (N, C_OUT, HW * 4, HW * 4), y.shape            # 2x PixelShuffle(2)
    assert bool(jnp.all(jnp.isfinite(y)))
    assert bool(jnp.all(jnp.abs(y) <= 1.0 + 1e-3))                   # tanh range
    print("KERNEL_OK")
</pallas_src>

<mosaic_0001>
module attributes {stable_mosaic.version = 11 : i64} {
  func.func @kernel(%arg0: i32, %arg1: i32, %arg2: memref<1x16x16x64xbf16, #tpu.memory_space<vmem>>, %arg3: memref<576x64xbf16, #tpu.memory_space<vmem>>, %arg4: memref<1x64xf32, #tpu.memory_space<vmem>>, %arg5: memref<1x8x16x64xbf16, #tpu.memory_space<vmem>>, %arg6: memref<19x24x64xbf16, #tpu.memory_space<vmem>>, %arg7: memref<192x576xbf16, #tpu.memory_space<vmem>>) attributes {dimension_semantics = [#tpu.dimension_semantics<parallel>, #tpu.dimension_semantics<arbitrary>], iteration_bounds = array<i64: 2, 2>, scalar_prefetch = 0 : i64, scratch_operands = 2 : i64, tpu.core_type = #tpu.core_type<tc>, window_params = [{transform_indices = @transform_0, window_bounds = array<i64: 1, 16, 16, 64>}, {pipeline_mode = #tpu.pipeline_mode<synchronous>, transform_indices = @transform_1, window_bounds = array<i64: 576, 64>}, {pipeline_mode = #tpu.pipeline_mode<synchronous>, transform_indices = @transform_2, window_bounds = array<i64: 1, 64>}, {transform_indices = @transform_3, window_bounds = array<i64: 1, 8, 16, 64>}]} {
    %c0_i32 = arith.constant 0 : i32
    %0 = arith.cmpi eq, %arg1, %c0_i32 : i32
    %1 = arith.extui %0 : i1 to i32
    %c0_i32_0 = arith.constant 0 : i32
    %2 = arith.cmpi ne, %1, %c0_i32_0 : i32
    scf.if %2 {
      %c0_27 = arith.constant 0 : index
      %c0_28 = arith.constant 0 : index
      %c0_29 = arith.constant 0 : index
      %c0_30 = arith.constant 0 : index
      %46 = vector.load %arg2[%c0_27, %c0_28, %c0_29, %c0_30] : memref<1x16x16x64xbf16, #tpu.memory_space<vmem>>, vector<1x16x16x64xbf16>
      %47 = vector.shape_cast %46 : vector<1x16x16x64xbf16> to vector<16x16x64xbf16>
      %cst_31 = arith.constant 0.000000e+00 : bf16
      %48 = vector.broadcast %cst_31 : bf16 to vector<1x24x64xbf16>
      %c0_32 = arith.constant 0 : index
      %c0_33 = arith.constant 0 : index
      %c0_34 = arith.constant 0 : index
      %49 = vector.load %arg6[%c0_32, %c0_33, %c0_34] : memref<19x24x64xbf16, #tpu.memory_space<vmem>>, vector<1x24x64xbf16>
      tpu.vector_store %arg6[%c0_32, %c0_33, %c0_34], %48 {strides = array<i32>} : memref<19x24x64xbf16, #tpu.memory_space<vmem>>, vector<1x24x64xbf16>,
      %cst_35 = arith.constant 0.000000e+00 : bf16
      %50 = vector.broadcast %cst_35 : bf16 to vector<2x24x64xbf16>
      %c17 = arith.constant 17 : index
      %c0_36 = arith.constant 0 : index
      %c0_37 = arith.constant 0 : index
      %51 = vector.load %arg6[%c17, %c0_36, %c0_37] : memref<19x24x64xbf16, #tpu.memory_space<vmem>>, vector<2x24x64xbf16>
      tpu.vector_store %arg6[%c17, %c0_36, %c0_37], %50 {strides = array<i32>} : memref<19x24x64xbf16, #tpu.memory_space<vmem>>, vector<2x24x64xbf16>,
      %cst_38 = arith.constant 0.000000e+00 : bf16
      %52 = vector.broadcast %cst_38 : bf16 to vector<16x1x64xbf16>
      %c1 = arith.constant 1 : index
      %c0_39 = arith.constant 0 : index
      %c0_40 = arith.constant 0 : index
      %53 = vector.load %arg6[%c1, %c0_39, %c0_40] : memref<19x24x64xbf16, #tpu.memory_space<vmem>>, vector<16x1x64xbf16>
      tpu.vector_store %arg6[%c1, %c0_39, %c0_40], %52 {strides = array<i32>} : memref<19x24x64xbf16, #tpu.memory_space<vmem>>, vector<16x1x64xbf16>,
      %cst_41 = arith.constant 0.000000e+00 : bf16
      %54 = vector.broadcast %cst_41 : bf16 to vector<16x7x64xbf16>
      %c1_42 = arith.constant 1 : index
      %c17_43 = arith.constant 17 : index
      %c0_44 = arith.constant 0 : index
      %55 = vector.load %arg6[%c1_42, %c17_43, %c0_44] : memref<19x24x64xbf16, #tpu.memory_space<vmem>>, vector<16x7x64xbf16>
      tpu.vector_store %arg6[%c1_42, %c17_43, %c0_44], %54 {strides = array<i32>} : memref<19x24x64xbf16, #tpu.memory_space<vmem>>, vector<16x7x64xbf16>,
      %c1_45 = arith.constant 1 : index
      %c1_46 = arith.constant 1 : index
      %c0_47 = arith.constant 0 : index
      %56 = vector.load %arg6[%c1_45, %c1_46, %c0_47] : memref<19x24x64xbf16, #tpu.memory_space<vmem>>, vector<16x16x64xbf16>
      tpu.vector_store %arg6[%c1_45, %c1_46, %c0_47], %47 {strides = array<i32>} : memref<19x24x64xbf16, #tpu.memory_space<vmem>>, vector<16x16x64xbf16>,
    } else {
    }
    %c8_i32 = arith.constant 8 : i32
    %3 = arith.muli %arg1, %c8_i32 : i32
    %c0_i32_1 = arith.constant 0 : i32
    %4 = arith.addi %3, %c0_i32_1 : i32
    %5 = arith.index_cast %4 : i32 to index
    %c0 = arith.constant 0 : index
    %c0_2 = arith.constant 0 : index
    %6 = vector.load %arg6[%5, %c0, %c0_2] : memref<19x24x64xbf16, #tpu.memory_space<vmem>>, vector<9x24x64xbf16>
    %7 = vector.shape_cast %6 : vector<9x24x64xbf16> to vector<216x64xbf16>
    %8 = vector.extract_strided_slice %7 {offsets = [0, 0], sizes = [192, 64], strides = [1, 1]} : vector<216x64xbf16> to vector<192x64xbf16>
    %c0_3 = arith.constant 0 : index
    %c0_4 = arith.constant 0 : index
    %9 = vector.load %arg7[%c0_3, %c0_4] : memref<192x576xbf16, #tpu.memory_space<vmem>>, vector<192x64xbf16>
    tpu.vector_store %arg7[%c0_3, %c0_4], %8 {strides = array<i32>} : memref<192x576xbf16, #tpu.memory_space<vmem>>, vector<192x64xbf16>,
    %10 = vector.extract_strided_slice %7 {offsets = [1, 0], sizes = [192, 64], strides = [1, 1]} : vector<216x64xbf16> to vector<192x64xbf16>
    %c0_5 = arith.constant 0 : index
    %c64 = arith.constant 64 : index
    %11 = vector.load %arg7[%c0_5, %c64] : memref<192x576xbf16, #tpu.memory_space<vmem>>, vector<192x64xbf16>
    tpu.vector_store %arg7[%c0_5, %c64], %10 {strides = array<i32>} : memref<192x576xbf16, #tpu.memory_space<vmem>>, vector<192x64xbf16>,
    %12 = vector.extract_strided_slice %7 {offsets = [2, 0], sizes = [192, 64], strides = [1, 1]} : vector<216x64xbf16> to vector<192x64xbf16>
    %c0_6 = arith.constant 0 : index
    %c128 = arith.constant 128 : index
    %13 = vector.load %arg7[%c0_6, %c128] : memref<192x576xbf16, #tpu.memory_space<vmem>>, vector<192x64xbf16>
    tpu.vector_store %arg7[%c0_6, %c128], %12 {strides = array<i32>} : memref<192x576xbf16, #tpu.memory_space<vmem>>, vector<192x64xbf16>,
    %c1_i32 = arith.constant 1 : i32
    %14 = arith.addi %3, %c1_i32 : i32
    %15 = arith.index_cast %14 : i32 to index
    %c0_7 = arith.constant 0 : index
    %c0_8 = arith.constant 0 : index
    %16 = vector.load %arg6[%15, %c0_7, %c0_8] : memref<19x24x64xbf16, #tpu.memory_space<vmem>>, vector<9x24x64xbf16>
    %17 = vector.shape_cast %16 : vector<9x24x64xbf16> to vector<216x64xbf16>
    %18 = vector.extract_strided_slice %17 {offsets = [0, 0], sizes = [192, 64], strides = [1, 1]} : vector<216x64xbf16> to vector<192x64xbf16>
    %c0_9 = arith.constant 0 : index
    %c192 = arith.constant 192 : index
    %19 = vector.load %arg7[%c0_9, %c192] : memref<192x576xbf16, #tpu.memory_space<vmem>>, vector<192x64xbf16>
    tpu.vector_store %arg7[%c0_9, %c192], %18 {strides = array<i32>} : memref<192x576xbf16, #tpu.memory_space<vmem>>, vector<192x64xbf16>,
    %20 = vector.extract_strided_slice %17 {offsets = [1, 0], sizes = [192, 64], strides = [1, 1]} : vector<216x64xbf16> to vector<192x64xbf16>
    %c0_10 = arith.constant 0 : index
    %c256 = arith.constant 256 : index
    %21 = vector.load %arg7[%c0_10, %c256] : memref<192x576xbf16, #tpu.memory_space<vmem>>, vector<192x64xbf16>
    tpu.vector_store %arg7[%c0_10, %c256], %20 {strides = array<i32>} : memref<192x576xbf16, #tpu.memory_space<vmem>>, vector<192x64xbf16>,
    %22 = vector.extract_strided_slice %17 {offsets = [2, 0], sizes = [192, 64], strides = [1, 1]} : vector<216x64xbf16> to vector<192x64xbf16>
    %c0_11 = arith.constant 0 : index
    %c320 = arith.constant 320 : index
    %23 = vector.load %arg7[%c0_11, %c320] : memref<192x576xbf16, #tpu.memory_space<vmem>>, vector<192x64xbf16>
    tpu.vector_store %arg7[%c0_11, %c320], %22 {strides = array<i32>} : memref<192x576xbf16, #tpu.memory_space<vmem>>, vector<192x64xbf16>,
    %c2_i32 = arith.constant 2 : i32
    %24 = arith.addi %3, %c2_i32 : i32
    %25 = arith.index_cast %24 : i32 to index
    %c0_12 = arith.constant 0 : index
    %c0_13 = arith.constant 0 : index
    %26 = vector.load %arg6[%25, %c0_12, %c0_13] : memref<19x24x64xbf16, #tpu.memory_space<vmem>>, vector<9x24x64xbf16>
    %27 = vector.shape_cast %26 : vector<9x24x64xbf16> to vector<216x64xbf16>
    %28 = vector.extract_strided_slice %27 {offsets = [0, 0], sizes = [192, 64], strides = [1, 1]} : vector<216x64xbf16> to vector<192x64xbf16>
    %c0_14 = arith.constant 0 : index
    %c384 = arith.constant 384 : index
    %29 = vector.load %arg7[%c0_14, %c384] : memref<192x576xbf16, #tpu.memory_space<vmem>>, vector<192x64xbf16>
    tpu.vector_store %arg7[%c0_14, %c384], %28 {strides = array<i32>} : memref<192x576xbf16, #tpu.memory_space<vmem>>, vector<192x64xbf16>,
    %30 = vector.extract_strided_slice %27 {offsets = [1, 0], sizes = [192, 64], strides = [1, 1]} : vector<216x64xbf16> to vector<192x64xbf16>
    %c0_15 = arith.constant 0 : index
    %c448 = arith.constant 448 : index
    %31 = vector.load %arg7[%c0_15, %c448] : memref<192x576xbf16, #tpu.memory_space<vmem>>, vector<192x64xbf16>
    tpu.vector_store %arg7[%c0_15, %c448], %30 {strides = array<i32>} : memref<192x576xbf16, #tpu.memory_space<vmem>>, vector<192x64xbf16>,
    %32 = vector.extract_strided_slice %27 {offsets = [2, 0], sizes = [192, 64], strides = [1, 1]} : vector<216x64xbf16> to vector<192x64xbf16>
    %c0_16 = arith.constant 0 : index
    %c512 = arith.constant 512 : index
    %33 = vector.load %arg7[%c0_16, %c512] : memref<192x576xbf16, #tpu.memory_space<vmem>>, vector<192x64xbf16>
    tpu.vector_store %arg7[%c0_16, %c512], %32 {strides = array<i32>} : memref<192x576xbf16, #tpu.memory_space<vmem>>, vector<192x64xbf16>,
    %c0_17 = arith.constant 0 : index
    %c0_18 = arith.constant 0 : index
    %34 = vector.load %arg7[%c0_17, %c0_18] : memref<192x576xbf16, #tpu.memory_space<vmem>>, vector<192x576xbf16>
    %c0_19 = arith.constant 0 : index
    %c0_20 = arith.constant 0 : index
    %35 = vector.load %arg3[%c0_19, %c0_20] : memref<576x64xbf16, #tpu.memory_space<vmem>>, vector<576x64xbf16>
    %cst = arith.constant dense<0.000000e+00> : vector<192x64xf32>
    %36 = tpu.matmul %34, %35, %cst {dimension_numbers = #tpu.dot_dimension_numbers<[1], [0], [0], [1], [0, 0, 1, 1], [], []>} : vector<192x576xbf16>, vector<576x64xbf16>, vector<192x64xf32> -> vector<192x64xf32>
    %37 = vector.shape_cast %36 : vector<192x64xf32> to vector<8x24x64xf32>
    %38 = vector.extract_strided_slice %37 {offsets = [0, 0, 0], sizes = [8, 16, 64], strides = [1, 1, 1]} : vector<8x24x64xf32> to vector<8x16x64xf32>
    %c0_21 = arith.constant 0 : index
    %c0_22 = arith.constant 0 : index
    %39 = vector.load %arg4[%c0_21, %c0_22] : memref<1x64xf32, #tpu.memory_space<vmem>>, vector<1x64xf32>
    %40 = vector.shape_cast %39 : vector<1x64xf32> to vector<1x1x64xf32>
    %41 = vector.broadcast %40 : vector<1x1x64xf32> to vector<8x16x64xf32>
    %42 = arith.addf %38, %41 : vector<8x16x64xf32>
    %43 = vector.shape_cast %42 : vector<8x16x64xf32> to vector<1x8x16x64xf32>
    %44 = arith.truncf %43 : vector<1x8x16x64xf32> to vector<1x8x16x64xbf16>
    %c0_23 = arith.constant 0 : index
    %c0_24 = arith.constant 0 : index
    %c0_25 = arith.constant 0 : index
    %c0_26 = arith.constant 0 : index
    %45 = vector.load %arg5[%c0_23, %c0_24, %c0_25, %c0_26] : memref<1x8x16x64xbf16, #tpu.memory_space<vmem>>, vector<1x8x16x64xbf16>
    tpu.vector_store %arg5[%c0_23, %c0_24, %c0_25, %c0_26], %44 {strides = array<i32>} : memref<1x8x16x64xbf16, #tpu.memory_space<vmem>>, vector<1x8x16x64xbf16>,
    return
  }
  func.func @transform_0(%arg0: i32, %arg1: i32) -> (i32, i32, i32, i32) {
    %c0_i32 = arith.constant 0 : i32
    %c0_i32_0 = arith.constant 0 : i32
    %c0_i32_1 = arith.constant 0 : i32
    %c0_i32_2 = arith.constant 0 : i32
    return %arg0, %c0_i32, %c0_i32_0, %c0_i32_1 : i32, i32, i32, i32
  }
  func.func @transform_1(%arg0: i32, %arg1: i32) -> (i32, i32) {
    %c0_i32 = arith.constant 0 : i32
    %c0_i32_0 = arith.constant 0 : i32
    %c0_i32_1 = arith.constant 0 : i32
    return %c0_i32, %c0_i32_0 : i32, i32
  }
  func.func @transform_2(%arg0: i32, %arg1: i32) -> (i32, i32) {
    %c0_i32 = arith.constant 0 : i32
    %c0_i32_0 = arith.constant 0 : i32
    %c0_i32_1 = arith.constant 0 : i32
    return %c0_i32, %c0_i32_0 : i32, i32
  }
  func.func @transform_3(%arg0: i32, %arg1: i32) -> (i32, i32, i32, i32) {
    %c0_i32 = arith.constant 0 : i32
    %c0_i32_0 = arith.constant 0 : i32
    %c0_i32_1 = arith.constant 0 : i32
    return %arg0, %arg1, %c0_i32, %c0_i32_0 : i32, i32, i32, i32
  }
}

</mosaic_0001>

<llo_original>
// kernel: tpu_custom_call.1
$region0: #{tpu_custom_call.1}
  #allocation0 [shape = 'u32[]', space=smem, size = 0x4, offset = 0x4, fixed_abs, tag = 'smem constant byte address 0x4 - core index']
  #allocation1 [shape = 'u32[72,128]{1,0:T(1,128)}', space=vmem, size = 0x9000, scoped, tag = 'internal scratch']
  #allocation2 [shape = 'bf16[19,24,64]{2,1,0:T(8,128)(2,1)}', space=vmem, size = 0x1c800, scoped, tag = 'scratch operand']
  #allocation3 [shape = 'bf16[192,576]{1,0:T(8,128)(2,1)}', space=vmem, size = 0x3c000, scoped, tag = 'scratch operand']
  %s0 = inlined_call_operand.vmem [shape: bf16[2,16,16,64], index: 0, kind: input, shape index: {}]
  %s1 = inlined_call_operand.vmem [shape: bf16[576,64], index: 1, kind: input, shape index: {}]
  %s2 = inlined_call_operand.vmem [shape: f32[1,64], index: 2, kind: input, shape index: {}]
  %s3 = inlined_call_operand.hbm [shape: bf16[2,16,16,64], index: 3, kind: output, shape index: {}]
  %s4 = sld [smem:[#allocation0]]
  $region49: #{tpu_custom_call.1} parent=0
    _
  %s6 = ssub.s32 1, %s4
  %s7 = scalar_select 0, %s6, %s4
  $region1: #{tpu_custom_call.1} parent=0
    #allocation4 [shape = 'u8[65536]{0}', space=vmem, size = 0x10000, scoped, tag = 'output window, operand 0']
    #allocation5 [shape = 's32[2]{0}', space=sflag, size = 0x8, scoped, tag = 'scoped memory for tpu_custom_call.1']
    %8 = vsyncpa [#allocation5], 0
    %s9 = scalar_lea.sflag [#allocation5], 1
    %10 = vsyncpa %s9, 0
    loop: start=0, step=1, limit=6
    $region2: #{tpu_custom_call.1} parent=1 // loop_pre_header
      _
    $region3: #{tpu_custom_call.1} parent=1 // loop_header
      %s12 = sphi 0, %s16
      %p13 = scmp.ge.s32.totalorder %s12, 6
      %s19 = sphi 0, %s31
      %s20 = sphi 0, %s27
      %s21 = sphi 0, %s19
      %s22 = sphi 0, %s20
      %s23 = sphi 0, %s21
      %s24 = sphi 0, %s22
      %s34 = sphi 0, %s36
      %s37 = sphi 0, %s34
      %s38 = sphi 0, %s37
      %s54 = sphi 0, %s38
      %s58 = sphi 0, %s58
      %s60 = sphi 0, %s58
      %s61 = sphi 0, %s60
      %s75 = sphi 0, %s61
      %s79 = sphi 0, %s79
      %s81 = sphi 0, %s79
      %s82 = sphi 0, %s81
      %s96 = sphi 0, %s82
      %s104 = sphi 0, %s106
      %s107 = sphi 0, %s104
      %s108 = sphi 0, %s107
      %s124 = sphi 0, %s108
    $region4: #{tpu_custom_call.1} parent=1 // loop_header_branch
      %15 = sbr.rel (%p13) target = $region8
    $region5: #{tpu_custom_call.1} parent=1 // loop_body
      %s17 = ssub.s32 %s12, 1
      %s18 = ssub.s32 %s12, 2
      %s25 = sadd.s32 1, %s20
      %p26 = scmp.ge.s32.totalorder %s25, 2
      %s27 = scalar_select %p26, 0, %s25
      %s28 = sadd.s32 1, %s19
      %s29 = scalar_select %p26, %s28, %s19
      %p30 = scmp.ge.s32.totalorder %s29, 2
      %s31 = scalar_select %p30, 0, %s29
      %s32 = ssub.s32 %s19, %s31
      %p33 = scmp.eq.s32.totalorder %s32, 0
      %s35 = sadd.s32 %s34, 1
      %s36 = scalar_select %p33, %s34, %s35
      %p39 = pneg %p33
      %p40 = scmp.eq.s32.totalorder %s12, 3
      %p41 = por %p39, %p40
      %p42 = scmp.ne.s32.totalorder %s34, %s37
      %p43 = scmp.eq.s32.totalorder %s12, 0
      %p44 = por %p42, %p43
      %p45 = scmp.ne.s32.totalorder %s34, %s37
      %p46 = scmp.eq.s32.totalorder %s17, 3
      %p47 = por %p45, %p46
      %p48 = scmp.ne.s32.totalorder %s37, %s38
      %p49 = scmp.eq.s32.totalorder %s17, 0
      %p50 = por %p48, %p49
      %p51 = scmp.ne.s32.totalorder %s37, %s38
      %p52 = scmp.eq.s32.totalorder %s18, 3
      %p53 = por %p51, %p52
      %p55 = scmp.ne.s32.totalorder %s38, %s54
      %p56 = scmp.eq.s32.totalorder %s18, 0
      %p57 = por %p55, %p56
      %s59 = sadd.s32 %s58, 1
      %p62 = scmp.eq.s32.totalorder %s12, 3
      %p63 = scmp.ne.s32.totalorder %s58, %s60
      %p64 = scmp.eq.s32.totalorder %s12, 0
      %p65 = por %p63, %p64
      %p66 = scmp.ne.s32.totalorder %s58, %s60
      %p67 = scmp.eq.s32.totalorder %s17, 3
      %p68 = por %p66, %p67
      %p69 = scmp.ne.s32.totalorder %s60, %s61
      %p70 = scmp.eq.s32.totalorder %s17, 0
      %p71 = por %p69, %p70
      %p72 = scmp.ne.s32.totalorder %s60, %s61
      %p73 = scmp.eq.s32.totalorder %s18, 3
      %p74 = por %p72, %p73
      %p76 = scmp.ne.s32.totalorder %s61, %s75
      %p77 = scmp.eq.s32.totalorder %s18, 0
      %p78 = por %p76, %p77
      %s80 = sadd.s32 %s79, 1
      %p83 = scmp.eq.s32.totalorder %s12, 3
      %p84 = scmp.ne.s32.totalorder %s79, %s81
      %p85 = scmp.eq.s32.totalorder %s12, 0
      %p86 = por %p84, %p85
      %p87 = scmp.ne.s32.totalorder %s79, %s81
      %p88 = scmp.eq.s32.totalorder %s17, 3
      %p89 = por %p87, %p88
      %p90 = scmp.ne.s32.totalorder %s81, %s82
      %p91 = scmp.eq.s32.totalorder %s17, 0
      %p92 = por %p90, %p91
      %p93 = scmp.ne.s32.totalorder %s81, %s82
      %p94 = scmp.eq.s32.totalorder %s18, 3
      %p95 = por %p93, %p94
      %p97 = scmp.ne.s32.totalorder %s82, %s96
      %p98 = scmp.eq.s32.totalorder %s18, 0
      %p99 = por %p97, %p98
      %s100 = ssub.s32 %s19, %s31
      %s101 = ssub.s32 %s20, %s27
      %s102 = sor.u32 %s100, %s101
      %p103 = scmp.eq.s32.totalorder %s102, 0
      %s105 = sadd.s32 %s104, 1
      %s106 = scalar_select %p103, %s104, %s105
      %p109 = pneg %p103
      %p110 = scmp.eq.s32.totalorder %s12, 3
      %p111 = por %p109, %p110
      %p112 = scmp.ne.s32.totalorder %s104, %s107
      %p113 = scmp.eq.s32.totalorder %s12, 0
      %p114 = por %p112, %p113
      %p115 = scmp.ne.s32.totalorder %s104, %s107
      %p116 = scmp.eq.s32.totalorder %s17, 3
      %p117 = por %p115, %p116
      %p118 = scmp.ne.s32.totalorder %s107, %s108
      %p119 = scmp.eq.s32.totalorder %s17, 0
      %p120 = por %p118, %p119
      %p121 = scmp.ne.s32.totalorder %s107, %s108
      %p122 = scmp.eq.s32.totalorder %s18, 3
      %p123 = por %p121, %p122
      %p125 = scmp.ne.s32.totalorder %s108, %s124
      %p126 = scmp.eq.s32.totalorder %s18, 0
      %p127 = por %p125, %p126
      %p128 = scmp.le.s32.totalorder 1, %s12
      %p129 = scmp.lt.s32.totalorder %s12, 5
      %p130 = pnand %p128, %p129
      %p131 = pneg %p130
      // Predicated region
      $region9: #{tpu_custom_call.1} parent=5 // pred_check
        _
      $region10: #{tpu_custom_call.1} parent=5 // pred_check_branch
        %133 = sbr.rel (%p130) target = $region12
      $region11: #{tpu_custom_call.1} parent=5 // pred_region
        %s134 = ssub.s32 %s12, 1
        // Predicated region
        $region13: #{tpu_custom_call.1} parent=11 // pred_check
          %p135 = pneg %p71
        $region14: #{tpu_custom_call.1} parent=11 // pred_check_branch
          %137 = sbr.rel (%p135) target = $region16
        $region15: #{tpu_custom_call.1} parent=11 // pred_region
          _
        $region16: #{tpu_custom_call.1} parent=11 // pred_fallthru
          _
        // Predicated region
        $region17: #{tpu_custom_call.1} parent=11 // pred_check
          %p138 = pneg %p92
        $region18: #{tpu_custom_call.1} parent=11 // pred_check_branch
          %140 = sbr.rel (%p138) target = $region20
        $region19: #{tpu_custom_call.1} parent=11 // pred_region
          _
        $region20: #{tpu_custom_call.1} parent=11 // pred_fallthru
          _
      $region12: #{tpu_custom_call.1} parent=5 // pred_fallthru
        _
      %p141 = scmp.lt.s32.totalorder %s12, 4
      // Predicated region
      $region21: #{tpu_custom_call.1} parent=5 // pred_check
        %p142 = pneg %p141
      $region22: #{tpu_custom_call.1} parent=5 // pred_check_branch
        %144 = sbr.rel (%p142) target = $region24
      $region23: #{tpu_custom_call.1} parent=5 // pred_region
        // Predicated region
        $region25: #{tpu_custom_call.1} parent=23 // pred_check
          %p145 = pneg %p44
        $region26: #{tpu_custom_call.1} parent=23 // pred_check_branch
          %147 = sbr.rel (%p145) target = $region28
        $region27: #{tpu_custom_call.1} parent=23 // pred_region
          %p148 = scmp.lt.s32.totalorder %s19, 1
          %s149 = scalar_select %p148, %s19, 1
          %s150 = smul.addr %s149, 32
          %s151 = smul.addr %s150, 4
          %s152 = scalar_lea.vmem %s0, %s151
        $region28: #{tpu_custom_call.1} parent=23 // pred_fallthru
          _
      $region24: #{tpu_custom_call.1} parent=5 // pred_fallthru
        _
      %p153 = scmp.le.s32.totalorder 1, %s12
      %p154 = scmp.lt.s32.totalorder %s12, 5
      %p155 = pnand %p153, %p154
      %p156 = pneg %p155
      // Predicated region
      $region29: #{tpu_custom_call.1} parent=5 // pred_check
        _
      $region30: #{tpu_custom_call.1} parent=5 // pred_check_branch
        %158 = sbr.rel (%p155) target = $region32
      $region31: #{tpu_custom_call.1} parent=5 // pred_region
        %s159 = ssub.s32 %s12, 1
        %p160 = scmp.lt.s32.totalorder %s21, 1
        %s161 = scalar_select %p160, %s21, 1
        %s162 = smul.addr %s161, 32
        %s163 = smul.addr %s162, 4
        %s164 = scalar_lea.vmem %s0, %s163
        %p165 = pneg %p50
        %p166 = pneg %p47
        %p167 = pneg %p71
        %p168 = pneg %p68
        %p169 = pneg %p92
        %p170 = pneg %p89
        %p171 = pneg %p120
        %p172 = pneg %p117
        %s173 = sand.u32 %s107, 1
        %s174 = scalar_lea.sflag [#allocation5], %s173
        %s175 = sand.u32 %s107, 1
        %s176 = smul.addr %s175, 64
        %s177 = scalar_lea.vmem [#allocation4], %s176
        %p178 = scmp.lt.s32.totalorder %s21, 1
        %s179 = scalar_select %p178, %s21, 1
        %s180 = smul.addr %s179, 32
        %s181 = smul.addr %s180, 4
        %s182 = scalar_lea.vmem %s0, %s181
        %s183 = smul.u32 8, %s22
        %p185 = scmp.eq.s32.totalorder %s22, 0
        // Predicated region
        $region33: #{tpu_custom_call.1} parent=31 // pred_check
          %p186 = pneg %p185
        $region34: #{tpu_custom_call.1} parent=31 // pred_check_branch
          %188 = sbr.rel (%p186) target = $region36
        $region35: #{tpu_custom_call.1} parent=31 // pred_region
          %v189 = vld [vmem:[%s182] sm:$0xf]
          %v190 = vld [vmem:[%s182 + $0x4] sm:$0xf]
          %v191 = vld [vmem:[%s182 + $0x8] sm:$0xf]
          %v192 = vld [vmem:[%s182 + $0xc] sm:$0xf]
          %v193 = vld [vmem:[%s182 + $0x10] sm:$0xf]
          %v194 = vld [vmem:[%s182 + $0x14] sm:$0xf]
          %v195 = vld [vmem:[%s182 + $0x18] sm:$0xf]
          %v196 = vld [vmem:[%s182 + $0x1c] sm:$0xf]
          %v197 = vld [vmem:[%s182 + $0x20] sm:$0xf]
          %v198 = vld [vmem:[%s182 + $0x24] sm:$0xf]
          %v199 = vld [vmem:[%s182 + $0x28] sm:$0xf]
          %v200 = vld [vmem:[%s182 + $0x2c] sm:$0xf]
          %v201 = vld [vmem:[%s182 + $0x30] sm:$0xf]
          %v202 = vld [vmem:[%s182 + $0x34] sm:$0xf]
          %v203 = vld [vmem:[%s182 + $0x38] sm:$0xf]
          %v204 = vld [vmem:[%s182 + $0x3c] sm:$0xf]
          %v205 = vld [vmem:[%s182 + $0x40] sm:$0xf]
          %v206 = vld [vmem:[%s182 + $0x44] sm:$0xf]
          %v207 = vld [vmem:[%s182 + $0x48] sm:$0xf]
          %v208 = vld [vmem:[%s182 + $0x4c] sm:$0xf]
          %v209 = vld [vmem:[%s182 + $0x50] sm:$0xf]
          %v210 = vld [vmem:[%s182 + $0x54] sm:$0xf]
          %v211 = vld [vmem:[%s182 + $0x58] sm:$0xf]
          %v212 = vld [vmem:[%s182 + $0x5c] sm:$0xf]
          %v213 = vld [vmem:[%s182 + $0x60] sm:$0xf]
          %v214 = vld [vmem:[%s182 + $0x64] sm:$0xf]
          %v215 = vld [vmem:[%s182 + $0x68] sm:$0xf]
          %v216 = vld [vmem:[%s182 + $0x6c] sm:$0xf]
          %v217 = vld [vmem:[%s182 + $0x70] sm:$0xf]
          %v218 = vld [vmem:[%s182 + $0x74] sm:$0xf]
          %v219 = vld [vmem:[%s182 + $0x78] sm:$0xf]
          %v220 = vld [vmem:[%s182 + $0x7c] sm:$0xf]
          %vm221 = vcmask 519168
          %222 = vst.msk [vmem:[#allocation2] sm:$0xf] %vm221, 0
          %223 = vst.msk [vmem:[#allocation2 + $0x4] sm:$0xf] %vm221, 0
          %224 = vst.msk [vmem:[#allocation2 + $0x8] sm:$0xf] %vm221, 0
          %s225 = scalar_lea.vmem [#allocation2], 204
          %226 = vst.msk [vmem:[%s225] sm:$0xf] %vm221, 0
          %227 = vst.msk [vmem:[%s225 + $0x4] sm:$0xf] %vm221, 0
          %228 = vst.msk [vmem:[%s225 + $0x8] sm:$0xf] %vm221, 0
          %229 = vst.msk [vmem:[%s225 + $0xc] sm:$0xf] %vm221, 0
          %230 = vst.msk [vmem:[%s225 + $0x10] sm:$0xf] %vm221, 0
          %231 = vst.msk [vmem:[%s225 + $0x14] sm:$0xf] %vm221, 0
          %s232 = scalar_lea.vmem [#allocation2], 12
          %vm233 = vcmask 516096
          %vm234 = vsmask.f32 256
          %vm235 = vmand %vm233, %vm234
          %v236 = vld [vmem:[%s232] sm:$0x1]
          %v237 = vsel %vm235, 0, %v236
          %238 = vst [vmem:[%s232] sm:$0x1] %v237
          %v239 = vld [vmem:[%s232 + $0xc] sm:$0x1]
          %v240 = vsel %vm235, 0, %v239
          %241 = vst [vmem:[%s232 + $0xc] sm:$0x1] %v240
          %v242 = vld [vmem:[%s232 + $0x18] sm:$0x1]
          %v243 = vsel %vm235, 0, %v242
          %244 = vst [vmem:[%s232 + $0x18] sm:$0x1] %v243
          %v245 = vld [vmem:[%s232 + $0x24] sm:$0x1]
          %v246 = vsel %vm235, 0, %v245
          %247 = vst [vmem:[%s232 + $0x24] sm:$0x1] %v246
          %v248 = vld [vmem:[%s232 + $0x30] sm:$0x1]
          %v249 = vsel %vm235, 0, %v248
          %250 = vst [vmem:[%s232 + $0x30] sm:$0x1] %v249
          %v251 = vld [vmem:[%s232 + $0x3c] sm:$0x1]
          %v252 = vsel %vm235, 0, %v251
          %253 = vst [vmem:[%s232 + $0x3c] sm:$0x1] %v252
          %v254 = vld [vmem:[%s232 + $0x48] sm:$0x1]
          %v255 = vsel %vm235, 0, %v254
          %256 = vst [vmem:[%s232 + $0x48] sm:$0x1] %v255
          %v257 = vld [vmem:[%s232 + $0x54] sm:$0x1]
          %v258 = vsel %vm235, 0, %v257
          %259 = vst [vmem:[%s232 + $0x54] sm:$0x1] %v258
          %v260 = vld [vmem:[%s232 + $0x60] sm:$0x1]
          %v261 = vsel %vm235, 0, %v260
          %262 = vst [vmem:[%s232 + $0x60] sm:$0x1] %v261
          %v263 = vld [vmem:[%s232 + $0x6c] sm:$0x1]
          %v264 = vsel %vm235, 0, %v263
          %265 = vst [vmem:[%s232 + $0x6c] sm:$0x1] %v264
          %v266 = vld [vmem:[%s232 + $0x78] sm:$0x1]
          %v267 = vsel %vm235, 0, %v266
          %268 = vst [vmem:[%s232 + $0x78] sm:$0x1] %v267
          %v269 = vld [vmem:[%s232 + $0x84] sm:$0x1]
          %v270 = vsel %vm235, 0, %v269
          %271 = vst [vmem:[%s232 + $0x84] sm:$0x1] %v270
          %v272 = vld [vmem:[%s232 + $0x90] sm:$0x1]
          %v273 = vsel %vm235, 0, %v272
          %274 = vst [vmem:[%s232 + $0x90] sm:$0x1] %v273
          %v275 = vld [vmem:[%s232 + $0x9c] sm:$0x1]
          %v276 = vsel %vm235, 0, %v275
          %277 = vst [vmem:[%s232 + $0x9c] sm:$0x1] %v276
          %v278 = vld [vmem:[%s232 + $0xa8] sm:$0x1]
          %v279 = vsel %vm235, 0, %v278
          %280 = vst [vmem:[%s232 + $0xa8] sm:$0x1] %v279
          %v281 = vld [vmem:[%s232 + $0xb4] sm:$0x1]
          %v282 = vsel %vm235, 0, %v281
          %283 = vst [vmem:[%s232 + $0xb4] sm:$0x1] %v282
          %vm284 = vcmask 519168
          %vm285 = vsmask.f32 7938
          %vm286 = vmand %vm284, %vm285
          %v287 = vld [vmem:[%s232 + $0x8] sm:$0xf]
          %v288 = vsel %vm286, 0, %v287
          %289 = vst [vmem:[%s232 + $0x8] sm:$0xf] %v288
          %v290 = vld [vmem:[%s232 + $0x14] sm:$0xf]
          %v291 = vsel %vm286, 0, %v290
          %292 = vst [vmem:[%s232 + $0x14] sm:$0xf] %v291
          %v293 = vld [vmem:[%s232 + $0x20] sm:$0xf]
          %v294 = vsel %vm286, 0, %v293
          %295 = vst [vmem:[%s232 + $0x20] sm:$0xf] %v294
          %v296 = vld [vmem:[%s232 + $0x2c] sm:$0xf]
          %v297 = vsel %vm286, 0, %v296
          %298 = vst [vmem:[%s232 + $0x2c] sm:$0xf] %v297
          %v299 = vld [vmem:[%s232 + $0x38] sm:$0xf]
          %v300 = vsel %vm286, 0, %v299
          %301 = vst [vmem:[%s232 + $0x38] sm:$0xf] %v300
          %v302 = vld [vmem:[%s232 + $0x44] sm:$0xf]
          %v303 = vsel %vm286, 0, %v302
          %304 = vst [vmem:[%s232 + $0x44] sm:$0xf] %v303
          %v305 = vld [vmem:[%s232 + $0x50] sm:$0xf]
          %v306 = vsel %vm286, 0, %v305
          %307 = vst [vmem:[%s232 + $0x50] sm:$0xf] %v306
          %v308 = vld [vmem:[%s232 + $0x5c] sm:$0xf]
          %v309 = vsel %vm286, 0, %v308
          %310 = vst [vmem:[%s232 + $0x5c] sm:$0xf] %v309
          %v311 = vld [vmem:[%s232 + $0x68] sm:$0xf]
          %v312 = vsel %vm286, 0, %v311
          %313 = vst [vmem:[%s232 + $0x68] sm:$0xf] %v312
          %v314 = vld [vmem:[%s232 + $0x74] sm:$0xf]
          %v315 = vsel %vm286, 0, %v314
          %316 = vst [vmem:[%s232 + $0x74] sm:$0xf] %v315
          %v317 = vld [vmem:[%s232 + $0x80] sm:$0xf]
          %v318 = vsel %vm286, 0, %v317
          %319 = vst [vmem:[%s232 + $0x80] sm:$0xf] %v318
          %v320 = vld [vmem:[%s232 + $0x8c] sm:$0xf]
          %v321 = vsel %vm286, 0, %v320
          %322 = vst [vmem:[%s232 + $0x8c] sm:$0xf] %v321
          %v323 = vld [vmem:[%s232 + $0x98] sm:$0xf]
          %v324 = vsel %vm286, 0, %v323
          %325 = vst [vmem:[%s232 + $0x98] sm:$0xf] %v324
          %v326 = vld [vmem:[%s232 + $0xa4] sm:$0xf]
          %v327 = vsel %vm286, 0, %v326
          %328 = vst [vmem:[%s232 + $0xa4] sm:$0xf] %v327
          %v329 = vld [vmem:[%s232 + $0xb0] sm:$0xf]
          %v330 = vsel %vm286, 0, %v329
          %331 = vst [vmem:[%s232 + $0xb0] sm:$0xf] %v330
          %v332 = vld [vmem:[%s232 + $0xbc] sm:$0xf]
          %v333 = vsel %vm286, 0, %v332
          %334 = vst [vmem:[%s232 + $0xbc] sm:$0xf] %v333
          %vm335 = vsmask.f32 4368
          %vm336 = vmor %vm234, %vm335
          %v338 = vshrl.u32 %v189, 16
          %v340 = vrot.slane %v338, 7
          %v341 = vshll.u32 %v189, 16
          %v343 = vor.u32 %v340, %v341
          %v344 = vrot.slane %v340, 4
          %v346 = vshrl.u32 %v190, 16
          %v348 = vrot.slane %v346, 7
          %v349 = vshll.u32 %v190, 16
          %v351 = vor.u32 %v348, %v349
          %v352 = vsel %vm336, %v344, %v351
          %v353 = vrot.slane %v348, 4
          %v355 = vshrl.u32 %v191, 16
          %v357 = vrot.slane %v355, 7
          %v358 = vshll.u32 %v191, 16
          %v360 = vor.u32 %v357, %v358
          %v361 = vrot.slane %v357, 4
          %v363 = vshrl.u32 %v192, 16
          %v365 = vrot.slane %v363, 7
          %v366 = vshll.u32 %v192, 16
          %v368 = vor.u32 %v365, %v366
          %v369 = vsel %vm336, %v361, %v368
          %v370 = vrot.slane %v365, 4
          %v372 = vshrl.u32 %v193, 16
          %v374 = vrot.slane %v372, 7
          %v375 = vshll.u32 %v193, 16
          %v377 = vor.u32 %v374, %v375
          %v378 = vrot.slane %v374, 4
          %v380 = vshrl.u32 %v194, 16
          %v382 = vrot.slane %v380, 7
          %v383 = vshll.u32 %v194, 16
          %v385 = vor.u32 %v382, %v383
          %v386 = vsel %vm336, %v378, %v385
          %v387 = vrot.slane %v382, 4
          %v389 = vshrl.u32 %v195, 16
          %v391 = vrot.slane %v389, 7
          %v392 = vshll.u32 %v195, 16
          %v394 = vor.u32 %v391, %v392
          %v395 = vrot.slane %v391, 4
          %v397 = vshrl.u32 %v196, 16
          %v399 = vrot.slane %v397, 7
          %v400 = vshll.u32 %v196, 16
          %v402 = vor.u32 %v399, %v400
          %v403 = vsel %vm336, %v395, %v402
          %v404 = vrot.slane %v399, 4
          %v406 = vshrl.u32 %v197, 16
          %v408 = vrot.slane %v406, 7
          %v409 = vshll.u32 %v197, 16
          %v411 = vor.u32 %v408, %v409
          %v412 = vrot.slane %v408, 4
          %v414 = vshrl.u32 %v198, 16
          %v416 = vrot.slane %v414, 7
          %v417 = vshll.u32 %v198, 16
          %v419 = vor.u32 %v416, %v417
          %v420 = vsel %vm336, %v412, %v419
          %v421 = vrot.slane %v416, 4
          %v423 = vshrl.u32 %v199, 16
          %v425 = vrot.slane %v423, 7
          %v426 = vshll.u32 %v199, 16
          %v428 = vor.u32 %v425, %v426
          %v429 = vrot.slane %v425, 4
          %v431 = vshrl.u32 %v200, 16
          %v433 = vrot.slane %v431, 7
          %v434 = vshll.u32 %v200, 16
          %v436 = vor.u32 %v433, %v434
          %v437 = vsel %vm336, %v429, %v436
          %v438 = vrot.slane %v433, 4
          %v440 = vshrl.u32 %v201, 16
          %v442 = vrot.slane %v440, 7
          %v443 = vshll.u32 %v201, 16
          %v445 = vor.u32 %v442, %v443
          %v446 = vrot.slane %v442, 4
          %v448 = vshrl.u32 %v202, 16
          %v450 = vrot.slane %v448, 7
          %v451 = vshll.u32 %v202, 16
          %v453 = vor.u32 %v450, %v451
          %v454 = vsel %vm336, %v446, %v453
          %v455 = vrot.slane %v450, 4
          %v457 = vshrl.u32 %v203, 16
          %v459 = vrot.slane %v457, 7
          %v460 = vshll.u32 %v203, 16
          %v462 = vor.u32 %v459, %v460
          %v463 = vrot.slane %v459, 4
          %v465 = vshrl.u32 %v204, 16
          %v467 = vrot.slane %v465, 7
          %v468 = vshll.u32 %v204, 16
          %v470 = vor.u32 %v467, %v468
          %v471 = vsel %vm336, %v463, %v470
          %v472 = vrot.slane %v467, 4
          %v474 = vshrl.u32 %v205, 16
          %v476 = vrot.slane %v474, 7
          %v477 = vshll.u32 %v205, 16
          %v479 = vor.u32 %v476, %v477
          %v480 = vrot.slane %v476, 4
          %v482 = vshrl.u32 %v206, 16
          %v484 = vrot.slane %v482, 7
          %v485 = vshll.u32 %v206, 16
          %v487 = vor.u32 %v484, %v485
          %v488 = vsel %vm336, %v480, %v487
          %v489 = vrot.slane %v484, 4
          %v491 = vshrl.u32 %v207, 16
          %v493 = vrot.slane %v491, 7
          %v494 = vshll.u32 %v207, 16
          %v496 = vor.u32 %v493, %v494
          %v497 = vrot.slane %v493, 4
          %v499 = vshrl.u32 %v208, 16
          %v501 = vrot.slane %v499, 7
          %v502 = vshll.u32 %v208, 16
          %v504 = vor.u32 %v501, %v502
          %v505 = vsel %vm336, %v497, %v504
          %v506 = vrot.slane %v501, 4
          %v508 = vshrl.u32 %v209, 16
          %v510 = vrot.slane %v508, 7
          %v511 = vshll.u32 %v209, 16
          %v513 = vor.u32 %v510, %v511
          %v514 = vrot.slane %v510, 4
          %v516 = vshrl.u32 %v210, 16
          %v518 = vrot.slane %v516, 7
          %v519 = vshll.u32 %v210, 16
          %v521 = vor.u32 %v518, %v519
          %v522 = vsel %vm336, %v514, %v521
          %v523 = vrot.slane %v518, 4
          %v525 = vshrl.u32 %v211, 16
          %v527 = vrot.slane %v525, 7
          %v528 = vshll.u32 %v211, 16
          %v530 = vor.u32 %v527, %v528
          %v531 = vrot.slane %v527, 4
          %v533 = vshrl.u32 %v212, 16
          %v535 = vrot.slane %v533, 7
          %v536 = vshll.u32 %v212, 16
          %v538 = vor.u32 %v535, %v536
          %v539 = vsel %vm336, %v531, %v538
          %v540 = vrot.slane %v535, 4
          %v542 = vshrl.u32 %v213, 16
          %v544 = vrot.slane %v542, 7
          %v545 = vshll.u32 %v213, 16
          %v547 = vor.u32 %v544, %v545
          %v548 = vrot.slane %v544, 4
          %v550 = vshrl.u32 %v214, 16
          %v552 = vrot.slane %v550, 7
          %v553 = vshll.u32 %v214, 16
          %v555 = vor.u32 %v552, %v553
          %v556 = vsel %vm336, %v548, %v555
          %v557 = vrot.slane %v552, 4
          %v559 = vshrl.u32 %v215, 16
          %v561 = vrot.slane %v559, 7
          %v562 = vshll.u32 %v215, 16
          %v564 = vor.u32 %v561, %v562
          %v565 = vrot.slane %v561, 4
          %v567 = vshrl.u32 %v216, 16
          %v569 = vrot.slane %v567, 7
          %v570 = vshll.u32 %v216, 16
          %v572 = vor.u32 %v569, %v570
          %v573 = vsel %vm336, %v565, %v572
          %v574 = vrot.slane %v569, 4
          %v576 = vshrl.u32 %v217, 16
          %v578 = vrot.slane %v576, 7
          %v579 = vshll.u32 %v217, 16
          %v581 = vor.u32 %v578, %v579
          %v582 = vrot.slane %v578, 4
          %v584 = vshrl.u32 %v218, 16
          %v586 = vrot.slane %v584, 7
          %v587 = vshll.u32 %v218, 16
          %v589 = vor.u32 %v586, %v587
          %v590 = vsel %vm336, %v582, %v589
          %v591 = vrot.slane %v586, 4
          %v593 = vshrl.u32 %v219, 16
          %v595 = vrot.slane %v593, 7
          %v596 = vshll.u32 %v219, 16
          %v598 = vor.u32 %v595, %v596
          %v599 = vrot.slane %v595, 4
          %v601 = vshrl.u32 %v220, 16
          %v603 = vrot.slane %v601, 7
          %v604 = vshll.u32 %v220, 16
          %v606 = vor.u32 %v603, %v604
          %v607 = vsel %vm336, %v599, %v606
          %v608 = vrot.slane %v603, 4
          %v657 = vld [vmem:[%s232] sm:$0xf]
          %v658 = vsel %vm286, %v343, %v657
          %659 = vst [vmem:[%s232] sm:$0xf] %v658
          %660 = vst.msk [vmem:[%s232 + $0x4] sm:$0xf] %vm221, %v352
          %v661 = vld [vmem:[%s232 + $0x8] sm:$0x1]
          %v662 = vsel %vm235, %v353, %v661
          %663 = vst [vmem:[%s232 + $0x8] sm:$0x1] %v662
          %v664 = vld [vmem:[%s232 + $0xc] sm:$0xf]
          %v665 = vsel %vm286, %v360, %v664
          %666 = vst [vmem:[%s232 + $0xc] sm:$0xf] %v665
          %667 = vst.msk [vmem:[%s232 + $0x10] sm:$0xf] %vm221, %v369
          %v668 = vld [vmem:[%s232 + $0x14] sm:$0x1]
          %v669 = vsel %vm235, %v370, %v668
          %670 = vst [vmem:[%s232 + $0x14] sm:$0x1] %v669
          %v671 = vld [vmem:[%s232 + $0x18] sm:$0xf]
          %v672 = vsel %vm286, %v377, %v671
          %673 = vst [vmem:[%s232 + $0x18] sm:$0xf] %v672
          %674 = vst.msk [vmem:[%s232 + $0x1c] sm:$0xf] %vm221, %v386
          %v675 = vld [vmem:[%s232 + $0x20] sm:$0x1]
          %v676 = vsel %vm235, %v387, %v675
          %677 = vst [vmem:[%s232 + $0x20] sm:$0x1] %v676
          %v678 = vld [vmem:[%s232 + $0x24] sm:$0xf]
          %v679 = vsel %vm286, %v394, %v678
          %680 = vst [vmem:[%s232 + $0x24] sm:$0xf] %v679
          %681 = vst.msk [vmem:[%s232 + $0x28] sm:$0xf] %vm221, %v403
          %v682 = vld [vmem:[%s232 + $0x2c] sm:$0x1]
          %v683 = vsel %vm235, %v404, %v682
          %684 = vst [vmem:[%s232 + $0x2c] sm:$0x1] %v683
          %v685 = vld [vmem:[%s232 + $0x30] sm:$0xf]
          %v686 = vsel %vm286, %v411, %v685
          %687 = vst [vmem:[%s232 + $0x30] sm:$0xf] %v686
          %688 = vst.msk [vmem:[%s232 + $0x34] sm:$0xf] %vm221, %v420
          %v689 = vld [vmem:[%s232 + $0x38] sm:$0x1]
          %v690 = vsel %vm235, %v421, %v689
          %691 = vst [vmem:[%s232 + $0x38] sm:$0x1] %v690
          %v692 = vld [vmem:[%s232 + $0x3c] sm:$0xf]
          %v693 = vsel %vm286, %v428, %v692
          %694 = vst [vmem:[%s232 + $0x3c] sm:$0xf] %v693
          %695 = vst.msk [vmem:[%s232 + $0x40] sm:$0xf] %vm221, %v437
          %v696 = vld [vmem:[%s232 + $0x44] sm:$0x1]
          %v697 = vsel %vm235, %v438, %v696
          %698 = vst [vmem:[%s232 + $0x44] sm:$0x1] %v697
          %v699 = vld [vmem:[%s232 + $0x48] sm:$0xf]
          %v700 = vsel %vm286, %v445, %v699
          %701 = vst [vmem:[%s232 + $0x48] sm:$0xf] %v700
          %702 = vst.msk [vmem:[%s232 + $0x4c] sm:$0xf] %vm221, %v454
          %v703 = vld [vmem:[%s232 + $0x50] sm:$0x1]
          %v704 = vsel %vm235, %v455, %v703
          %705 = vst [vmem:[%s232 + $0x50] sm:$0x1] %v704
          %v706 = vld [vmem:[%s232 + $0x54] sm:$0xf]
          %v707 = vsel %vm286, %v462, %v706
          %708 = vst [vmem:[%s232 + $0x54] sm:$0xf] %v707
          %709 = vst.msk [vmem:[%s232 + $0x58] sm:$0xf] %vm221, %v471
          %v710 = vld [vmem:[%s232 + $0x5c] sm:$0x1]
          %v711 = vsel %vm235, %v472, %v710
          %712 = vst [vmem:[%s232 + $0x5c] sm:$0x1] %v711
          %v713 = vld [vmem:[%s232 + $0x60] sm:$0xf]
          %v714 = vsel %vm286, %v479, %v713
          %715 = vst [vmem:[%s232 + $0x60] sm:$0xf] %v714
          %716 = vst.msk [vmem:[%s232 + $0x64] sm:$0xf] %vm221, %v488
          %v717 = vld [vmem:[%s232 + $0x68] sm:$0x1]
          %v718 = vsel %vm235, %v489, %v717
          %719 = vst [vmem:[%s232 + $0x68] sm:$0x1] %v718
          %v720 = vld [vmem:[%s232 + $0x6c] sm:$0xf]
          %v721 = vsel %vm286, %v496, %v720
          %722 = vst [vmem:[%s232 + $0x6c] sm:$0xf] %v721
          %723 = vst.msk [vmem:[%s232 + $0x70] sm:$0xf] %vm221, %v505
          %v724 = vld [vmem:[%s232 + $0x74] sm:$0x1]
          %v725 = vsel %vm235, %v506, %v724
          %726 = vst [vmem:[%s232 + $0x74] sm:$0x1] %v725
          %v727 = vld [vmem:[%s232 + $0x78] sm:$0xf]
          %v728 = vsel %vm286, %v513, %v727
          %729 = vst [vmem:[%s232 + $0x78] sm:$0xf] %v728
          %730 = vst.msk [vmem:[%s232 + $0x7c] sm:$0xf] %vm221, %v522
          %v731 = vld [vmem:[%s232 + $0x80] sm:$0x1]
          %v732 = vsel %vm235, %v523, %v731
          %733 = vst [vmem:[%s232 + $0x80] sm:$0x1] %v732
          %v734 = vld [vmem:[%s232 + $0x84] sm:$0xf]
          %v735 = vsel %vm286, %v530, %v734
          %736 = vst [vmem:[%s232 + $0x84] sm:$0xf] %v735
          %737 = vst.msk [vmem:[%s232 + $0x88] sm:$0xf] %vm221, %v539
          %v738 = vld [vmem:[%s232 + $0x8c] sm:$0x1]
          %v739 = vsel %vm235, %v540, %v738
          %740 = vst [vmem:[%s232 + $0x8c] sm:$0x1] %v739
          %v741 = vld [vmem:[%s232 + $0x90] sm:$0xf]
          %v742 = vsel %vm286, %v547, %v741
          %743 = vst [vmem:[%s232 + $0x90] sm:$0xf] %v742
          %744 = vst.msk [vmem:[%s232 + $0x94] sm:$0xf] %vm221, %v556
          %v745 = vld [vmem:[%s232 + $0x98] sm:$0x1]
          %v746 = vsel %vm235, %v557, %v745
          %747 = vst [vmem:[%s232 + $0x98] sm:$0x1] %v746
          %v748 = vld [vmem:[%s232 + $0x9c] sm:$0xf]
          %v749 = vsel %vm286, %v564, %v748
          %750 = vst [vmem:[%s232 + $0x9c] sm:$0xf] %v749
          %751 = vst.msk [vmem:[%s232 + $0xa0] sm:$0xf] %vm221, %v573
          %v752 = vld [vmem:[%s232 + $0xa4] sm:$0x1]
          %v753 = vsel %vm235, %v574, %v752
          %754 = vst [vmem:[%s232 + $0xa4] sm:$0x1] %v753
          %v755 = vld [vmem:[%s232 + $0xa8] sm:$0xf]
          %v756 = vsel %vm286, %v581, %v755
          %757 = vst [vmem:[%s232 + $0xa8] sm:$0xf] %v756
          %758 = vst.msk [vmem:[%s232 + $0xac] sm:$0xf] %vm221, %v590
          %v759 = vld [vmem:[%s232 + $0xb0] sm:$0x1]
          %v760 = vsel %vm235, %v591, %v759
          %761 = vst [vmem:[%s232 + $0xb0] sm:$0x1] %v760
          %v762 = vld [vmem:[%s232 + $0xb4] sm:$0xf]
          %v763 = vsel %vm286, %v598, %v762
          %764 = vst [vmem:[%s232 + $0xb4] sm:$0xf] %v763
          %765 = vst.msk [vmem:[%s232 + $0xb8] sm:$0xf] %vm221, %v607
          %v766 = vld [vmem:[%s232 + $0xbc] sm:$0x1]
          %v767 = vsel %vm235, %v608, %v766
          %768 = vst [vmem:[%s232 + $0xbc] sm:$0x1] %v767
        $region36: #{tpu_custom_call.1} parent=31 // pred_fallthru
          _
        %s769 = smul.u32 %s22, 8
        %s770 = smul.u32 %s769, 3
        %s771 = smul.addr %s770, 4
        %s772 = scalar_lea.vmem [#allocation2], %s771
        %v773 = vld [vmem:[%s772] sm:$0xf]
        %v774 = vld [vmem:[%s772 + $0x4] sm:$0xf]
        %v775 = vld [vmem:[%s772 + $0x8] sm:$0xf]
        %v776 = vld [vmem:[%s772 + $0xc] sm:$0xf]
        %v777 = vld [vmem:[%s772 + $0x10] sm:$0xf]
        %v778 = vld [vmem:[%s772 + $0x14] sm:$0xf]
        %v779 = vld [vmem:[%s772 + $0x18] sm:$0xf]
        %v780 = vld [vmem:[%s772 + $0x1c] sm:$0xf]
        %v781 = vld [vmem:[%s772 + $0x20] sm:$0xf]
        %v782 = vld [vmem:[%s772 + $0x24] sm:$0xf]
        %v783 = vld [vmem:[%s772 + $0x28] sm:$0xf]
        %v784 = vld [vmem:[%s772 + $0x2c] sm:$0xf]
        %v785 = vld [vmem:[%s772 + $0x30] sm:$0xf]
        %v786 = vld [vmem:[%s772 + $0x34] sm:$0xf]
        %v787 = vld [vmem:[%s772 + $0x38] sm:$0xf]
        %v788 = vld [vmem:[%s772 + $0x3c] sm:$0xf]
        %v789 = vld [vmem:[%s772 + $0x40] sm:$0xf]
        %v790 = vld [vmem:[%s772 + $0x44] sm:$0xf]
        %v791 = vld [vmem:[%s772 + $0x48] sm:$0xf]
        %v792 = vld [vmem:[%s772 + $0x4c] sm:$0xf]
        %v793 = vld [vmem:[%s772 + $0x50] sm:$0xf]
        %v794 = vld [vmem:[%s772 + $0x54] sm:$0xf]
        %v795 = vld [vmem:[%s772 + $0x58] sm:$0xf]
        %v796 = vld [vmem:[%s772 + $0x5c] sm:$0xf]
        %v797 = vld [vmem:[%s772 + $0x60] sm:$0xf]
        %vm798 = vcmask 519168
        %799 = vst.msk [vmem:[#allocation3] sm:$0xf] %vm798, %v773
        %800 = vst.msk [vmem:[#allocation3 + $0x14] sm:$0xf] %vm798, %v774
        %801 = vst.msk [vmem:[#allocation3 + $0x28] sm:$0xf] %vm798, %v775
        %802 = vst.msk [vmem:[#allocation3 + $0x3c] sm:$0xf] %vm798, %v776
        %803 = vst.msk [vmem:[#allocation3 + $0x50] sm:$0xf] %vm798, %v777
        %804 = vst.msk [vmem:[#allocation3 + $0x64] sm:$0xf] %vm798, %v778
        %805 = vst.msk [vmem:[#allocation3 + $0x78] sm:$0xf] %vm798, %v779
        %806 = vst.msk [vmem:[#allocation3 + $0x8c] sm:$0xf] %vm798, %v780
        %807 = vst.msk [vmem:[#allocation3 + $0xa0] sm:$0xf] %vm798, %v781
        %808 = vst.msk [vmem:[#allocation3 + $0xb4] sm:$0xf] %vm798, %v782
        %809 = vst.msk [vmem:[#allocation3 + $0xc8] sm:$0xf] %vm798, %v783
        %810 = vst.msk [vmem:[#allocation3 + $0xdc] sm:$0xf] %vm798, %v784
        %811 = vst.msk [vmem:[#allocation3 + $0xf0] sm:$0xf] %vm798, %v785
        %812 = vst.msk [vmem:[#allocation3 + $0x104] sm:$0xf] %vm798, %v786
        %813 = vst.msk [vmem:[#allocation3 + $0x118] sm:$0xf] %vm798, %v787
        %814 = vst.msk [vmem:[#allocation3 + $0x12c] sm:$0xf] %vm798, %v788
        %815 = vst.msk [vmem:[#allocation3 + $0x140] sm:$0xf] %vm798, %v789
        %816 = vst.msk [vmem:[#allocation3 + $0x154] sm:$0xf] %vm798, %v790
        %817 = vst.msk [vmem:[#allocation3 + $0x168] sm:$0xf] %vm798, %v791
        %818 = vst.msk [vmem:[#allocation3 + $0x17c] sm:$0xf] %vm798, %v792
        %819 = vst.msk [vmem:[#allocation3 + $0x190] sm:$0xf] %vm798, %v793
        %820 = vst.msk [vmem:[#allocation3 + $0x1a4] sm:$0xf] %vm798, %v794
        %821 = vst.msk [vmem:[#allocation3 + $0x1b8] sm:$0xf] %vm798, %v795
        %822 = vst.msk [vmem:[#allocation3 + $0x1cc] sm:$0xf] %vm798, %v796
        %vm823 = vsmask.f32 3328
        %vm824 = vsmask.f32 7440
        %vm825 = vmor %vm823, %vm824
        %v827 = vshrl.u32 %v773, 16
        %v829 = vrot.slane %v827, 4
        %v830 = vshll.u32 %v773, 16
        %v832 = vrot.slane %v830, 5
        %v833 = vor.u32 %v829, %v832
        %v834 = vrot.slane %v833, 4
        %v836 = vshll.u32 %v774, 16
        %v838 = vrot.slane %v836, 5
        %v839 = vsel %vm825, %v834, %v838
        %v840 = vshrl.u32 %v774, 16
        %v842 = vrot.slane %v840, 4
        %v843 = vor.u32 %v842, %v838
        %v844 = vrot.slane %v843, 4
        %v846 = vshll.u32 %v775, 16
        %v848 = vrot.slane %v846, 5
        %v849 = vsel %vm825, %v844, %v848
        %v850 = vshrl.u32 %v775, 16
        %v852 = vrot.slane %v850, 4
        %v853 = vor.u32 %v852, %v848
        %v854 = vrot.slane %v853, 4
        %v856 = vshll.u32 %v776, 16
        %v858 = vrot.slane %v856, 5
        %v859 = vsel %vm825, %v854, %v858
        %v860 = vshrl.u32 %v776, 16
        %v862 = vrot.slane %v860, 4
        %v863 = vor.u32 %v862, %v858
        %v864 = vrot.slane %v863, 4
        %v866 = vshll.u32 %v777, 16
        %v868 = vrot.slane %v866, 5
        %v869 = vsel %vm825, %v864, %v868
        %v870 = vshrl.u32 %v777, 16
        %v872 = vrot.slane %v870, 4
        %v873 = vor.u32 %v872, %v868
        %v874 = vrot.slane %v873, 4
        %v876 = vshll.u32 %v778, 16
        %v878 = vrot.slane %v876, 5
        %v879 = vsel %vm825, %v874, %v878
        %v880 = vshrl.u32 %v778, 16
        %v882 = vrot.slane %v880, 4
        %v883 = vor.u32 %v882, %v878
        %v884 = vrot.slane %v883, 4
        %v886 = vshll.u32 %v779, 16
        %v888 = vrot.slane %v886, 5
        %v889 = vsel %vm825, %v884, %v888
        %v890 = vshrl.u32 %v779, 16
        %v892 = vrot.slane %v890, 4
        %v893 = vor.u32 %v892, %v888
        %v894 = vrot.slane %v893, 4
        %v896 = vshll.u32 %v780, 16
        %v898 = vrot.slane %v896, 5
        %v899 = vsel %vm825, %v894, %v898
        %v900 = vshrl.u32 %v780, 16
        %v902 = vrot.slane %v900, 4
        %v903 = vor.u32 %v902, %v898
        %v904 = vrot.slane %v903, 4
        %v906 = vshll.u32 %v781, 16
        %v908 = vrot.slane %v906, 5
        %v909 = vsel %vm825, %v904, %v908
        %v910 = vshrl.u32 %v781, 16
        %v912 = vrot.slane %v910, 4
        %v913 = vor.u32 %v912, %v908
        %v914 = vrot.slane %v913, 4
        %v916 = vshll.u32 %v782, 16
        %v918 = vrot.slane %v916, 5
        %v919 = vsel %vm825, %v914, %v918
        %v920 = vshrl.u32 %v782, 16
        %v922 = vrot.slane %v920, 4
        %v923 = vor.u32 %v922, %v918
        %v924 = vrot.slane %v923, 4
        %v926 = vshll.u32 %v783, 16
        %v928 = vrot.slane %v926, 5
        %v929 = vsel %vm825, %v924, %v928
        %v930 = vshrl.u32 %v783, 16
        %v932 = vrot.slane %v930, 4
        %v933 = vor.u32 %v932, %v928
        %v934 = vrot.slane %v933, 4
        %v936 = vshll.u32 %v784, 16
        %v938 = vrot.slane %v936, 5
        %v939 = vsel %vm825, %v934, %v938
        %v940 = vshrl.u32 %v784, 16
        %v942 = vrot.slane %v940, 4
        %v943 = vor.u32 %v942, %v938
        %v944 = vrot.slane %v943, 4
        %v946 = vshll.u32 %v785, 16
        %v948 = vrot.slane %v946, 5
        %v949 = vsel %vm825, %v944, %v948
        %v950 = vshrl.u32 %v785, 16
        %v952 = vrot.slane %v950, 4
        %v953 = vor.u32 %v952, %v948
        %v954 = vrot.slane %v953, 4
        %v956 = vshll.u32 %v786, 16
        %v958 = vrot.slane %v956, 5
        %v959 = vsel %vm825, %v954, %v958
        %v960 = vshrl.u32 %v786, 16
        %v962 = vrot.slane %v960, 4
        %v963 = vor.u32 %v962, %v958
        %v964 = vrot.slane %v963, 4
        %v966 = vshll.u32 %v787, 16
        %v968 = vrot.slane %v966, 5
        %v969 = vsel %vm825, %v964, %v968
        %v970 = vshrl.u32 %v787, 16
        %v972 = vrot.slane %v970, 4
        %v973 = vor.u32 %v972, %v968
        %v974 = vrot.slane %v973, 4
        %v976 = vshll.u32 %v788, 16
        %v978 = vrot.slane %v976, 5
        %v979 = vsel %vm825, %v974, %v978
        %v980 = vshrl.u32 %v788, 16
        %v982 = vrot.slane %v980, 4
        %v983 = vor.u32 %v982, %v978
        %v984 = vrot.slane %v983, 4
        %v986 = vshll.u32 %v789, 16
        %v988 = vrot.slane %v986, 5
        %v989 = vsel %vm825, %v984, %v988
        %v990 = vshrl.u32 %v789, 16
        %v992 = vrot.slane %v990, 4
        %v993 = vor.u32 %v992, %v988
        %v994 = vrot.slane %v993, 4
        %v996 = vshll.u32 %v790, 16
        %v998 = vrot.slane %v996, 5
        %v999 = vsel %vm825, %v994, %v998
        %v1000 = vshrl.u32 %v790, 16
        %v1002 = vrot.slane %v1000, 4
        %v1003 = vor.u32 %v1002, %v998
        %v1004 = vrot.slane %v1003, 4
        %v1006 = vshll.u32 %v791, 16
        %v1008 = vrot.slane %v1006, 5
        %v1009 = vsel %vm825, %v1004, %v1008
        %v1010 = vshrl.u32 %v791, 16
        %v1012 = vrot.slane %v1010, 4
        %v1013 = vor.u32 %v1012, %v1008
        %v1014 = vrot.slane %v1013, 4
        %v1016 = vshll.u32 %v792, 16
        %v1018 = vrot.slane %v1016, 5
        %v1019 = vsel %vm825, %v1014, %v1018
        %v1020 = vshrl.u32 %v792, 16
        %v1022 = vrot.slane %v1020, 4
        %v1023 = vor.u32 %v1022, %v1018
        %v1024 = vrot.slane %v1023, 4
        %v1026 = vshll.u32 %v793, 16
        %v1028 = vrot.slane %v1026, 5
        %v1029 = vsel %vm825, %v1024, %v1028
        %v1030 = vshrl.u32 %v793, 16
        %v1032 = vrot.slane %v1030, 4
        %v1033 = vor.u32 %v1032, %v1028
        %v1034 = vrot.slane %v1033, 4
        %v1036 = vshll.u32 %v794, 16
        %v1038 = vrot.slane %v1036, 5
        %v1039 = vsel %vm825, %v1034, %v1038
        %v1040 = vshrl.u32 %v794, 16
        %v1042 = vrot.slane %v1040, 4
        %v1043 = vor.u32 %v1042, %v1038
        %v1044 = vrot.slane %v1043, 4
        %v1046 = vshll.u32 %v795, 16
        %v1048 = vrot.slane %v1046, 5
        %v1049 = vsel %vm825, %v1044, %v1048
        %v1050 = vshrl.u32 %v795, 16
        %v1052 = vrot.slane %v1050, 4
        %v1053 = vor.u32 %v1052, %v1048
        %v1054 = vrot.slane %v1053, 4
        %v1056 = vshll.u32 %v796, 16
        %v1058 = vrot.slane %v1056, 5
        %v1059 = vsel %vm825, %v1054, %v1058
        %v1060 = vshrl.u32 %v796, 16
        %v1062 = vrot.slane %v1060, 4
        %v1063 = vor.u32 %v1062, %v1058
        %v1064 = vrot.slane %v1063, 4
        %v1066 = vshll.u32 %v797, 16
        %v1068 = vrot.slane %v1066, 5
        %v1069 = vsel %vm825, %v1064, %v1068
        %1070 = vrot.lane.b32.xlu0 %v839, 64
        %v1071 = vpop.permute.xlu0 %1070
        %1072 = vrot.lane.b32.xlu0 %v849, 64
        %v1073 = vpop.permute.xlu0 %1072
        %1074 = vrot.lane.b32.xlu0 %v859, 64
        %v1075 = vpop.permute.xlu0 %1074
        %1076 = vrot.lane.b32.xlu0 %v869, 64
        %v1077 = vpop.permute.xlu0 %1076
        %1078 = vrot.lane.b32.xlu0 %v879, 64
        %v1079 = vpop.permute.xlu0 %1078
        %1080 = vrot.lane.b32.xlu0 %v889, 64
        %v1081 = vpop.permute.xlu0 %1080
        %1082 = vrot.lane.b32.xlu0 %v899, 64
        %v1083 = vpop.permute.xlu0 %1082
        %1084 = vrot.lane.b32.xlu0 %v909, 64
        %v1085 = vpop.permute.xlu0 %1084
        %1086 = vrot.lane.b32.xlu0 %v919, 64
        %v1087 = vpop.permute.xlu0 %1086
        %1088 = vrot.lane.b32.xlu0 %v929, 64
        %v1089 = vpop.permute.xlu0 %1088
        %1090 = vrot.lane.b32.xlu0 %v939, 64
        %v1091 = vpop.permute.xlu0 %1090
        %1092 = vrot.lane.b32.xlu0 %v949, 64
        %v1093 = vpop.permute.xlu0 %1092
        %1094 = vrot.lane.b32.xlu0 %v959, 64
        %v1095 = vpop.permute.xlu0 %1094
        %1096 = vrot.lane.b32.xlu0 %v969, 64
        %v1097 = vpop.permute.xlu0 %1096
        %1098 = vrot.lane.b32.xlu0 %v979, 64
        %v1099 = vpop.permute.xlu0 %1098
        %1100 = vrot.lane.b32.xlu0 %v989, 64
        %v1101 = vpop.permute.xlu0 %1100
        %1102 = vrot.lane.b32.xlu0 %v999, 64
        %v1103 = vpop.permute.xlu0 %1102
        %1104 = vrot.lane.b32.xlu0 %v1009, 64
        %v1105 = vpop.permute.xlu0 %1104
        %1106 = vrot.lane.b32.xlu0 %v1019, 64
        %v1107 = vpop.permute.xlu0 %1106
        %1108 = vrot.lane.b32.xlu0 %v1029, 64
        %v1109 = vpop.permute.xlu0 %1108
        %1110 = vrot.lane.b32.xlu0 %v1039, 64
        %v1111 = vpop.permute.xlu0 %1110
        %1112 = vrot.lane.b32.xlu0 %v1049, 64
        %v1113 = vpop.permute.xlu0 %1112
        %1114 = vrot.lane.b32.xlu0 %v1059, 64
        %v1115 = vpop.permute.xlu0 %1114
        %1116 = vrot.lane.b32.xlu0 %v1069, 64
        %v1117 = vpop.permute.xlu0 %1116
        %vm1142 = vcmask 1043968
        %1143 = vst.msk [vmem:[#allocation3] sm:$0xf] %vm1142, %v1071
        %1144 = vst.msk [vmem:[#allocation3 + $0x14] sm:$0xf] %vm1142, %v1073
        %1145 = vst.msk [vmem:[#allocation3 + $0x28] sm:$0xf] %vm1142, %v1075
        %1146 = vst.msk [vmem:[#allocation3 + $0x3c] sm:$0xf] %vm1142, %v1077
        %1147 = vst.msk [vmem:[#allocation3 + $0x50] sm:$0xf] %vm1142, %v1079
        %1148 = vst.msk [vmem:[#allocation3 + $0x64] sm:$0xf] %vm1142, %v1081
        %1149 = vst.msk [vmem:[#allocation3 + $0x78] sm:$0xf] %vm1142, %v1083
        %1150 = vst.msk [vmem:[#allocation3 + $0x8c] sm:$0xf] %vm1142, %v1085
        %1151 = vst.msk [vmem:[#allocation3 + $0xa0] sm:$0xf] %vm1142, %v1087
        %1152 = vst.msk [vmem:[#allocation3 + $0xb4] sm:$0xf] %vm1142, %v1089
        %1153 = vst.msk [vmem:[#allocation3 + $0xc8] sm:$0xf] %vm1142, %v1091
        %1154 = vst.msk [vmem:[#allocation3 + $0xdc] sm:$0xf] %vm1142, %v1093
        %1155 = vst.msk [vmem:[#allocation3 + $0xf0] sm:$0xf] %vm1142, %v1095
        %1156 = vst.msk [vmem:[#allocation3 + $0x104] sm:$0xf] %vm1142, %v1097
        %1157 = vst.msk [vmem:[#allocation3 + $0x118] sm:$0xf] %vm1142, %v1099
        %1158 = vst.msk [vmem:[#allocation3 + $0x12c] sm:$0xf] %vm1142, %v1101
        %1159 = vst.msk [vmem:[#allocation3 + $0x140] sm:$0xf] %vm1142, %v1103
        %1160 = vst.msk [vmem:[#allocation3 + $0x154] sm:$0xf] %vm1142, %v1105
        %1161 = vst.msk [vmem:[#allocation3 + $0x168] sm:$0xf] %vm1142, %v1107
        %1162 = vst.msk [vmem:[#allocation3 + $0x17c] sm:$0xf] %vm1142, %v1109
        %1163 = vst.msk [vmem:[#allocation3 + $0x190] sm:$0xf] %vm1142, %v1111
        %1164 = vst.msk [vmem:[#allocation3 + $0x1a4] sm:$0xf] %vm1142, %v1113
        %1165 = vst.msk [vmem:[#allocation3 + $0x1b8] sm:$0xf] %vm1142, %v1115
        %1166 = vst.msk [vmem:[#allocation3 + $0x1cc] sm:$0xf] %vm1142, %v1117
        %vm1192 = vcmask 1042432
        %vm1193 = vcmask 1046532
        %vm1194 = vmor %vm1192, %vm1193
        %v1195 = vrot.slane %v773, 5
        %v1196 = vrot.slane %v1195, 4
        %v1197 = vrot.slane %v774, 5
        %v1198 = vsel %vm1194, %v1196, %v1197
        %v1199 = vrot.slane %v1197, 4
        %v1200 = vrot.slane %v775, 5
        %v1201 = vsel %vm1194, %v1199, %v1200
        %v1202 = vrot.slane %v1200, 4
        %v1203 = vrot.slane %v776, 5
        %v1204 = vsel %vm1194, %v1202, %v1203
        %v1205 = vrot.slane %v1203, 4
        %v1206 = vrot.slane %v777, 5
        %v1207 = vsel %vm1194, %v1205, %v1206
        %v1208 = vrot.slane %v1206, 4
        %v1209 = vrot.slane %v778, 5
        %v1210 = vsel %vm1194, %v1208, %v1209
        %v1211 = vrot.slane %v1209, 4
        %v1212 = vrot.slane %v779, 5
        %v1213 = vsel %vm1194, %v1211, %v1212
        %v1214 = vrot.slane %v1212, 4
        %v1215 = vrot.slane %v780, 5
        %v1216 = vsel %vm1194, %v1214, %v1215
        %v1217 = vrot.slane %v1215, 4
        %v1218 = vrot.slane %v781, 5
        %v1219 = vsel %vm1194, %v1217, %v1218
        %v1220 = vrot.slane %v1218, 4
        %v1221 = vrot.slane %v782, 5
        %v1222 = vsel %vm1194, %v1220, %v1221
        %v1223 = vrot.slane %v1221, 4
        %v1224 = vrot.slane %v783, 5
        %v1225 = vsel %vm1194, %v1223, %v1224
        %v1226 = vrot.slane %v1224, 4
        %v1227 = vrot.slane %v784, 5
        %v1228 = vsel %vm1194, %v1226, %v1227
        %v1229 = vrot.slane %v1227, 4
        %v1230 = vrot.slane %v785, 5
        %v1231 = vsel %vm1194, %v1229, %v1230
        %v1232 = vrot.slane %v1230, 4
        %v1233 = vrot.slane %v786, 5
        %v1234 = vsel %vm1194, %v1232, %v1233
        %v1235 = vrot.slane %v1233, 4
        %v1236 = vrot.slane %v787, 5
        %v1237 = vsel %vm1194, %v1235, %v1236
        %v1238 = vrot.slane %v1236, 4
        %v1239 = vrot.slane %v788, 5
        %v1240 = vsel %vm1194, %v1238, %v1239
        %v1241 = vrot.slane %v1239, 4
        %v1242 = vrot.slane %v789, 5
        %v1243 = vsel %vm1194, %v1241, %v1242
        %v1244 = vrot.slane %v1242, 4
        %v1245 = vrot.slane %v790, 5
        %v1246 = vsel %vm1194, %v1244, %v1245
        %v1247 = vrot.slane %v1245, 4
        %v1248 = vrot.slane %v791, 5
        %v1249 = vsel %vm1194, %v1247, %v1248
        %v1250 = vrot.slane %v1248, 4
        %v1251 = vrot.slane %v792, 5
        %v1252 = vsel %vm1194, %v1250, %v1251
        %v1253 = vrot.slane %v1251, 4
        %v1254 = vrot.slane %v793, 5
        %v1255 = vsel %vm1194, %v1253, %v1254
        %v1256 = vrot.slane %v1254, 4
        %v1257 = vrot.slane %v794, 5
        %v1258 = vsel %vm1194, %v1256, %v1257
        %v1259 = vrot.slane %v1257, 4
        %v1260 = vrot.slane %v795, 5
        %v1261 = vsel %vm1194, %v1259, %v1260
        %v1262 = vrot.slane %v1260, 4
        %v1263 = vrot.slane %v796, 5
        %v1264 = vsel %vm1194, %v1262, %v1263
        %v1265 = vrot.slane %v1263, 4
        %v1266 = vrot.slane %v797, 5
        %v1267 = vsel %vm1194, %v1265, %v1266
        %1292 = vst.msk [vmem:[#allocation3 + $0x4] sm:$0xf] %vm798, %v1198
        %1293 = vst.msk [vmem:[#allocation3 + $0x18] sm:$0xf] %vm798, %v1201
        %1294 = vst.msk [vmem:[#allocation3 + $0x2c] sm:$0xf] %vm798, %v1204
        %1295 = vst.msk [vmem:[#allocation3 + $0x40] sm:$0xf] %vm798, %v1207
        %1296 = vst.msk [vmem:[#allocation3 + $0x54] sm:$0xf] %vm798, %v1210
        %1297 = vst.msk [vmem:[#allocation3 + $0x68] sm:$0xf] %vm798, %v1213
        %1298 = vst.msk [vmem:[#allocation3 + $0x7c] sm:$0xf] %vm798, %v1216
        %1299 = vst.msk [vmem:[#allocation3 + $0x90] sm:$0xf] %vm798, %v1219
        %1300 = vst.msk [vmem:[#allocation3 + $0xa4] sm:$0xf] %vm798, %v1222
        %1301 = vst.msk [vmem:[#allocation3 + $0xb8] sm:$0xf] %vm798, %v1225
        %1302 = vst.msk [vmem:[#allocation3 + $0xcc] sm:$0xf] %vm798, %v1228
        %1303 = vst.msk [vmem:[#allocation3 + $0xe0] sm:$0xf] %vm798, %v1231
        %1304 = vst.msk [vmem:[#allocation3 + $0xf4] sm:$0xf] %vm798, %v1234
        %1305 = vst.msk [vmem:[#allocation3 + $0x108] sm:$0xf] %vm798, %v1237
        %1306 = vst.msk [vmem:[#allocation3 + $0x11c] sm:$0xf] %vm798, %v1240
        %1307 = vst.msk [vmem:[#allocation3 + $0x130] sm:$0xf] %vm798, %v1243
        %1308 = vst.msk [vmem:[#allocation3 + $0x144] sm:$0xf] %vm798, %v1246
        %1309 = vst.msk [vmem:[#allocation3 + $0x158] sm:$0xf] %vm798, %v1249
        %1310 = vst.msk [vmem:[#allocation3 + $0x16c] sm:$0xf] %vm798, %v1252
        %1311 = vst.msk [vmem:[#allocation3 + $0x180] sm:$0xf] %vm798, %v1255
        %1312 = vst.msk [vmem:[#allocation3 + $0x194] sm:$0xf] %vm798, %v1258
        %1313 = vst.msk [vmem:[#allocation3 + $0x1a8] sm:$0xf] %vm798, %v1261
        %1314 = vst.msk [vmem:[#allocation3 + $0x1bc] sm:$0xf] %vm798, %v1264
        %1315 = vst.msk [vmem:[#allocation3 + $0x1d0] sm:$0xf] %vm798, %v1267
        %s1316 = sadd.s32 %s769, 1
        %s1317 = smul.u32 %s1316, 3
        %s1318 = smul.addr %s1317, 4
        %s1319 = scalar_lea.vmem [#allocation2], %s1318
        %v1320 = vld [vmem:[%s1319] sm:$0xf]
        %v1321 = vld [vmem:[%s1319 + $0x4] sm:$0xf]
        %v1322 = vld [vmem:[%s1319 + $0x8] sm:$0xf]
        %v1323 = vld [vmem:[%s1319 + $0xc] sm:$0xf]
        %v1324 = vld [vmem:[%s1319 + $0x10] sm:$0xf]
        %v1325 = vld [vmem:[%s1319 + $0x14] sm:$0xf]
        %v1326 = vld [vmem:[%s1319 + $0x18] sm:$0xf]
        %v1327 = vld [vmem:[%s1319 + $0x1c] sm:$0xf]
        %v1328 = vld [vmem:[%s1319 + $0x20] sm:$0xf]
        %v1329 = vld [vmem:[%s1319 + $0x24] sm:$0xf]
        %v1330 = vld [vmem:[%s1319 + $0x28] sm:$0xf]
        %v1331 = vld [vmem:[%s1319 + $0x2c] sm:$0xf]
        %v1332 = vld [vmem:[%s1319 + $0x30] sm:$0xf]
        %v1333 = vld [vmem:[%s1319 + $0x34] sm:$0xf]
        %v1334 = vld [vmem:[%s1319 + $0x38] sm:$0xf]
        %v1335 = vld [vmem:[%s1319 + $0x3c] sm:$0xf]
        %v1336 = vld [vmem:[%s1319 + $0x40] sm:$0xf]
        %v1337 = vld [vmem:[%s1319 + $0x44] sm:$0xf]
        %v1338 = vld [vmem:[%s1319 + $0x48] sm:$0xf]
        %v1339 = vld [vmem:[%s1319 + $0x4c] sm:$0xf]
        %v1340 = vld [vmem:[%s1319 + $0x50] sm:$0xf]
        %v1341 = vld [vmem:[%s1319 + $0x54] sm:$0xf]
        %v1342 = vld [vmem:[%s1319 + $0x58] sm:$0xf]
        %v1343 = vld [vmem:[%s1319 + $0x5c] sm:$0xf]
        %v1344 = vld [vmem:[%s1319 + $0x60] sm:$0xf]
        %1369 = vrot.lane.b32.xlu0 %v1320, 64
        %v1370 = vpop.permute.xlu0 %1369
        %1371 = vrot.lane.b32.xlu0 %v1321, 64
        %v1372 = vpop.permute.xlu0 %1371
        %1373 = vrot.lane.b32.xlu0 %v1322, 64
        %v1374 = vpop.permute.xlu0 %1373
        %1375 = vrot.lane.b32.xlu0 %v1323, 64
        %v1376 = vpop.permute.xlu0 %1375
        %1377 = vrot.lane.b32.xlu0 %v1324, 64
        %v1378 = vpop.permute.xlu0 %1377
        %1379 = vrot.lane.b32.xlu0 %v1325, 64
        %v1380 = vpop.permute.xlu0 %1379
        %1381 = vrot.lane.b32.xlu0 %v1326, 64
        %v1382 = vpop.permute.xlu0 %1381
        %1383 = vrot.lane.b32.xlu0 %v1327, 64
        %v1384 = vpop.permute.xlu0 %1383
        %1385 = vrot.lane.b32.xlu0 %v1328, 64
        %v1386 = vpop.permute.xlu0 %1385
        %1387 = vrot.lane.b32.xlu0 %v1329, 64
        %v1388 = vpop.permute.xlu0 %1387
        %1389 = vrot.lane.b32.xlu0 %v1330, 64
        %v1390 = vpop.permute.xlu0 %1389
        %1391 = vrot.lane.b32.xlu0 %v1331, 64
        %v1392 = vpop.permute.xlu0 %1391
        %1393 = vrot.lane.b32.xlu0 %v1332, 64
        %v1394 = vpop.permute.xlu0 %1393
        %1395 = vrot.lane.b32.xlu0 %v1333, 64
        %v1396 = vpop.permute.xlu0 %1395
        %1397 = vrot.lane.b32.xlu0 %v1334, 64
        %v1398 = vpop.permute.xlu0 %1397
        %1399 = vrot.lane.b32.xlu0 %v1335, 64
        %v1400 = vpop.permute.xlu0 %1399
        %1401 = vrot.lane.b32.xlu0 %v1336, 64
        %v1402 = vpop.permute.xlu0 %1401
        %1403 = vrot.lane.b32.xlu0 %v1337, 64
        %v1404 = vpop.permute.xlu0 %1403
        %1405 = vrot.lane.b32.xlu0 %v1338, 64
        %v1406 = vpop.permute.xlu0 %1405
        %1407 = vrot.lane.b32.xlu0 %v1339, 64
        %v1408 = vpop.permute.xlu0 %1407
        %1409 = vrot.lane.b32.xlu0 %v1340, 64
        %v1410 = vpop.permute.xlu0 %1409
        %1411 = vrot.lane.b32.xlu0 %v1341, 64
        %v1412 = vpop.permute.xlu0 %1411
        %1413 = vrot.lane.b32.xlu0 %v1342, 64
        %v1414 = vpop.permute.xlu0 %1413
        %1415 = vrot.lane.b32.xlu0 %v1343, 64
        %v1416 = vpop.permute.xlu0 %1415
        %1441 = vst.msk [vmem:[#allocation3 + $0x4] sm:$0xf] %vm1142, %v1370
        %1442 = vst.msk [vmem:[#allocation3 + $0x18] sm:$0xf] %vm1142, %v1372
        %1443 = vst.msk [vmem:[#allocation3 + $0x2c] sm:$0xf] %vm1142, %v1374
        %1444 = vst.msk [vmem:[#allocation3 + $0x40] sm:$0xf] %vm1142, %v1376
        %1445 = vst.msk [vmem:[#allocation3 + $0x54] sm:$0xf] %vm1142, %v1378
        %1446 = vst.msk [vmem:[#allocation3 + $0x68] sm:$0xf] %vm1142, %v1380
        %1447 = vst.msk [vmem:[#allocation3 + $0x7c] sm:$0xf] %vm1142, %v1382
        %1448 = vst.msk [vmem:[#allocation3 + $0x90] sm:$0xf] %vm1142, %v1384
        %1449 = vst.msk [vmem:[#allocation3 + $0xa4] sm:$0xf] %vm1142, %v1386
        %1450 = vst.msk [vmem:[#allocation3 + $0xb8] sm:$0xf] %vm1142, %v1388
        %1451 = vst.msk [vmem:[#allocation3 + $0xcc] sm:$0xf] %vm1142, %v1390
        %1452 = vst.msk [vmem:[#allocation3 + $0xe0] sm:$0xf] %vm1142, %v1392
        %1453 = vst.msk [vmem:[#allocation3 + $0xf4] sm:$0xf] %vm1142, %v1394
        %1454 = vst.msk [vmem:[#allocation3 + $0x108] sm:$0xf] %vm1142, %v1396
        %1455 = vst.msk [vmem:[#allocation3 + $0x11c] sm:$0xf] %vm1142, %v1398
        %1456 = vst.msk [vmem:[#allocation3 + $0x130] sm:$0xf] %vm1142, %v1400
        %1457 = vst.msk [vmem:[#allocation3 + $0x144] sm:$0xf] %vm1142, %v1402
        %1458 = vst.msk [vmem:[#allocation3 + $0x158] sm:$0xf] %vm1142, %v1404
        %1459 = vst.msk [vmem:[#allocation3 + $0x16c] sm:$0xf] %vm1142, %v1406
        %1460 = vst.msk [vmem:[#allocation3 + $0x180] sm:$0xf] %vm1142, %v1408
        %1461 = vst.msk [vmem:[#allocation3 + $0x194] sm:$0xf] %vm1142, %v1410
        %1462 = vst.msk [vmem:[#allocation3 + $0x1a8] sm:$0xf] %vm1142, %v1412
        %1463 = vst.msk [vmem:[#allocation3 + $0x1bc] sm:$0xf] %vm1142, %v1414
        %1464 = vst.msk [vmem:[#allocation3 + $0x1d0] sm:$0xf] %vm1142, %v1416
        %v1466 = vshrl.u32 %v1320, 16
        %v1468 = vrot.slane %v1466, 4
        %v1469 = vshll.u32 %v1320, 16
        %v1471 = vrot.slane %v1469, 5
        %v1472 = vor.u32 %v1468, %v1471
        %v1473 = vrot.slane %v1472, 4
        %v1475 = vshll.u32 %v1321, 16
        %v1477 = vrot.slane %v1475, 5
        %v1478 = vsel %vm825, %v1473, %v1477
        %v1479 = vshrl.u32 %v1321, 16
        %v1481 = vrot.slane %v1479, 4
        %v1482 = vor.u32 %v1481, %v1477
        %v1483 = vrot.slane %v1482, 4
        %v1485 = vshll.u32 %v1322, 16
        %v1487 = vrot.slane %v1485, 5
        %v1488 = vsel %vm825, %v1483, %v1487
        %v1489 = vshrl.u32 %v1322, 16
        %v1491 = vrot.slane %v1489, 4
        %v1492 = vor.u32 %v1491, %v1487
        %v1493 = vrot.slane %v1492, 4
        %v1495 = vshll.u32 %v1323, 16
        %v1497 = vrot.slane %v1495, 5
        %v1498 = vsel %vm825, %v1493, %v1497
        %v1499 = vshrl.u32 %v1323, 16
        %v1501 = vrot.slane %v1499, 4
        %v1502 = vor.u32 %v1501, %v1497
        %v1503 = vrot.slane %v1502, 4
        %v1505 = vshll.u32 %v1324, 16
        %v1507 = vrot.slane %v1505, 5
        %v1508 = vsel %vm825, %v1503, %v1507
        %v1509 = vshrl.u32 %v1324, 16
        %v1511 = vrot.slane %v1509, 4
        %v1512 = vor.u32 %v1511, %v1507
        %v1513 = vrot.slane %v1512, 4
        %v1515 = vshll.u32 %v1325, 16
        %v1517 = vrot.slane %v1515, 5
        %v1518 = vsel %vm825, %v1513, %v1517
        %v1519 = vshrl.u32 %v1325, 16
        %v1521 = vrot.slane %v1519, 4
        %v1522 = vor.u32 %v1521, %v1517
        %v1523 = vrot.slane %v1522, 4
        %v1525 = vshll.u32 %v1326, 16
        %v1527 = vrot.slane %v1525, 5
        %v1528 = vsel %vm825, %v1523, %v1527
        %v1529 = vshrl.u32 %v1326, 16
        %v1531 = vrot.slane %v1529, 4
        %v1532 = vor.u32 %v1531, %v1527
        %v1533 = vrot.slane %v1532, 4
        %v1535 = vshll.u32 %v1327, 16
        %v1537 = vrot.slane %v1535, 5
        %v1538 = vsel %vm825, %v1533, %v1537
        %v1539 = vshrl.u32 %v1327, 16
        %v1541 = vrot.slane %v1539, 4
        %v1542 = vor.u32 %v1541, %v1537
        %v1543 = vrot.slane %v1542, 4
        %v1545 = vshll.u32 %v1328, 16
        %v1547 = vrot.slane %v1545, 5
        %v1548 = vsel %vm825, %v1543, %v1547
        %v1549 = vshrl.u32 %v1328, 16
        %v1551 = vrot.slane %v1549, 4
        %v1552 = vor.u32 %v1551, %v1547
        %v1553 = vrot.slane %v1552, 4
        %v1555 = vshll.u32 %v1329, 16
        %v1557 = vrot.slane %v1555, 5
        %v1558 = vsel %vm825, %v1553, %v1557
        %v1559 = vshrl.u32 %v1329, 16
        %v1561 = vrot.slane %v1559, 4
        %v1562 = vor.u32 %v1561, %v1557
        %v1563 = vrot.slane %v1562, 4
        %v1565 = vshll.u32 %v1330, 16
        %v1567 = vrot.slane %v1565, 5
        %v1568 = vsel %vm825, %v1563, %v1567
        %v1569 = vshrl.u32 %v1330, 16
        %v1571 = vrot.slane %v1569, 4
        %v1572 = vor.u32 %v1571, %v1567
        %v1573 = vrot.slane %v1572, 4
        %v1575 = vshll.u32 %v1331, 16
        %v1577 = vrot.slane %v1575, 5
        %v1578 = vsel %vm825, %v1573, %v1577
        %v1579 = vshrl.u32 %v1331, 16
        %v1581 = vrot.slane %v1579, 4
        %v1582 = vor.u32 %v1581, %v1577
        %v1583 = vrot.slane %v1582, 4
        %v1585 = vshll.u32 %v1332, 16
        %v1587 = vrot.slane %v1585, 5
        %v1588 = vsel %vm825, %v1583, %v1587
        %v1589 = vshrl.u32 %v1332, 16
        %v1591 = vrot.slane %v1589, 4
        %v1592 = vor.u32 %v1591, %v1587
        %v1593 = vrot.slane %v1592, 4
        %v1595 = vshll.u32 %v1333, 16
        %v1597 = vrot.slane %v1595, 5
        %v1598 = vsel %vm825, %v1593, %v1597
        %v1599 = vshrl.u32 %v1333, 16
        %v1601 = vrot.slane %v1599, 4
        %v1602 = vor.u32 %v1601, %v1597
        %v1603 = vrot.slane %v1602, 4
        %v1605 = vshll.u32 %v1334, 16
        %v1607 = vrot.slane %v1605, 5
        %v1608 = vsel %vm825, %v1603, %v1607
        %v1609 = vshrl.u32 %v1334, 16
        %v1611 = vrot.slane %v1609, 4
        %v1612 = vor.u32 %v1611, %v1607
        %v1613 = vrot.slane %v1612, 4
        %v1615 = vshll.u32 %v1335, 16
        %v1617 = vrot.slane %v1615, 5
        %v1618 = vsel %vm825, %v1613, %v1617
        %v1619 = vshrl.u32 %v1335, 16
        %v1621 = vrot.slane %v1619, 4
        %v1622 = vor.u32 %v1621, %v1617
        %v1623 = vrot.slane %v1622, 4
        %v1625 = vshll.u32 %v1336, 16
        %v1627 = vrot.slane %v1625, 5
        %v1628 = vsel %vm825, %v1623, %v1627
        %v1629 = vshrl.u32 %v1336, 16
        %v1631 = vrot.slane %v1629, 4
        %v1632 = vor.u32 %v1631, %v1627
        %v1633 = vrot.slane %v1632, 4
        %v1635 = vshll.u32 %v1337, 16
        %v1637 = vrot.slane %v1635, 5
        %v1638 = vsel %vm825, %v1633, %v1637
        %v1639 = vshrl.u32 %v1337, 16
        %v1641 = vrot.slane %v1639, 4
        %v1642 = vor.u32 %v1641, %v1637
        %v1643 = vrot.slane %v1642, 4
        %v1645 = vshll.u32 %v1338, 16
        %v1647 = vrot.slane %v1645, 5
        %v1648 = vsel %vm825, %v1643, %v1647
        %v1649 = vshrl.u32 %v1338, 16
        %v1651 = vrot.slane %v1649, 4
        %v1652 = vor.u32 %v1651, %v1647
        %v1653 = vrot.slane %v1652, 4
        %v1655 = vshll.u32 %v1339, 16
        %v1657 = vrot.slane %v1655, 5
        %v1658 = vsel %vm825, %v1653, %v1657
        %v1659 = vshrl.u32 %v1339, 16
        %v1661 = vrot.slane %v1659, 4
        %v1662 = vor.u32 %v1661, %v1657
        %v1663 = vrot.slane %v1662, 4
        %v1665 = vshll.u32 %v1340, 16
        %v1667 = vrot.slane %v1665, 5
        %v1668 = vsel %vm825, %v1663, %v1667
        %v1669 = vshrl.u32 %v1340, 16
        %v1671 = vrot.slane %v1669, 4
        %v1672 = vor.u32 %v1671, %v1667
        %v1673 = vrot.slane %v1672, 4
        %v1675 = vshll.u32 %v1341, 16
        %v1677 = vrot.slane %v1675, 5
        %v1678 = vsel %vm825, %v1673, %v1677
        %v1679 = vshrl.u32 %v1341, 16
        %v1681 = vrot.slane %v1679, 4
        %v1682 = vor.u32 %v1681, %v1677
        %v1683 = vrot.slane %v1682, 4
        %v1685 = vshll.u32 %v1342, 16
        %v1687 = vrot.slane %v1685, 5
        %v1688 = vsel %vm825, %v1683, %v1687
        %v1689 = vshrl.u32 %v1342, 16
        %v1691 = vrot.slane %v1689, 4
        %v1692 = vor.u32 %v1691, %v1687
        %v1693 = vrot.slane %v1692, 4
        %v1695 = vshll.u32 %v1343, 16
        %v1697 = vrot.slane %v1695, 5
        %v1698 = vsel %vm825, %v1693, %v1697
        %v1699 = vshrl.u32 %v1343, 16
        %v1701 = vrot.slane %v1699, 4
        %v1702 = vor.u32 %v1701, %v1697
        %v1703 = vrot.slane %v1702, 4
        %v1705 = vshll.u32 %v1344, 16
        %v1707 = vrot.slane %v1705, 5
        %v1708 = vsel %vm825, %v1703, %v1707
        %1733 = vst.msk [vmem:[#allocation3 + $0x8] sm:$0xf] %vm798, %v1478
        %1734 = vst.msk [vmem:[#allocation3 + $0x1c] sm:$0xf] %vm798, %v1488
        %1735 = vst.msk [vmem:[#allocation3 + $0x30] sm:$0xf] %vm798, %v1498
        %1736 = vst.msk [vmem:[#allocation3 + $0x44] sm:$0xf] %vm798, %v1508
        %1737 = vst.msk [vmem:[#allocation3 + $0x58] sm:$0xf] %vm798, %v1518
        %1738 = vst.msk [vmem:[#allocation3 + $0x6c] sm:$0xf] %vm798, %v1528
        %1739 = vst.msk [vmem:[#allocation3 + $0x80] sm:$0xf] %vm798, %v1538
        %1740 = vst.msk [vmem:[#allocation3 + $0x94] sm:$0xf] %vm798, %v1548
        %1741 = vst.msk [vmem:[#allocation3 + $0xa8] sm:$0xf] %vm798, %v1558
        %1742 = vst.msk [vmem:[#allocation3 + $0xbc] sm:$0xf] %vm798, %v1568
        %1743 = vst.msk [vmem:[#allocation3 + $0xd0] sm:$0xf] %vm798, %v1578
        %1744 = vst.msk [vmem:[#allocation3 + $0xe4] sm:$0xf] %vm798, %v1588
        %1745 = vst.msk [vmem:[#allocation3 + $0xf8] sm:$0xf] %vm798, %v1598
        %1746 = vst.msk [vmem:[#allocation3 + $0x10c] sm:$0xf] %vm798, %v1608
        %1747 = vst.msk [vmem:[#allocation3 + $0x120] sm:$0xf] %vm798, %v1618
        %1748 = vst.msk [vmem:[#allocation3 + $0x134] sm:$0xf] %vm798, %v1628
        %1749 = vst.msk [vmem:[#allocation3 + $0x148] sm:$0xf] %vm798, %v1638
        %1750 = vst.msk [vmem:[#allocation3 + $0x15c] sm:$0xf] %vm798, %v1648
        %1751 = vst.msk [vmem:[#allocation3 + $0x170] sm:$0xf] %vm798, %v1658
        %1752 = vst.msk [vmem:[#allocation3 + $0x184] sm:$0xf] %vm798, %v1668
        %1753 = vst.msk [vmem:[#allocation3 + $0x198] sm:$0xf] %vm798, %v1678
        %1754 = vst.msk [vmem:[#allocation3 + $0x1ac] sm:$0xf] %vm798, %v1688
        %1755 = vst.msk [vmem:[#allocation3 + $0x1c0] sm:$0xf] %vm798, %v1698
        %1756 = vst.msk [vmem:[#allocation3 + $0x1d4] sm:$0xf] %vm798, %v1708
        %v1758 = vrot.slane %v1320, 5
        %v1759 = vrot.slane %v1758, 4
        %v1760 = vrot.slane %v1321, 5
        %v1761 = vsel %vm1194, %v1759, %v1760
        %v1762 = vrot.slane %v1760, 4
        %v1763 = vrot.slane %v1322, 5
        %v1764 = vsel %vm1194, %v1762, %v1763
        %v1765 = vrot.slane %v1763, 4
        %v1766 = vrot.slane %v1323, 5
        %v1767 = vsel %vm1194, %v1765, %v1766
        %v1768 = vrot.slane %v1766, 4
        %v1769 = vrot.slane %v1324, 5
        %v1770 = vsel %vm1194, %v1768, %v1769
        %v1771 = vrot.slane %v1769, 4
        %v1772 = vrot.slane %v1325, 5
        %v1773 = vsel %vm1194, %v1771, %v1772
        %v1774 = vrot.slane %v1772, 4
        %v1775 = vrot.slane %v1326, 5
        %v1776 = vsel %vm1194, %v1774, %v1775
        %v1777 = vrot.slane %v1775, 4
        %v1778 = vrot.slane %v1327, 5
        %v1779 = vsel %vm1194, %v1777, %v1778
        %v1780 = vrot.slane %v1778, 4
        %v1781 = vrot.slane %v1328, 5
        %v1782 = vsel %vm1194, %v1780, %v1781
        %v1783 = vrot.slane %v1781, 4
        %v1784 = vrot.slane %v1329, 5
        %v1785 = vsel %vm1194, %v1783, %v1784
        %v1786 = vrot.slane %v1784, 4
        %v1787 = vrot.slane %v1330, 5
        %v1788 = vsel %vm1194, %v1786, %v1787
        %v1789 = vrot.slane %v1787, 4
        %v1790 = vrot.slane %v1331, 5
        %v1791 = vsel %vm1194, %v1789, %v1790
        %v1792 = vrot.slane %v1790, 4
        %v1793 = vrot.slane %v1332, 5
        %v1794 = vsel %vm1194, %v1792, %v1793
        %v1795 = vrot.slane %v1793, 4
        %v1796 = vrot.slane %v1333, 5
        %v1797 = vsel %vm1194, %v1795, %v1796
        %v1798 = vrot.slane %v1796, 4
        %v1799 = vrot.slane %v1334, 5
        %v1800 = vsel %vm1194, %v1798, %v1799
        %v1801 = vrot.slane %v1799, 4
        %v1802 = vrot.slane %v1335, 5
        %v1803 = vsel %vm1194, %v1801, %v1802
        %v1804 = vrot.slane %v1802, 4
        %v1805 = vrot.slane %v1336, 5
        %v1806 = vsel %vm1194, %v1804, %v1805
        %v1807 = vrot.slane %v1805, 4
        %v1808 = vrot.slane %v1337, 5
        %v1809 = vsel %vm1194, %v1807, %v1808
        %v1810 = vrot.slane %v1808, 4
        %v1811 = vrot.slane %v1338, 5
        %v1812 = vsel %vm1194, %v1810, %v1811
        %v1813 = vrot.slane %v1811, 4
        %v1814 = vrot.slane %v1339, 5
        %v1815 = vsel %vm1194, %v1813, %v1814
        %v1816 = vrot.slane %v1814, 4
        %v1817 = vrot.slane %v1340, 5
        %v1818 = vsel %vm1194, %v1816, %v1817
        %v1819 = vrot.slane %v1817, 4
        %v1820 = vrot.slane %v1341, 5
        %v1821 = vsel %vm1194, %v1819, %v1820
        %v1822 = vrot.slane %v1820, 4
        %v1823 = vrot.slane %v1342, 5
        %v1824 = vsel %vm1194, %v1822, %v1823
        %v1825 = vrot.slane %v1823, 4
        %v1826 = vrot.slane %v1343, 5
        %v1827 = vsel %vm1194, %v1825, %v1826
        %v1828 = vrot.slane %v1826, 4
        %v1829 = vrot.slane %v1344, 5
        %v1830 = vsel %vm1194, %v1828, %v1829
        %1831 = vrot.lane.b32.xlu0 %v1761, 64
        %v1832 = vpop.permute.xlu0 %1831
        %1833 = vrot.lane.b32.xlu0 %v1764, 64
        %v1834 = vpop.permute.xlu0 %1833
        %1835 = vrot.lane.b32.xlu0 %v1767, 64
        %v1836 = vpop.permute.xlu0 %1835
        %1837 = vrot.lane.b32.xlu0 %v1770, 64
        %v1838 = vpop.permute.xlu0 %1837
        %1839 = vrot.lane.b32.xlu0 %v1773, 64
        %v1840 = vpop.permute.xlu0 %1839
        %1841 = vrot.lane.b32.xlu0 %v1776, 64
        %v1842 = vpop.permute.xlu0 %1841
        %1843 = vrot.lane.b32.xlu0 %v1779, 64
        %v1844 = vpop.permute.xlu0 %1843
        %1845 = vrot.lane.b32.xlu0 %v1782, 64
        %v1846 = vpop.permute.xlu0 %1845
        %1847 = vrot.lane.b32.xlu0 %v1785, 64
        %v1848 = vpop.permute.xlu0 %1847
        %1849 = vrot.lane.b32.xlu0 %v1788, 64
        %v1850 = vpop.permute.xlu0 %1849
        %1851 = vrot.lane.b32.xlu0 %v1791, 64
        %v1852 = vpop.permute.xlu0 %1851
        %1853 = vrot.lane.b32.xlu0 %v1794, 64
        %v1854 = vpop.permute.xlu0 %1853
        %1855 = vrot.lane.b32.xlu0 %v1797, 64
        %v1856 = vpop.permute.xlu0 %1855
        %1857 = vrot.lane.b32.xlu0 %v1800, 64
        %v1858 = vpop.permute.xlu0 %1857
        %1859 = vrot.lane.b32.xlu0 %v1803, 64
        %v1860 = vpop.permute.xlu0 %1859
        %1861 = vrot.lane.b32.xlu0 %v1806, 64
        %v1862 = vpop.permute.xlu0 %1861
        %1863 = vrot.lane.b32.xlu0 %v1809, 64
        %v1864 = vpop.permute.xlu0 %1863
        %1865 = vrot.lane.b32.xlu0 %v1812, 64
        %v1866 = vpop.permute.xlu0 %1865
        %1867 = vrot.lane.b32.xlu0 %v1815, 64
        %v1868 = vpop.permute.xlu0 %1867
        %1869 = vrot.lane.b32.xlu0 %v1818, 64
        %v1870 = vpop.permute.xlu0 %1869
        %1871 = vrot.lane.b32.xlu0 %v1821, 64
        %v1872 = vpop.permute.xlu0 %1871
        %1873 = vrot.lane.b32.xlu0 %v1824, 64
        %v1874 = vpop.permute.xlu0 %1873
        %1875 = vrot.lane.b32.xlu0 %v1827, 64
        %v1876 = vpop.permute.xlu0 %1875
        %1877 = vrot.lane.b32.xlu0 %v1830, 64
        %v1878 = vpop.permute.xlu0 %1877
        %1903 = vst.msk [vmem:[#allocation3 + $0x8] sm:$0xf] %vm1142, %v1832
        %1904 = vst.msk [vmem:[#allocation3 + $0x1c] sm:$0xf] %vm1142, %v1834
        %1905 = vst.msk [vmem:[#allocation3 + $0x30] sm:$0xf] %vm1142, %v1836
        %1906 = vst.msk [vmem:[#allocation3 + $0x44] sm:$0xf] %vm1142, %v1838
        %1907 = vst.msk [vmem:[#allocation3 + $0x58] sm:$0xf] %vm1142, %v1840
        %1908 = vst.msk [vmem:[#allocation3 + $0x6c] sm:$0xf] %vm1142, %v1842
        %1909 = vst.msk [vmem:[#allocation3 + $0x80] sm:$0xf] %vm1142, %v1844
        %1910 = vst.msk [vmem:[#allocation3 + $0x94] sm:$0xf] %vm1142, %v1846
        %1911 = vst.msk [vmem:[#allocation3 + $0xa8] sm:$0xf] %vm1142, %v1848
        %1912 = vst.msk [vmem:[#allocation3 + $0xbc] sm:$0xf] %vm1142, %v1850
        %1913 = vst.msk [vmem:[#allocation3 + $0xd0] sm:$0xf] %vm1142, %v1852
        %1914 = vst.msk [vmem:[#allocation3 + $0xe4] sm:$0xf] %vm1142, %v1854
        %1915 = vst.msk [vmem:[#allocation3 + $0xf8] sm:$0xf] %vm1142, %v1856
        %1916 = vst.msk [vmem:[#allocation3 + $0x10c] sm:$0xf] %vm1142, %v1858
        %1917 = vst.msk [vmem:[#allocation3 + $0x120] sm:$0xf] %vm1142, %v1860
        %1918 = vst.msk [vmem:[#allocation3 + $0x134] sm:$0xf] %vm1142, %v1862
        %1919 = vst.msk [vmem:[#allocation3 + $0x148] sm:$0xf] %vm1142, %v1864
        %1920 = vst.msk [vmem:[#allocation3 + $0x15c] sm:$0xf] %vm1142, %v1866
        %1921 = vst.msk [vmem:[#allocation3 + $0x170] sm:$0xf] %vm1142, %v1868
        %1922 = vst.msk [vmem:[#allocation3 + $0x184] sm:$0xf] %vm1142, %v1870
        %1923 = vst.msk [vmem:[#allocation3 + $0x198] sm:$0xf] %vm1142, %v1872
        %1924 = vst.msk [vmem:[#allocation3 + $0x1ac] sm:$0xf] %vm1142, %v1874
        %1925 = vst.msk [vmem:[#allocation3 + $0x1c0] sm:$0xf] %vm1142, %v1876
        %1926 = vst.msk [vmem:[#allocation3 + $0x1d4] sm:$0xf] %vm1142, %v1878
        %s1927 = sadd.s32 %s769, 2
        %s1928 = smul.u32 %s1927, 3
        %s1929 = smul.addr %s1928, 4
        %s1930 = scalar_lea.vmem [#allocation2], %s1929
        %v1931 = vld [vmem:[%s1930] sm:$0xf]
        %v1932 = vld [vmem:[%s1930 + $0x4] sm:$0xf]
        %v1933 = vld [vmem:[%s1930 + $0x8] sm:$0xf]
        %v1934 = vld [vmem:[%s1930 + $0xc] sm:$0xf]
        %v1935 = vld [vmem:[%s1930 + $0x10] sm:$0xf]
        %v1936 = vld [vmem:[%s1930 + $0x14] sm:$0xf]
        %v1937 = vld [vmem:[%s1930 + $0x18] sm:$0xf]
        %v1938 = vld [vmem:[%s1930 + $0x1c] sm:$0xf]
        %v1939 = vld [vmem:[%s1930 + $0x20] sm:$0xf]
        %v1940 = vld [vmem:[%s1930 + $0x24] sm:$0xf]
        %v1941 = vld [vmem:[%s1930 + $0x28] sm:$0xf]
        %v1942 = vld [vmem:[%s1930 + $0x2c] sm:$0xf]
        %v1943 = vld [vmem:[%s1930 + $0x30] sm:$0xf]
        %v1944 = vld [vmem:[%s1930 + $0x34] sm:$0xf]
        %v1945 = vld [vmem:[%s1930 + $0x38] sm:$0xf]
        %v1946 = vld [vmem:[%s1930 + $0x3c] sm:$0xf]
        %v1947 = vld [vmem:[%s1930 + $0x40] sm:$0xf]
        %v1948 = vld [vmem:[%s1930 + $0x44] sm:$0xf]
        %v1949 = vld [vmem:[%s1930 + $0x48] sm:$0xf]
        %v1950 = vld [vmem:[%s1930 + $0x4c] sm:$0xf]
        %v1951 = vld [vmem:[%s1930 + $0x50] sm:$0xf]
        %v1952 = vld [vmem:[%s1930 + $0x54] sm:$0xf]
        %v1953 = vld [vmem:[%s1930 + $0x58] sm:$0xf]
        %v1954 = vld [vmem:[%s1930 + $0x5c] sm:$0xf]
        %v1955 = vld [vmem:[%s1930 + $0x60] sm:$0xf]
        %1956 = vst.msk [vmem:[#allocation3 + $0xc] sm:$0xf] %vm798, %v1931
        %1957 = vst.msk [vmem:[#allocation3 + $0x20] sm:$0xf] %vm798, %v1932
        %1958 = vst.msk [vmem:[#allocation3 + $0x34] sm:$0xf] %vm798, %v1933
        %1959 = vst.msk [vmem:[#allocation3 + $0x48] sm:$0xf] %vm798, %v1934
        %1960 = vst.msk [vmem:[#allocation3 + $0x5c] sm:$0xf] %vm798, %v1935
        %1961 = vst.msk [vmem:[#allocation3 + $0x70] sm:$0xf] %vm798, %v1936
        %1962 = vst.msk [vmem:[#allocation3 + $0x84] sm:$0xf] %vm798, %v1937
        %1963 = vst.msk [vmem:[#allocation3 + $0x98] sm:$0xf] %vm798, %v1938
        %1964 = vst.msk [vmem:[#allocation3 + $0xac] sm:$0xf] %vm798, %v1939
        %1965 = vst.msk [vmem:[#allocation3 + $0xc0] sm:$0xf] %vm798, %v1940
        %1966 = vst.msk [vmem:[#allocation3 + $0xd4] sm:$0xf] %vm798, %v1941
        %1967 = vst.msk [vmem:[#allocation3 + $0xe8] sm:$0xf] %vm798, %v1942
        %1968 = vst.msk [vmem:[#allocation3 + $0xfc] sm:$0xf] %vm798, %v1943
        %1969 = vst.msk [vmem:[#allocation3 + $0x110] sm:$0xf] %vm798, %v1944
        %1970 = vst.msk [vmem:[#allocation3 + $0x124] sm:$0xf] %vm798, %v1945
        %1971 = vst.msk [vmem:[#allocation3 + $0x138] sm:$0xf] %vm798, %v1946
        %1972 = vst.msk [vmem:[#allocation3 + $0x14c] sm:$0xf] %vm798, %v1947
        %1973 = vst.msk [vmem:[#allocation3 + $0x160] sm:$0xf] %vm798, %v1948
        %1974 = vst.msk [vmem:[#allocation3 + $0x174] sm:$0xf] %vm798, %v1949
        %1975 = vst.msk [vmem:[#allocation3 + $0x188] sm:$0xf] %vm798, %v1950
        %1976 = vst.msk [vmem:[#allocation3 + $0x19c] sm:$0xf] %vm798, %v1951
        %1977 = vst.msk [vmem:[#allocation3 + $0x1b0] sm:$0xf] %vm798, %v1952
        %1978 = vst.msk [vmem:[#allocation3 + $0x1c4] sm:$0xf] %vm798, %v1953
        %1979 = vst.msk [vmem:[#allocation3 + $0x1d8] sm:$0xf] %vm798, %v1954
        %v1981 = vshrl.u32 %v1931, 16
        %v1983 = vrot.slane %v1981, 4
        %v1984 = vshll.u32 %v1931, 16
        %v1986 = vrot.slane %v1984, 5
        %v1987 = vor.u32 %v1983, %v1986
        %v1988 = vrot.slane %v1987, 4
        %v1990 = vshll.u32 %v1932, 16
        %v1992 = vrot.slane %v1990, 5
        %v1993 = vsel %vm825, %v1988, %v1992
        %v1994 = vshrl.u32 %v1932, 16
        %v1996 = vrot.slane %v1994, 4
        %v1997 = vor.u32 %v1996, %v1992
        %v1998 = vrot.slane %v1997, 4
        %v2000 = vshll.u32 %v1933, 16
        %v2002 = vrot.slane %v2000, 5
        %v2003 = vsel %vm825, %v1998, %v2002
        %v2004 = vshrl.u32 %v1933, 16
        %v2006 = vrot.slane %v2004, 4
        %v2007 = vor.u32 %v2006, %v2002
        %v2008 = vrot.slane %v2007, 4
        %v2010 = vshll.u32 %v1934, 16
        %v2012 = vrot.slane %v2010, 5
        %v2013 = vsel %vm825, %v2008, %v2012
        %v2014 = vshrl.u32 %v1934, 16
        %v2016 = vrot.slane %v2014, 4
        %v2017 = vor.u32 %v2016, %v2012
        %v2018 = vrot.slane %v2017, 4
        %v2020 = vshll.u32 %v1935, 16
        %v2022 = vrot.slane %v2020, 5
        %v2023 = vsel %vm825, %v2018, %v2022
        %v2024 = vshrl.u32 %v1935, 16
        %v2026 = vrot.slane %v2024, 4
        %v2027 = vor.u32 %v2026, %v2022
        %v2028 = vrot.slane %v2027, 4
        %v2030 = vshll.u32 %v1936, 16
        %v2032 = vrot.slane %v2030, 5
        %v2033 = vsel %vm825, %v2028, %v2032
        %v2034 = vshrl.u32 %v1936, 16
        %v2036 = vrot.slane %v2034, 4
        %v2037 = vor.u32 %v2036, %v2032
        %v2038 = vrot.slane %v2037, 4
        %v2040 = vshll.u32 %v1937, 16
        %v2042 = vrot.slane %v2040, 5
        %v2043 = vsel %vm825, %v2038, %v2042
        %v2044 = vshrl.u32 %v1937, 16
        %v2046 = vrot.slane %v2044, 4
        %v2047 = vor.u32 %v2046, %v2042
        %v2048 = vrot.slane %v2047, 4
        %v2050 = vshll.u32 %v1938, 16
        %v2052 = vrot.slane %v2050, 5
        %v2053 = vsel %vm825, %v2048, %v2052
        %v2054 = vshrl.u32 %v1938, 16
        %v2056 = vrot.slane %v2054, 4
        %v2057 = vor.u32 %v2056, %v2052
        %v2058 = vrot.slane %v2057, 4
        %v2060 = vshll.u32 %v1939, 16
        %v2062 = vrot.slane %v2060, 5
        %v2063 = vsel %vm825, %v2058, %v2062
        %v2064 = vshrl.u32 %v1939, 16
        %v2066 = vrot.slane %v2064, 4
        %v2067 = vor.u32 %v2066, %v2062
        %v2068 = vrot.slane %v2067, 4
        %v2070 = vshll.u32 %v1940, 16
        %v2072 = vrot.slane %v2070, 5
        %v2073 = vsel %vm825, %v2068, %v2072
        %v2074 = vshrl.u32 %v1940, 16
        %v2076 = vrot.slane %v2074, 4
        %v2077 = vor.u32 %v2076, %v2072
        %v2078 = vrot.slane %v2077, 4
        %v2080 = vshll.u32 %v1941, 16
        %v2082 = vrot.slane %v2080, 5
        %v2083 = vsel %vm825, %v2078, %v2082
        %v2084 = vshrl.u32 %v1941, 16
        %v2086 = vrot.slane %v2084, 4
        %v2087 = vor.u32 %v2086, %v2082
        %v2088 = vrot.slane %v2087, 4
        %v2090 = vshll.u32 %v1942, 16
        %v2092 = vrot.slane %v2090, 5
        %v2093 = vsel %vm825, %v2088, %v2092
        %v2094 = vshrl.u32 %v1942, 16
        %v2096 = vrot.slane %v2094, 4
        %v2097 = vor.u32 %v2096, %v2092
        %v2098 = vrot.slane %v2097, 4
        %v2100 = vshll.u32 %v1943, 16
        %v2102 = vrot.slane %v2100, 5
        %v2103 = vsel %vm825, %v2098, %v2102
        %v2104 = vshrl.u32 %v1943, 16
        %v2106 = vrot.slane %v2104, 4
        %v2107 = vor.u32 %v2106, %v2102
        %v2108 = vrot.slane %v2107, 4
        %v2110 = vshll.u32 %v1944, 16
        %v2112 = vrot.slane %v2110, 5
        %v2113 = vsel %vm825, %v2108, %v2112
        %v2114 = vshrl.u32 %v1944, 16
        %v2116 = vrot.slane %v2114, 4
        %v2117 = vor.u32 %v2116, %v2112
        %v2118 = vrot.slane %v2117, 4
        %v2120 = vshll.u32 %v1945, 16
        %v2122 = vrot.slane %v2120, 5
        %v2123 = vsel %vm825, %v2118, %v2122
        %v2124 = vshrl.u32 %v1945, 16
        %v2126 = vrot.slane %v2124, 4
        %v2127 = vor.u32 %v2126, %v2122
        %v2128 = vrot.slane %v2127, 4
        %v2130 = vshll.u32 %v1946, 16
        %v2132 = vrot.slane %v2130, 5
        %v2133 = vsel %vm825, %v2128, %v2132
        %v2134 = vshrl.u32 %v1946, 16
        %v2136 = vrot.slane %v2134, 4
        %v2137 = vor.u32 %v2136, %v2132
        %v2138 = vrot.slane %v2137, 4
        %v2140 = vshll.u32 %v1947, 16
        %v2142 = vrot.slane %v2140, 5
        %v2143 = vsel %vm825, %v2138, %v2142
        %v2144 = vshrl.u32 %v1947, 16
        %v2146 = vrot.slane %v2144, 4
        %v2147 = vor.u32 %v2146, %v2142
        %v2148 = vrot.slane %v2147, 4
        %v2150 = vshll.u32 %v1948, 16
        %v2152 = vrot.slane %v2150, 5
        %v2153 = vsel %vm825, %v2148, %v2152
        %v2154 = vshrl.u32 %v1948, 16
        %v2156 = vrot.slane %v2154, 4
        %v2157 = vor.u32 %v2156, %v2152
        %v2158 = vrot.slane %v2157, 4
        %v2160 = vshll.u32 %v1949, 16
        %v2162 = vrot.slane %v2160, 5
        %v2163 = vsel %vm825, %v2158, %v2162
        %v2164 = vshrl.u32 %v1949, 16
        %v2166 = vrot.slane %v2164, 4
        %v2167 = vor.u32 %v2166, %v2162
        %v2168 = vrot.slane %v2167, 4
        %v2170 = vshll.u32 %v1950, 16
        %v2172 = vrot.slane %v2170, 5
        %v2173 = vsel %vm825, %v2168, %v2172
        %v2174 = vshrl.u32 %v1950, 16
        %v2176 = vrot.slane %v2174, 4
        %v2177 = vor.u32 %v2176, %v2172
        %v2178 = vrot.slane %v2177, 4
        %v2180 = vshll.u32 %v1951, 16
        %v2182 = vrot.slane %v2180, 5
        %v2183 = vsel %vm825, %v2178, %v2182
        %v2184 = vshrl.u32 %v1951, 16
        %v2186 = vrot.slane %v2184, 4
        %v2187 = vor.u32 %v2186, %v2182
        %v2188 = vrot.slane %v2187, 4
        %v2190 = vshll.u32 %v1952, 16
        %v2192 = vrot.slane %v2190, 5
        %v2193 = vsel %vm825, %v2188, %v2192
        %v2194 = vshrl.u32 %v1952, 16
        %v2196 = vrot.slane %v2194, 4
        %v2197 = vor.u32 %v2196, %v2192
        %v2198 = vrot.slane %v2197, 4
        %v2200 = vshll.u32 %v1953, 16
        %v2202 = vrot.slane %v2200, 5
        %v2203 = vsel %vm825, %v2198, %v2202
        %v2204 = vshrl.u32 %v1953, 16
        %v2206 = vrot.slane %v2204, 4
        %v2207 = vor.u32 %v2206, %v2202
        %v2208 = vrot.slane %v2207, 4
        %v2210 = vshll.u32 %v1954, 16
        %v2212 = vrot.slane %v2210, 5
        %v2213 = vsel %vm825, %v2208, %v2212
        %v2214 = vshrl.u32 %v1954, 16
        %v2216 = vrot.slane %v2214, 4
        %v2217 = vor.u32 %v2216, %v2212
        %v2218 = vrot.slane %v2217, 4
        %v2220 = vshll.u32 %v1955, 16
        %v2222 = vrot.slane %v2220, 5
        %v2223 = vsel %vm825, %v2218, %v2222
        %2224 = vrot.lane.b32.xlu0 %v1993, 64
        %v2225 = vpop.permute.xlu0 %2224
        %2226 = vrot.lane.b32.xlu0 %v2003, 64
        %v2227 = vpop.permute.xlu0 %2226
        %2228 = vrot.lane.b32.xlu0 %v2013, 64
        %v2229 = vpop.permute.xlu0 %2228
        %2230 = vrot.lane.b32.xlu0 %v2023, 64
        %v2231 = vpop.permute.xlu0 %2230
        %2232 = vrot.lane.b32.xlu0 %v2033, 64
        %v2233 = vpop.permute.xlu0 %2232
        %2234 = vrot.lane.b32.xlu0 %v2043, 64
        %v2235 = vpop.permute.xlu0 %2234
        %2236 = vrot.lane.b32.xlu0 %v2053, 64
        %v2237 = vpop.permute.xlu0 %2236
        %2238 = vrot.lane.b32.xlu0 %v2063, 64
        %v2239 = vpop.permute.xlu0 %2238
        %2240 = vrot.lane.b32.xlu0 %v2073, 64
        %v2241 = vpop.permute.xlu0 %2240
        %2242 = vrot.lane.b32.xlu0 %v2083, 64
        %v2243 = vpop.permute.xlu0 %2242
        %2244 = vrot.lane.b32.xlu0 %v2093, 64
        %v2245 = vpop.permute.xlu0 %2244
        %2246 = vrot.lane.b32.xlu0 %v2103, 64
        %v2247 = vpop.permute.xlu0 %2246
        %2248 = vrot.lane.b32.xlu0 %v2113, 64
        %v2249 = vpop.permute.xlu0 %2248
        %2250 = vrot.lane.b32.xlu0 %v2123, 64
        %v2251 = vpop.permute.xlu0 %2250
        %2252 = vrot.lane.b32.xlu0 %v2133, 64
        %v2253 = vpop.permute.xlu0 %2252
        %2254 = vrot.lane.b32.xlu0 %v2143, 64
        %v2255 = vpop.permute.xlu0 %2254
        %2256 = vrot.lane.b32.xlu0 %v2153, 64
        %v2257 = vpop.permute.xlu0 %2256
        %2258 = vrot.lane.b32.xlu0 %v2163, 64
        %v2259 = vpop.permute.xlu0 %2258
        %2260 = vrot.lane.b32.xlu0 %v2173, 64
        %v2261 = vpop.permute.xlu0 %2260
        %2262 = vrot.lane.b32.xlu0 %v2183, 64
        %v2263 = vpop.permute.xlu0 %2262
        %2264 = vrot.lane.b32.xlu0 %v2193, 64
        %v2265 = vpop.permute.xlu0 %2264
        %2266 = vrot.lane.b32.xlu0 %v2203, 64
        %v2267 = vpop.permute.xlu0 %2266
        %2268 = vrot.lane.b32.xlu0 %v2213, 64
        %v2269 = vpop.permute.xlu0 %2268
        %2270 = vrot.lane.b32.xlu0 %v2223, 64
        %v2271 = vpop.permute.xlu0 %2270
        %2296 = vst.msk [vmem:[#allocation3 + $0xc] sm:$0xf] %vm1142, %v2225
        %2297 = vst.msk [vmem:[#allocation3 + $0x20] sm:$0xf] %vm1142, %v2227
        %2298 = vst.msk [vmem:[#allocation3 + $0x34] sm:$0xf] %vm1142, %v2229
        %2299 = vst.msk [vmem:[#allocation3 + $0x48] sm:$0xf] %vm1142, %v2231
        %2300 = vst.msk [vmem:[#allocation3 + $0x5c] sm:$0xf] %vm1142, %v2233
        %2301 = vst.msk [vmem:[#allocation3 + $0x70] sm:$0xf] %vm1142, %v2235
        %2302 = vst.msk [vmem:[#allocation3 + $0x84] sm:$0xf] %vm1142, %v2237
        %2303 = vst.msk [vmem:[#allocation3 + $0x98] sm:$0xf] %vm1142, %v2239
        %2304 = vst.msk [vmem:[#allocation3 + $0xac] sm:$0xf] %vm1142, %v2241
        %2305 = vst.msk [vmem:[#allocation3 + $0xc0] sm:$0xf] %vm1142, %v2243
        %2306 = vst.msk [vmem:[#allocation3 + $0xd4] sm:$0xf] %vm1142, %v2245
        %2307 = vst.msk [vmem:[#allocation3 + $0xe8] sm:$0xf] %vm1142, %v2247
        %2308 = vst.msk [vmem:[#allocation3 + $0xfc] sm:$0xf] %vm1142, %v2249
        %2309 = vst.msk [vmem:[#allocation3 + $0x110] sm:$0xf] %vm1142, %v2251
        %2310 = vst.msk [vmem:[#allocation3 + $0x124] sm:$0xf] %vm1142, %v2253
        %2311 = vst.msk [vmem:[#allocation3 + $0x138] sm:$0xf] %vm1142, %v2255
        %2312 = vst.msk [vmem:[#allocation3 + $0x14c] sm:$0xf] %vm1142, %v2257
        %2313 = vst.msk [vmem:[#allocation3 + $0x160] sm:$0xf] %vm1142, %v2259
        %2314 = vst.msk [vmem:[#allocation3 + $0x174] sm:$0xf] %vm1142, %v2261
        %2315 = vst.msk [vmem:[#allocation3 + $0x188] sm:$0xf] %vm1142, %v2263
        %2316 = vst.msk [vmem:[#allocation3 + $0x19c] sm:$0xf] %vm1142, %v2265
        %2317 = vst.msk [vmem:[#allocation3 + $0x1b0] sm:$0xf] %vm1142, %v2267
        %2318 = vst.msk [vmem:[#allocation3 + $0x1c4] sm:$0xf] %vm1142, %v2269
        %2319 = vst.msk [vmem:[#allocation3 + $0x1d8] sm:$0xf] %vm1142, %v2271
        %v2345 = vrot.slane %v1931, 5
        %v2346 = vrot.slane %v2345, 4
        %v2347 = vrot.slane %v1932, 5
        %v2348 = vsel %vm1194, %v2346, %v2347
        %v2349 = vrot.slane %v2347, 4
        %v2350 = vrot.slane %v1933, 5
        %v2351 = vsel %vm1194, %v2349, %v2350
        %v2352 = vrot.slane %v2350, 4
        %v2353 = vrot.slane %v1934, 5
        %v2354 = vsel %vm1194, %v2352, %v2353
        %v2355 = vrot.slane %v2353, 4
        %v2356 = vrot.slane %v1935, 5
        %v2357 = vsel %vm1194, %v2355, %v2356
        %v2358 = vrot.slane %v2356, 4
        %v2359 = vrot.slane %v1936, 5
        %v2360 = vsel %vm1194, %v2358, %v2359
        %v2361 = vrot.slane %v2359, 4
        %v2362 = vrot.slane %v1937, 5
        %v2363 = vsel %vm1194, %v2361, %v2362
        %v2364 = vrot.slane %v2362, 4
        %v2365 = vrot.slane %v1938, 5
        %v2366 = vsel %vm1194, %v2364, %v2365
        %v2367 = vrot.slane %v2365, 4
        %v2368 = vrot.slane %v1939, 5
        %v2369 = vsel %vm1194, %v2367, %v2368
        %v2370 = vrot.slane %v2368, 4
        %v2371 = vrot.slane %v1940, 5
        %v2372 = vsel %vm1194, %v2370, %v2371
        %v2373 = vrot.slane %v2371, 4
        %v2374 = vrot.slane %v1941, 5
        %v2375 = vsel %vm1194, %v2373, %v2374
        %v2376 = vrot.slane %v2374, 4
        %v2377 = vrot.slane %v1942, 5
        %v2378 = vsel %vm1194, %v2376, %v2377
        %v2379 = vrot.slane %v2377, 4
        %v2380 = vrot.slane %v1943, 5
        %v2381 = vsel %vm1194, %v2379, %v2380
        %v2382 = vrot.slane %v2380, 4
        %v2383 = vrot.slane %v1944, 5
        %v2384 = vsel %vm1194, %v2382, %v2383
        %v2385 = vrot.slane %v2383, 4
        %v2386 = vrot.slane %v1945, 5
        %v2387 = vsel %vm1194, %v2385, %v2386
        %v2388 = vrot.slane %v2386, 4
        %v2389 = vrot.slane %v1946, 5
        %v2390 = vsel %vm1194, %v2388, %v2389
        %v2391 = vrot.slane %v2389, 4
        %v2392 = vrot.slane %v1947, 5
        %v2393 = vsel %vm1194, %v2391, %v2392
        %v2394 = vrot.slane %v2392, 4
        %v2395 = vrot.slane %v1948, 5
        %v2396 = vsel %vm1194, %v2394, %v2395
        %v2397 = vrot.slane %v2395, 4
        %v2398 = vrot.slane %v1949, 5
        %v2399 = vsel %vm1194, %v2397, %v2398
        %v2400 = vrot.slane %v2398, 4
        %v2401 = vrot.slane %v1950, 5
        %v2402 = vsel %vm1194, %v2400, %v2401
        %v2403 = vrot.slane %v2401, 4
        %v2404 = vrot.slane %v1951, 5
        %v2405 = vsel %vm1194, %v2403, %v2404
        %v2406 = vrot.slane %v2404, 4
        %v2407 = vrot.slane %v1952, 5
        %v2408 = vsel %vm1194, %v2406, %v2407
        %v2409 = vrot.slane %v2407, 4
        %v2410 = vrot.slane %v1953, 5
        %v2411 = vsel %vm1194, %v2409, %v2410
        %v2412 = vrot.slane %v2410, 4
        %v2413 = vrot.slane %v1954, 5
        %v2414 = vsel %vm1194, %v2412, %v2413
        %v2415 = vrot.slane %v2413, 4
        %v2416 = vrot.slane %v1955, 5
        %v2417 = vsel %vm1194, %v2415, %v2416
        %2442 = vst.msk [vmem:[#allocation3 + $0x10] sm:$0xf] %vm798, %v2348
        %2443 = vst.msk [vmem:[#allocation3 + $0x24] sm:$0xf] %vm798, %v2351
        %2444 = vst.msk [vmem:[#allocation3 + $0x38] sm:$0xf] %vm798, %v2354
        %2445 = vst.msk [vmem:[#allocation3 + $0x4c] sm:$0xf] %vm798, %v2357
        %2446 = vst.msk [vmem:[#allocation3 + $0x60] sm:$0xf] %vm798, %v2360
        %2447 = vst.msk [vmem:[#allocation3 + $0x74] sm:$0xf] %vm798, %v2363
        %2448 = vst.msk [vmem:[#allocation3 + $0x88] sm:$0xf] %vm798, %v2366
        %2449 = vst.msk [vmem:[#allocation3 + $0x9c] sm:$0xf] %vm798, %v2369
        %2450 = vst.msk [vmem:[#allocation3 + $0xb0] sm:$0xf] %vm798, %v2372
        %2451 = vst.msk [vmem:[#allocation3 + $0xc4] sm:$0xf] %vm798, %v2375
        %2452 = vst.msk [vmem:[#allocation3 + $0xd8] sm:$0xf] %vm798, %v2378
        %2453 = vst.msk [vmem:[#allocation3 + $0xec] sm:$0xf] %vm798, %v2381
        %2454 = vst.msk [vmem:[#allocation3 + $0x100] sm:$0xf] %vm798, %v2384
        %2455 = vst.msk [vmem:[#allocation3 + $0x114] sm:$0xf] %vm798, %v2387
        %2456 = vst.msk [vmem:[#allocation3 + $0x128] sm:$0xf] %vm798, %v2390
        %2457 = vst.msk [vmem:[#allocation3 + $0x13c] sm:$0xf] %vm798, %v2393
        %2458 = vst.msk [vmem:[#allocation3 + $0x150] sm:$0xf] %vm798, %v2396
        %2459 = vst.msk [vmem:[#allocation3 + $0x164] sm:$0xf] %vm798, %v2399
        %2460 = vst.msk [vmem:[#allocation3 + $0x178] sm:$0xf] %vm798, %v2402
        %2461 = vst.msk [vmem:[#allocation3 + $0x18c] sm:$0xf] %vm798, %v2405
        %2462 = vst.msk [vmem:[#allocation3 + $0x1a0] sm:$0xf] %vm798, %v2408
        %2463 = vst.msk [vmem:[#allocation3 + $0x1b4] sm:$0xf] %vm798, %v2411
        %2464 = vst.msk [vmem:[#allocation3 + $0x1c8] sm:$0xf] %vm798, %v2414
        %2465 = vst.msk [vmem:[#allocation3 + $0x1dc] sm:$0xf] %vm798, %v2417
        %v2466 = vld [vmem:[#allocation3] sm:$0xff]
        %v2467 = vld [vmem:[#allocation3 + $0x8] sm:$0xff]
        %v2468 = vld [vmem:[#allocation3 + $0x10] sm:$0xf]
        %v2469 = vld [vmem:[#allocation3 + $0x14] sm:$0xff]
        %v2470 = vld [vmem:[#allocation3 + $0x1c] sm:$0xff]
        %v2471 = vld [vmem:[#allocation3 + $0x24] sm:$0xf]
        %v2472 = vld [vmem:[#allocation3 + $0x28] sm:$0xff]
        %v2473 = vld [vmem:[#allocation3 + $0x30] sm:$0xff]
        %v2474 = vld [vmem:[#allocation3 + $0x38] sm:$0xf]
        %v2475 = vld [vmem:[#allocation3 + $0x3c] sm:$0xff]
        %v2476 = vld [vmem:[#allocation3 + $0x44] sm:$0xff]
        %v2477 = vld [vmem:[#allocation3 + $0x4c] sm:$0xf]
        %v2478 = vld [vmem:[#allocation3 + $0x50] sm:$0xff]
        %v2479 = vld [vmem:[#allocation3 + $0x58] sm:$0xff]
        %v2480 = vld [vmem:[#allocation3 + $0x60] sm:$0xf]
        %v2481 = vld [vmem:[#allocation3 + $0x64] sm:$0xff]
        %v2482 = vld [vmem:[#allocation3 + $0x6c] sm:$0xff]
        %v2483 = vld [vmem:[#allocation3 + $0x74] sm:$0xf]
        %v2484 = vld [vmem:[#allocation3 + $0x78] sm:$0xff]
        %v2485 = vld [vmem:[#allocation3 + $0x80] sm:$0xff]
        %v2486 = vld [vmem:[#allocation3 + $0x88] sm:$0xf]
        %v2487 = vld [vmem:[#allocation3 + $0x8c] sm:$0xff]
        %v2488 = vld [vmem:[#allocation3 + $0x94] sm:$0xff]
        %v2489 = vld [vmem:[#allocation3 + $0x9c] sm:$0xf]
        %v2490 = vld [vmem:[#allocation3 + $0xa0] sm:$0xff]
        %v2491 = vld [vmem:[#allocation3 + $0xa8] sm:$0xff]
        %v2492 = vld [vmem:[#allocation3 + $0xb0] sm:$0xf]
        %v2493 = vld [vmem:[#allocation3 + $0xb4] sm:$0xff]
        %v2494 = vld [vmem:[#allocation3 + $0xbc] sm:$0xff]
        %v2495 = vld [vmem:[#allocation3 + $0xc4] sm:$0xf]
        %v2496 = vld [vmem:[#allocation3 + $0xc8] sm:$0xff]
        %v2497 = vld [vmem:[#allocation3 + $0xd0] sm:$0xff]
        %v2498 = vld [vmem:[#allocation3 + $0xd8] sm:$0xf]
        %v2499 = vld [vmem:[#allocation3 + $0xdc] sm:$0xff]
        %v2500 = vld [vmem:[#allocation3 + $0xe4] sm:$0xff]
        %v2501 = vld [vmem:[#allocation3 + $0xec] sm:$0xf]
        %v2502 = vld [vmem:[#allocation3 + $0xf0] sm:$0xff]
        %v2503 = vld [vmem:[#allocation3 + $0xf8] sm:$0xff]
        %v2504 = vld [vmem:[#allocation3 + $0x100] sm:$0xf]
        %v2505 = vld [vmem:[#allocation3 + $0x104] sm:$0xff]
        %v2506 = vld [vmem:[#allocation3 + $0x10c] sm:$0xff]
        %v2507 = vld [vmem:[#allocation3 + $0x114] sm:$0xf]
        %v2508 = vld [vmem:[#allocation3 + $0x118] sm:$0xff]
        %v2509 = vld [vmem:[#allocation3 + $0x120] sm:$0xff]
        %v2510 = vld [vmem:[#allocation3 + $0x128] sm:$0xf]
        %v2511 = vld [vmem:[#allocation3 + $0x12c] sm:$0xff]
        %v2512 = vld [vmem:[#allocation3 + $0x134] sm:$0xff]
        %v2513 = vld [vmem:[#allocation3 + $0x13c] sm:$0xf]
        %v2514 = vld [vmem:[#allocation3 + $0x140] sm:$0xff]
        %v2515 = vld [vmem:[#allocation3 + $0x148] sm:$0xff]
        %v2516 = vld [vmem:[#allocation3 + $0x150] sm:$0xf]
        %v2517 = vld [vmem:[#allocation3 + $0x154] sm:$0xff]
        %v2518 = vld [vmem:[#allocation3 + $0x15c] sm:$0xff]
        %v2519 = vld [vmem:[#allocation3 + $0x164] sm:$0xf]
        %v2520 = vld [vmem:[#allocation3 + $0x168] sm:$0xff]
        %v2521 = vld [vmem:[#allocation3 + $0x170] sm:$0xff]
        %v2522 = vld [vmem:[#allocation3 + $0x178] sm:$0xf]
        %v2523 = vld [vmem:[#allocation3 + $0x17c] sm:$0xff]
        %v2524 = vld [vmem:[#allocation3 + $0x184] sm:$0xff]
        %v2525 = vld [vmem:[#allocation3 + $0x18c] sm:$0xf]
        %v2526 = vld [vmem:[#allocation3 + $0x190] sm:$0xff]
        %v2527 = vld [vmem:[#allocation3 + $0x198] sm:$0xff]
        %v2528 = vld [vmem:[#allocation3 + $0x1a0] sm:$0xf]
        %v2529 = vld [vmem:[#allocation3 + $0x1a4] sm:$0xff]
        %v2530 = vld [vmem:[#allocation3 + $0x1ac] sm:$0xff]
        %v2531 = vld [vmem:[#allocation3 + $0x1b4] sm:$0xf]
        %v2532 = vld [vmem:[#allocation3 + $0x1b8] sm:$0xff]
        %v2533 = vld [vmem:[#allocation3 + $0x1c0] sm:$0xff]
        %v2534 = vld [vmem:[#allocation3 + $0x1c8] sm:$0xf]
        %v2535 = vld [vmem:[#allocation3 + $0x1cc] sm:$0xff]
        %v2536 = vld [vmem:[#allocation3 + $0x1d4] sm:$0xff]
        %v2537 = vld [vmem:[#allocation3 + $0x1dc] sm:$0xf]
        %v2538 = vld [vmem:[%s1] sm:$0xf]
        %v2539 = vld [vmem:[%s1 + $0x4] sm:$0xf]
        %v2540 = vld [vmem:[%s1 + $0x8] sm:$0xf]
        %v2541 = vld [vmem:[%s1 + $0xc] sm:$0xf]
        %v2542 = vld [vmem:[%s1 + $0x10] sm:$0xf]
        %v2543 = vld [vmem:[%s1 + $0x14] sm:$0xf]
        %v2544 = vld [vmem:[%s1 + $0x18] sm:$0xf]
        %v2545 = vld [vmem:[%s1 + $0x1c] sm:$0xf]
        %v2546 = vld [vmem:[%s1 + $0x20] sm:$0xf]
        %v2547 = vld [vmem:[%s1 + $0x24] sm:$0xf]
        %v2548 = vld [vmem:[%s1 + $0x28] sm:$0xf]
        %v2549 = vld [vmem:[%s1 + $0x2c] sm:$0xf]
        %v2550 = vld [vmem:[%s1 + $0x30] sm:$0xf]
        %v2551 = vld [vmem:[%s1 + $0x34] sm:$0xf]
        %v2552 = vld [vmem:[%s1 + $0x38] sm:$0xf]
        %v2553 = vld [vmem:[%s1 + $0x3c] sm:$0xf]
        %v2554 = vld [vmem:[%s1 + $0x40] sm:$0xf]
        %v2555 = vld [vmem:[%s1 + $0x44] sm:$0xf]
        %v2556 = vld [vmem:[%s1 + $0x48] sm:$0xf]
        %v2557 = vld [vmem:[%s1 + $0x4c] sm:$0xf]
        %v2558 = vld [vmem:[%s1 + $0x50] sm:$0xf]
        %v2559 = vld [vmem:[%s1 + $0x54] sm:$0xf]
        %v2560 = vld [vmem:[%s1 + $0x58] sm:$0xf]
        %v2561 = vld [vmem:[%s1 + $0x5c] sm:$0xf]
        %v2562 = vld [vmem:[%s1 + $0x60] sm:$0xf]
        %v2563 = vld [vmem:[%s1 + $0x64] sm:$0xf]
        %v2564 = vld [vmem:[%s1 + $0x68] sm:$0xf]
        %v2565 = vld [vmem:[%s1 + $0x6c] sm:$0xf]
        %v2566 = vld [vmem:[%s1 + $0x70] sm:$0xf]
        %v2567 = vld [vmem:[%s1 + $0x74] sm:$0xf]
        %v2568 = vld [vmem:[%s1 + $0x78] sm:$0xf]
        %v2569 = vld [vmem:[%s1 + $0x7c] sm:$0xf]
        %v2570 = vld [vmem:[%s1 + $0x80] sm:$0xf]
        %v2571 = vld [vmem:[%s1 + $0x84] sm:$0xf]
        %v2572 = vld [vmem:[%s1 + $0x88] sm:$0xf]
        %v2573 = vld [vmem:[%s1 + $0x8c] sm:$0xf]
        %v2574 = vld [vmem:[%s1 + $0x90] sm:$0xf]
        %v2575 = vld [vmem:[%s1 + $0x94] sm:$0xf]
        %v2576 = vld [vmem:[%s1 + $0x98] sm:$0xf]
        %v2577 = vld [vmem:[%s1 + $0x9c] sm:$0xf]
        %v2578 = vld [vmem:[%s1 + $0xa0] sm:$0xf]
        %v2579 = vld [vmem:[%s1 + $0xa4] sm:$0xf]
        %v2580 = vld [vmem:[%s1 + $0xa8] sm:$0xf]
        %v2581 = vld [vmem:[%s1 + $0xac] sm:$0xf]
        %v2582 = vld [vmem:[%s1 + $0xb0] sm:$0xf]
        %v2583 = vld [vmem:[%s1 + $0xb4] sm:$0xf]
        %v2584 = vld [vmem:[%s1 + $0xb8] sm:$0xf]
        %v2585 = vld [vmem:[%s1 + $0xbc] sm:$0xf]
        %v2586 = vld [vmem:[%s1 + $0xc0] sm:$0xf]
        %v2587 = vld [vmem:[%s1 + $0xc4] sm:$0xf]
        %v2588 = vld [vmem:[%s1 + $0xc8] sm:$0xf]
        %v2589 = vld [vmem:[%s1 + $0xcc] sm:$0xf]
        %v2590 = vld [vmem:[%s1 + $0xd0] sm:$0xf]
        %v2591 = vld [vmem:[%s1 + $0xd4] sm:$0xf]
        %v2592 = vld [vmem:[%s1 + $0xd8] sm:$0xf]
        %v2593 = vld [vmem:[%s1 + $0xdc] sm:$0xf]
        %v2594 = vld [vmem:[%s1 + $0xe0] sm:$0xf]
        %v2595 = vld [vmem:[%s1 + $0xe4] sm:$0xf]
        %v2596 = vld [vmem:[%s1 + $0xe8] sm:$0xf]
        %v2597 = vld [vmem:[%s1 + $0xec] sm:$0xf]
        %v2598 = vld [vmem:[%s1 + $0xf0] sm:$0xf]
        %v2599 = vld [vmem:[%s1 + $0xf4] sm:$0xf]
        %v2600 = vld [vmem:[%s1 + $0xf8] sm:$0xf]
        %v2601 = vld [vmem:[%s1 + $0xfc] sm:$0xf]
        %v2602 = vld [vmem:[%s1 + $0x100] sm:$0xf]
        %v2603 = vld [vmem:[%s1 + $0x104] sm:$0xf]
        %v2604 = vld [vmem:[%s1 + $0x108] sm:$0xf]
        %v2605 = vld [vmem:[%s1 + $0x10c] sm:$0xf]
        %v2606 = vld [vmem:[%s1 + $0x110] sm:$0xf]
        %v2607 = vld [vmem:[%s1 + $0x114] sm:$0xf]
        %v2608 = vld [vmem:[%s1 + $0x118] sm:$0xf]
        %v2609 = vld [vmem:[%s1 + $0x11c] sm:$0xf]
        %v2682 = vunpack.c.l.b16 %v2466
        %v2683 = vunpack.c.h.b16 %v2466
        %v2684 = vunpack.c.l.b16 %v2467
        %v2685 = vunpack.c.h.b16 %v2467
        %v2686 = vunpack.c.l.b16 %v2468
        %v2687 = vunpack.c.l.b16 %v2469
        %v2688 = vunpack.c.h.b16 %v2469
        %v2689 = vunpack.c.l.b16 %v2470
        %v2690 = vunpack.c.h.b16 %v2470
        %v2691 = vunpack.c.l.b16 %v2471
        %v2692 = vunpack.c.l.b16 %v2472
        %v2693 = vunpack.c.h.b16 %v2472
        %v2694 = vunpack.c.l.b16 %v2473
        %v2695 = vunpack.c.h.b16 %v2473
        %v2696 = vunpack.c.l.b16 %v2474
        %v2697 = vunpack.c.l.b16 %v2475
        %v2698 = vunpack.c.h.b16 %v2475
        %v2699 = vunpack.c.l.b16 %v2476
        %v2700 = vunpack.c.h.b16 %v2476
        %v2701 = vunpack.c.l.b16 %v2477
        %v2702 = vunpack.c.l.b16 %v2478
        %v2703 = vunpack.c.h.b16 %v2478
        %v2704 = vunpack.c.l.b16 %v2479
        %v2705 = vunpack.c.h.b16 %v2479
        %v2706 = vunpack.c.l.b16 %v2480
        %v2707 = vunpack.c.l.b16 %v2481
        %v2708 = vunpack.c.h.b16 %v2481
        %v2709 = vunpack.c.l.b16 %v2482
        %v2710 = vunpack.c.h.b16 %v2482
        %v2711 = vunpack.c.l.b16 %v2483
        %v2712 = vunpack.c.l.b16 %v2484
        %v2713 = vunpack.c.h.b16 %v2484
        %v2714 = vunpack.c.l.b16 %v2485
        %v2715 = vunpack.c.h.b16 %v2485
        %v2716 = vunpack.c.l.b16 %v2486
        %v2717 = vunpack.c.l.b16 %v2487
        %v2718 = vunpack.c.h.b16 %v2487
        %v2719 = vunpack.c.l.b16 %v2488
        %v2720 = vunpack.c.h.b16 %v2488
        %v2721 = vunpack.c.l.b16 %v2489
        %v2722 = vunpack.c.l.b16 %v2490
        %v2723 = vunpack.c.h.b16 %v2490
        %v2724 = vunpack.c.l.b16 %v2491
        %v2725 = vunpack.c.h.b16 %v2491
        %v2726 = vunpack.c.l.b16 %v2492
        %v2727 = vunpack.c.l.b16 %v2493
        %v2728 = vunpack.c.h.b16 %v2493
        %v2729 = vunpack.c.l.b16 %v2494
        %v2730 = vunpack.c.h.b16 %v2494
        %v2731 = vunpack.c.l.b16 %v2495
        %v2732 = vunpack.c.l.b16 %v2496
        %v2733 = vunpack.c.h.b16 %v2496
        %v2734 = vunpack.c.l.b16 %v2497
        %v2735 = vunpack.c.h.b16 %v2497
        %v2736 = vunpack.c.l.b16 %v2498
        %v2737 = vunpack.c.l.b16 %v2499
        %v2738 = vunpack.c.h.b16 %v2499
        %v2739 = vunpack.c.l.b16 %v2500
        %v2740 = vunpack.c.h.b16 %v2500
        %v2741 = vunpack.c.l.b16 %v2501
        %v2742 = vunpack.c.l.b16 %v2502
        %v2743 = vunpack.c.h.b16 %v2502
        %v2744 = vunpack.c.l.b16 %v2503
        %v2745 = vunpack.c.h.b16 %v2503
        %v2746 = vunpack.c.l.b16 %v2504
        %v2747 = vunpack.c.l.b16 %v2505
        %v2748 = vunpack.c.h.b16 %v2505
        %v2749 = vunpack.c.l.b16 %v2506
        %v2750 = vunpack.c.h.b16 %v2506
        %v2751 = vunpack.c.l.b16 %v2507
        %v2752 = vunpack.c.l.b16 %v2508
        %v2753 = vunpack.c.h.b16 %v2508
        %v2754 = vunpack.c.l.b16 %v2509
        %v2755 = vunpack.c.h.b16 %v2509
        %v2756 = vunpack.c.l.b16 %v2510
        %v2757 = vunpack.c.l.b16 %v2511
        %v2758 = vunpack.c.h.b16 %v2511
        %v2759 = vunpack.c.l.b16 %v2512
        %v2760 = vunpack.c.h.b16 %v2512
        %v2761 = vunpack.c.l.b16 %v2513
        %v2762 = vunpack.c.l.b16 %v2514
        %v2763 = vunpack.c.h.b16 %v2514
        %v2764 = vunpack.c.l.b16 %v2515
        %v2765 = vunpack.c.h.b16 %v2515
        %v2766 = vunpack.c.l.b16 %v2516
        %v2767 = vunpack.c.l.b16 %v2517
        %v2768 = vunpack.c.h.b16 %v2517
        %v2769 = vunpack.c.l.b16 %v2518
        %v2770 = vunpack.c.h.b16 %v2518
        %v2771 = vunpack.c.l.b16 %v2519
        %v2772 = vunpack.c.l.b16 %v2520
        %v2773 = vunpack.c.h.b16 %v2520
        %v2774 = vunpack.c.l.b16 %v2521
        %v2775 = vunpack.c.h.b16 %v2521
        %v2776 = vunpack.c.l.b16 %v2522
        %v2777 = vunpack.c.l.b16 %v2523
        %v2778 = vunpack.c.h.b16 %v2523
        %v2779 = vunpack.c.l.b16 %v2524
        %v2780 = vunpack.c.h.b16 %v2524
        %v2781 = vunpack.c.l.b16 %v2525
        %v2782 = vunpack.c.l.b16 %v2526
        %v2783 = vunpack.c.h.b16 %v2526
        %v2784 = vunpack.c.l.b16 %v2527
        %v2785 = vunpack.c.h.b16 %v2527
        %v2786 = vunpack.c.l.b16 %v2528
        %v2787 = vunpack.c.l.b16 %v2529
        %v2788 = vunpack.c.h.b16 %v2529
        %v2789 = vunpack.c.l.b16 %v2530
        %v2790 = vunpack.c.h.b16 %v2530
        %v2791 = vunpack.c.l.b16 %v2531
        %v2792 = vunpack.c.l.b16 %v2532
        %v2793 = vunpack.c.h.b16 %v2532
        %v2794 = vunpack.c.l.b16 %v2533
        %v2795 = vunpack.c.h.b16 %v2533
        %v2796 = vunpack.c.l.b16 %v2534
        %v2797 = vunpack.c.l.b16 %v2535
        %v2798 = vunpack.c.h.b16 %v2535
        %v2799 = vunpack.c.l.b16 %v2536
        %v2800 = vunpack.c.h.b16 %v2536
        %v2801 = vunpack.c.l.b16 %v2537
        %v2802 = vpack.c.b16 %v2687, %v2682
        %v2803 = vpack.c.b16 %v2688, %v2683
        %v2804 = vpack.c.b16 %v2689, %v2684
        %v2805 = vpack.c.b16 %v2690, %v2685
        %v2806 = vpack.c.b16 %v2691, %v2686
        %v2807 = vpack.c.b16 %v2697, %v2692
        %v2808 = vpack.c.b16 %v2698, %v2693
        %v2809 = vpack.c.b16 %v2699, %v2694
        %v2810 = vpack.c.b16 %v2700, %v2695
        %v2811 = vpack.c.b16 %v2701, %v2696
        %v2812 = vpack.c.b16 %v2707, %v2702
        %v2813 = vpack.c.b16 %v2708, %v2703
        %v2814 = vpack.c.b16 %v2709, %v2704
        %v2815 = vpack.c.b16 %v2710, %v2705
        %v2816 = vpack.c.b16 %v2711, %v2706
        %v2817 = vpack.c.b16 %v2717, %v2712
        %v2818 = vpack.c.b16 %v2718, %v2713
        %v2819 = vpack.c.b16 %v2719, %v2714
        %v2820 = vpack.c.b16 %v2720, %v2715
        %v2821 = vpack.c.b16 %v2721, %v2716
        %v2822 = vpack.c.b16 %v2727, %v2722
        %v2823 = vpack.c.b16 %v2728, %v2723
        %v2824 = vpack.c.b16 %v2729, %v2724
        %v2825 = vpack.c.b16 %v2730, %v2725
        %v2826 = vpack.c.b16 %v2731, %v2726
        %v2827 = vpack.c.b16 %v2737, %v2732
        %v2828 = vpack.c.b16 %v2738, %v2733
        %v2829 = vpack.c.b16 %v2739, %v2734
        %v2830 = vpack.c.b16 %v2740, %v2735
        %v2831 = vpack.c.b16 %v2741, %v2736
        %v2832 = vpack.c.b16 %v2747, %v2742
        %v2833 = vpack.c.b16 %v2748, %v2743
        %v2834 = vpack.c.b16 %v2749, %v2744
        %v2835 = vpack.c.b16 %v2750, %v2745
        %v2836 = vpack.c.b16 %v2751, %v2746
        %v2837 = vpack.c.b16 %v2757, %v2752
        %v2838 = vpack.c.b16 %v2758, %v2753
        %v2839 = vpack.c.b16 %v2759, %v2754
        %v2840 = vpack.c.b16 %v2760, %v2755
        %v2841 = vpack.c.b16 %v2761, %v2756
        %v2842 = vpack.c.b16 %v2767, %v2762
        %v2843 = vpack.c.b16 %v2768, %v2763
        %v2844 = vpack.c.b16 %v2769, %v2764
        %v2845 = vpack.c.b16 %v2770, %v2765
        %v2846 = vpack.c.b16 %v2771, %v2766
        %v2847 = vpack.c.b16 %v2777, %v2772
        %v2848 = vpack.c.b16 %v2778, %v2773
        %v2849 = vpack.c.b16 %v2779, %v2774
        %v2850 = vpack.c.b16 %v2780, %v2775
        %v2851 = vpack.c.b16 %v2781, %v2776
        %v2852 = vpack.c.b16 %v2787, %v2782
        %v2853 = vpack.c.b16 %v2788, %v2783
        %v2854 = vpack.c.b16 %v2789, %v2784
        %v2855 = vpack.c.b16 %v2790, %v2785
        %v2856 = vpack.c.b16 %v2791, %v2786
        %v2857 = vpack.c.b16 %v2797, %v2792
        %v2858 = vpack.c.b16 %v2798, %v2793
        %v2859 = vpack.c.b16 %v2799, %v2794
        %v2860 = vpack.c.b16 %v2800, %v2795
        %v2861 = vpack.c.b16 %v2801, %v2796
        %v2982 = vunpack.c.l.b16 %v2538
        %v2983 = vunpack.c.l.b16 %v2539
        %v2984 = vunpack.c.l.b16 %v2540
        %v2985 = vunpack.c.l.b16 %v2541
        %v2986 = vunpack.c.l.b16 %v2542
        %v2987 = vunpack.c.l.b16 %v2543
        %v2988 = vunpack.c.l.b16 %v2544
        %v2989 = vunpack.c.l.b16 %v2545
        %v2990 = vunpack.c.l.b16 %v2546
        %v2991 = vunpack.c.l.b16 %v2547
        %v2992 = vunpack.c.l.b16 %v2548
        %v2993 = vunpack.c.l.b16 %v2549
        %v2994 = vunpack.c.l.b16 %v2550
        %v2995 = vunpack.c.l.b16 %v2551
        %v2996 = vunpack.c.l.b16 %v2552
        %v2997 = vunpack.c.l.b16 %v2553
        %v2998 = vunpack.c.l.b16 %v2554
        %v2999 = vunpack.c.l.b16 %v2555
        %v3000 = vunpack.c.l.b16 %v2556
        %v3001 = vunpack.c.l.b16 %v2557
        %v3002 = vunpack.c.l.b16 %v2558
        %v3003 = vunpack.c.l.b16 %v2559
        %v3004 = vunpack.c.l.b16 %v2560
        %v3005 = vunpack.c.l.b16 %v2561
        %v3006 = vunpack.c.l.b16 %v2562
        %v3007 = vunpack.c.l.b16 %v2563
        %v3008 = vunpack.c.l.b16 %v2564
        %v3009 = vunpack.c.l.b16 %v2565
        %v3010 = vunpack.c.l.b16 %v2566
        %v3011 = vunpack.c.l.b16 %v2567
        %v3012 = vunpack.c.l.b16 %v2568
        %v3013 = vunpack.c.l.b16 %v2569
        %v3014 = vunpack.c.l.b16 %v2570
        %v3015 = vunpack.c.l.b16 %v2571
        %v3016 = vunpack.c.l.b16 %v2572
        %v3017 = vunpack.c.l.b16 %v2573
        %v3018 = vunpack.c.l.b16 %v2574
        %v3019 = vunpack.c.l.b16 %v2575
        %v3020 = vunpack.c.l.b16 %v2576
        %v3021 = vunpack.c.l.b16 %v2577
        %v3022 = vunpack.c.l.b16 %v2578
        %v3023 = vunpack.c.l.b16 %v2579
        %v3024 = vunpack.c.l.b16 %v2580
        %v3025 = vunpack.c.l.b16 %v2581
        %v3026 = vunpack.c.l.b16 %v2582
        %v3027 = vunpack.c.l.b16 %v2583
        %v3028 = vunpack.c.l.b16 %v2584
        %v3029 = vunpack.c.l.b16 %v2585
        %v3030 = vunpack.c.l.b16 %v2586
        %v3031 = vunpack.c.l.b16 %v2587
        %v3032 = vunpack.c.l.b16 %v2588
        %v3033 = vunpack.c.l.b16 %v2589
        %v3034 = vunpack.c.l.b16 %v2590
        %v3035 = vunpack.c.l.b16 %v2591
        %v3036 = vunpack.c.l.b16 %v2592
        %v3037 = vunpack.c.l.b16 %v2593
        %v3038 = vunpack.c.l.b16 %v2594
        %v3039 = vunpack.c.l.b16 %v2595
        %v3040 = vunpack.c.l.b16 %v2596
        %v3041 = vunpack.c.l.b16 %v2597
        %v3042 = vunpack.c.l.b16 %v2598
        %v3043 = vunpack.c.l.b16 %v2599
        %v3044 = vunpack.c.l.b16 %v2600
        %v3045 = vunpack.c.l.b16 %v2601
        %v3046 = vunpack.c.l.b16 %v2602
        %v3047 = vunpack.c.l.b16 %v2603
        %v3048 = vunpack.c.l.b16 %v2604
        %v3049 = vunpack.c.l.b16 %v2605
        %v3050 = vunpack.c.l.b16 %v2606
        %v3051 = vunpack.c.l.b16 %v2607
        %v3052 = vunpack.c.l.b16 %v2608
        %v3053 = vunpack.c.l.b16 %v2609
        %v3054 = vpack.c.b16 %v2983, %v2982
        %v3055 = vpack.c.b16 %v2985, %v2984
        %v3056 = vpack.c.b16 %v2987, %v2986
        %v3057 = vpack.c.b16 %v2989, %v2988
        %v3058 = vpack.c.b16 %v2991, %v2990
        %v3059 = vpack.c.b16 %v2993, %v2992
        %v3060 = vpack.c.b16 %v2995, %v2994
        %v3061 = vpack.c.b16 %v2997, %v2996
        %v3062 = vpack.c.b16 %v2999, %v2998
        %v3063 = vpack.c.b16 %v3001, %v3000
        %v3064 = vpack.c.b16 %v3003, %v3002
        %v3065 = vpack.c.b16 %v3005, %v3004
        %v3066 = vpack.c.b16 %v3007, %v3006
        %v3067 = vpack.c.b16 %v3009, %v3008
        %v3068 = vpack.c.b16 %v3011, %v3010
        %v3069 = vpack.c.b16 %v3013, %v3012
        %v3070 = vpack.c.b16 %v3015, %v3014
        %v3071 = vpack.c.b16 %v3017, %v3016
        %v3072 = vpack.c.b16 %v3019, %v3018
        %v3073 = vpack.c.b16 %v3021, %v3020
        %v3074 = vpack.c.b16 %v3023, %v3022
        %v3075 = vpack.c.b16 %v3025, %v3024
        %v3076 = vpack.c.b16 %v3027, %v3026
        %v3077 = vpack.c.b16 %v3029, %v3028
        %v3078 = vpack.c.b16 %v3031, %v3030
        %v3079 = vpack.c.b16 %v3033, %v3032
        %v3080 = vpack.c.b16 %v3035, %v3034
        %v3081 = vpack.c.b16 %v3037, %v3036
        %v3082 = vpack.c.b16 %v3039, %v3038
        %v3083 = vpack.c.b16 %v3041, %v3040
        %v3084 = vpack.c.b16 %v3043, %v3042
        %v3085 = vpack.c.b16 %v3045, %v3044
        %v3086 = vpack.c.b16 %v3047, %v3046
        %v3087 = vpack.c.b16 %v3049, %v3048
        %v3088 = vpack.c.b16 %v3051, %v3050
        %v3089 = vpack.c.b16 %v3053, %v3052
        %vm3126 = vcmask 523264
        %v3128 = vsel %vm3126, %v2806, 0
        %v3131 = vsel %vm3126, %v2811, 0
        %v3134 = vsel %vm3126, %v2816, 0
        %v3137 = vsel %vm3126, %v2821, 0
        %v3140 = vsel %vm3126, %v2826, 0
        %v3143 = vsel %vm3126, %v2831, 0
        %v3146 = vsel %vm3126, %v2836, 0
        %v3149 = vsel %vm3126, %v2841, 0
        %v3152 = vsel %vm3126, %v2846, 0
        %v3155 = vsel %vm3126, %v2851, 0
        %v3158 = vsel %vm3126, %v2856, 0
        %v3161 = vsel %vm3126, %v2861, 0
        %3163 = vmatpush.bf16.msra.mxu0 %v3061
        %3164 = vmatpush.bf16.msra.mxu0 %v3060
        %3165 = vmatpush.bf16.msra.mxu0 %v3059
        %3166 = vmatpush.bf16.msra.mxu0 %v3058
        %3167 = vmatpush.bf16.msra.mxu0 %v3057
        %3168 = vmatpush.bf16.msra.mxu0 %v3056
        %3169 = vmatpush.bf16.msra.mxu0 %v3055
        %3170 = vmatpush.bf16.msra.mxu0 %v3054
        %3171 = vmatmul.bf16.gmra.mxu0 %v2802
        %v3172 = vpop.f32.mrf.mxu0
        %v3173 = vadd.f32 0.0, %v3172
        %v3174 = vpop.f32.mrf.mxu0
        %v3175 = vadd.f32 0.0, %v3174
        %3176 = vmatmul.bf16.gmra.mxu0 %v2807
        %v3177 = vpop.f32.mrf.mxu0
        %v3178 = vpop.f32.mrf.mxu0
        %v3179 = vadd.f32 0.0, %v3178
        %3180 = vmatmul.bf16.gmra.mxu0 %v2812
        %v3181 = vpop.f32.mrf.mxu0
        %v3182 = vadd.f32 0.0, %v3181
        %v3183 = vpop.f32.mrf.mxu0
        %3184 = vmatmul.bf16.gmra.mxu0 %v2817
        %v3185 = vpop.f32.mrf.mxu0
        %v3186 = vadd.f32 0.0, %v3185
        %v3187 = vpop.f32.mrf.mxu0
        %v3188 = vadd.f32 0.0, %v3187
        %3189 = vmatmul.bf16.gmra.mxu0 %v2822
        %v3190 = vpop.f32.mrf.mxu0
        %v3191 = vpop.f32.mrf.mxu0
        %v3192 = vadd.f32 0.0, %v3191
        %3193 = vmatmul.bf16.gmra.mxu0 %v2827
        %v3194 = vpop.f32.mrf.mxu0
        %v3195 = vadd.f32 0.0, %v3194
        %v3196 = vpop.f32.mrf.mxu0
        %3197 = vmatmul.bf16.gmra.mxu0 %v2832
        %v3198 = vpop.f32.mrf.mxu0
        %v3199 = vadd.f32 0.0, %v3198
        %v3200 = vpop.f32.mrf.mxu0
        %v3201 = vadd.f32 0.0, %v3200
        %3202 = vmatmul.bf16.gmra.mxu0 %v2837
        %v3203 = vpop.f32.mrf.mxu0
        %v3204 = vpop.f32.mrf.mxu0
        %v3205 = vadd.f32 0.0, %v3204
        %3206 = vmatmul.bf16.gmra.mxu0 %v2842
        %v3207 = vpop.f32.mrf.mxu0
        %v3208 = vadd.f32 0.0, %v3207
        %v3209 = vpop.f32.mrf.mxu0
        %3210 = vmatmul.bf16.gmra.mxu0 %v2847
        %v3211 = vpop.f32.mrf.mxu0
        %v3212 = vadd.f32 0.0, %v3211
        %v3213 = vpop.f32.mrf.mxu0
        %v3214 = vadd.f32 0.0, %v3213
        %3215 = vmatmul.bf16.gmra.mxu0 %v2852
        %v3216 = vpop.f32.mrf.mxu0
        %v3217 = vpop.f32.mrf.mxu0
        %v3218 = vadd.f32 0.0, %v3217
        %3219 = vmatmul.bf16.gmra.mxu0 %v2857
        %v3220 = vpop.f32.mrf.mxu0
        %v3221 = vadd.f32 0.0, %v3220
        %v3222 = vpop.f32.mrf.mxu0
        %3223 = vdwg.mxu0
        %3224 = vmatpush.bf16.msra.mxu0 %v3069
        %3225 = vmatpush.bf16.msra.mxu0 %v3068
        %3226 = vmatpush.bf16.msra.mxu0 %v3067
        %3227 = vmatpush.bf16.msra.mxu0 %v3066
        %3228 = vmatpush.bf16.msra.mxu0 %v3065
        %3229 = vmatpush.bf16.msra.mxu0 %v3064
        %3230 = vmatpush.bf16.msra.mxu0 %v3063
        %3231 = vmatpush.bf16.msra.mxu0 %v3062
        %3232 = vmatmul.bf16.gmra.mxu0 %v2803
        %v3233 = vpop.f32.mrf.mxu0
        %v3234 = vadd.f32 %v3173, %v3233
        %v3235 = vpop.f32.mrf.mxu0
        %v3236 = vadd.f32 %v3175, %v3235
        %3237 = vmatmul.bf16.gmra.mxu0 %v2808
        %v3238 = vpop.f32.mrf.mxu0
        %v3239 = vpop.f32.mrf.mxu0
        %v3240 = vadd.f32 %v3179, %v3239
        %3241 = vmatmul.bf16.gmra.mxu0 %v2813
        %v3242 = vpop.f32.mrf.mxu0
        %v3243 = vadd.f32 %v3182, %v3242
        %v3244 = vpop.f32.mrf.mxu0
        %3245 = vmatmul.bf16.gmra.mxu0 %v2818
        %v3246 = vpop.f32.mrf.mxu0
        %v3247 = vadd.f32 %v3186, %v3246
        %v3248 = vpop.f32.mrf.mxu0
        %v3249 = vadd.f32 %v3188, %v3248
        %3250 = vmatmul.bf16.gmra.mxu0 %v2823
        %v3251 = vpop.f32.mrf.mxu0
        %v3252 = vpop.f32.mrf.mxu0
        %v3253 = vadd.f32 %v3192, %v3252
        %3254 = vmatmul.bf16.gmra.mxu0 %v2828
        %v3255 = vpop.f32.mrf.mxu0
        %v3256 = vadd.f32 %v3195, %v3255
        %v3257 = vpop.f32.mrf.mxu0
        %3258 = vmatmul.bf16.gmra.mxu0 %v2833
        %v3259 = vpop.f32.mrf.mxu0
        %v3260 = vadd.f32 %v3199, %v3259
        %v3261 = vpop.f32.mrf.mxu0
        %v3262 = vadd.f32 %v3201, %v3261
        %3263 = vmatmul.bf16.gmra.mxu0 %v2838
        %v3264 = vpop.f32.mrf.mxu0
        %v3265 = vpop.f32.mrf.mxu0
        %v3266 = vadd.f32 %v3205, %v3265
        %3267 = vmatmul.bf16.gmra.mxu0 %v2843
        %v3268 = vpop.f32.mrf.mxu0
        %v3269 = vadd.f32 %v3208, %v3268
        %v3270 = vpop.f32.mrf.mxu0
        %3271 = vmatmul.bf16.gmra.mxu0 %v2848
        %v3272 = vpop.f32.mrf.mxu0
        %v3273 = vadd.f32 %v3212, %v3272
        %v3274 = vpop.f32.mrf.mxu0
        %v3275 = vadd.f32 %v3214, %v3274
        %3276 = vmatmul.bf16.gmra.mxu0 %v2853
        %v3277 = vpop.f32.mrf.mxu0
        %v3278 = vpop.f32.mrf.mxu0
        %v3279 = vadd.f32 %v3218, %v3278
        %3280 = vmatmul.bf16.gmra.mxu0 %v2858
        %v3281 = vpop.f32.mrf.mxu0
        %v3282 = vadd.f32 %v3221, %v3281
        %v3283 = vpop.f32.mrf.mxu0
        %3284 = vdwg.mxu0
        %3285 = vmatpush.bf16.msra.mxu0 %v3077
        %3286 = vmatpush.bf16.msra.mxu0 %v3076
        %3287 = vmatpush.bf16.msra.mxu0 %v3075
        %3288 = vmatpush.bf16.msra.mxu0 %v3074
        %3289 = vmatpush.bf16.msra.mxu0 %v3073
        %3290 = vmatpush.bf16.msra.mxu0 %v3072
        %3291 = vmatpush.bf16.msra.mxu0 %v3071
        %3292 = vmatpush.bf16.msra.mxu0 %v3070
        %3293 = vmatmul.bf16.gmra.mxu0 %v2804
        %v3294 = vpop.f32.mrf.mxu0
        %v3295 = vadd.f32 %v3234, %v3294
        %v3296 = vpop.f32.mrf.mxu0
        %v3297 = vadd.f32 %v3236, %v3296
        %3298 = vmatmul.bf16.gmra.mxu0 %v2809
        %v3299 = vpop.f32.mrf.mxu0
        %v3300 = vpop.f32.mrf.mxu0
        %v3301 = vadd.f32 %v3240, %v3300
        %3302 = vmatmul.bf16.gmra.mxu0 %v2814
        %v3303 = vpop.f32.mrf.mxu0
        %v3304 = vadd.f32 %v3243, %v3303
        %v3305 = vpop.f32.mrf.mxu0
        %3306 = vmatmul.bf16.gmra.mxu0 %v2819
        %v3307 = vpop.f32.mrf.mxu0
        %v3308 = vadd.f32 %v3247, %v3307
        %v3309 = vpop.f32.mrf.mxu0
        %v3310 = vadd.f32 %v3249, %v3309
        %3311 = vmatmul.bf16.gmra.mxu0 %v2824
        %v3312 = vpop.f32.mrf.mxu0
        %v3313 = vpop.f32.mrf.mxu0
        %v3314 = vadd.f32 %v3253, %v3313
        %3315 = vmatmul.bf16.gmra.mxu0 %v2829
        %v3316 = vpop.f32.mrf.mxu0
        %v3317 = vadd.f32 %v3256, %v3316
        %v3318 = vpop.f32.mrf.mxu0
        %3319 = vmatmul.bf16.gmra.mxu0 %v2834
        %v3320 = vpop.f32.mrf.mxu0
        %v3321 = vadd.f32 %v3260, %v3320
        %v3322 = vpop.f32.mrf.mxu0
        %v3323 = vadd.f32 %v3262, %v3322
        %3324 = vmatmul.bf16.gmra.mxu0 %v2839
        %v3325 = vpop.f32.mrf.mxu0
        %v3326 = vpop.f32.mrf.mxu0
        %v3327 = vadd.f32 %v3266, %v3326
        %3328 = vmatmul.bf16.gmra.mxu0 %v2844
        %v3329 = vpop.f32.mrf.mxu0
        %v3330 = vadd.f32 %v3269, %v3329
        %v3331 = vpop.f32.mrf.mxu0
        %3332 = vmatmul.bf16.gmra.mxu0 %v2849
        %v3333 = vpop.f32.mrf.mxu0
        %v3334 = vadd.f32 %v3273, %v3333
        %v3335 = vpop.f32.mrf.mxu0
        %v3336 = vadd.f32 %v3275, %v3335
        %3337 = vmatmul.bf16.gmra.mxu0 %v2854
        %v3338 = vpop.f32.mrf.mxu0
        %v3339 = vpop.f32.mrf.mxu0
        %v3340 = vadd.f32 %v3279, %v3339
        %3341 = vmatmul.bf16.gmra.mxu0 %v2859
        %v3342 = vpop.f32.mrf.mxu0
        %v3343 = vadd.f32 %v3282, %v3342
        %v3344 = vpop.f32.mrf.mxu0
        %3345 = vdwg.mxu0
        %3346 = vmatpush.bf16.msra.mxu0 %v3085
        %3347 = vmatpush.bf16.msra.mxu0 %v3084
        %3348 = vmatpush.bf16.msra.mxu0 %v3083
        %3349 = vmatpush.bf16.msra.mxu0 %v3082
        %3350 = vmatpush.bf16.msra.mxu0 %v3081
        %3351 = vmatpush.bf16.msra.mxu0 %v3080
        %3352 = vmatpush.bf16.msra.mxu0 %v3079
        %3353 = vmatpush.bf16.msra.mxu0 %v3078
        %3354 = vmatmul.bf16.gmra.mxu0 %v2805
        %v3355 = vpop.f32.mrf.mxu0
        %v3356 = vadd.f32 %v3295, %v3355
        %v3357 = vpop.f32.mrf.mxu0
        %v3358 = vadd.f32 %v3297, %v3357
        %3359 = vmatmul.bf16.gmra.mxu0 %v2810
        %v3360 = vpop.f32.mrf.mxu0
        %v3361 = vpop.f32.mrf.mxu0
        %v3362 = vadd.f32 %v3301, %v3361
        %3363 = vmatmul.bf16.gmra.mxu0 %v2815
        %v3364 = vpop.f32.mrf.mxu0
        %v3365 = vadd.f32 %v3304, %v3364
        %v3366 = vpop.f32.mrf.mxu0
        %3367 = vmatmul.bf16.gmra.mxu0 %v2820
        %v3368 = vpop.f32.mrf.mxu0
        %v3369 = vadd.f32 %v3308, %v3368
        %v3370 = vpop.f32.mrf.mxu0
        %v3371 = vadd.f32 %v3310, %v3370
        %3372 = vmatmul.bf16.gmra.mxu0 %v2825
        %v3373 = vpop.f32.mrf.mxu0
        %v3374 = vpop.f32.mrf.mxu0
        %v3375 = vadd.f32 %v3314, %v3374
        %3376 = vmatmul.bf16.gmra.mxu0 %v2830
        %v3377 = vpop.f32.mrf.mxu0
        %v3378 = vadd.f32 %v3317, %v3377
        %v3379 = vpop.f32.mrf.mxu0
        %3380 = vmatmul.bf16.gmra.mxu0 %v2835
        %v3381 = vpop.f32.mrf.mxu0
        %v3382 = vadd.f32 %v3321, %v3381
        %v3383 = vpop.f32.mrf.mxu0
        %v3384 = vadd.f32 %v3323, %v3383
        %3385 = vmatmul.bf16.gmra.mxu0 %v2840
        %v3386 = vpop.f32.mrf.mxu0
        %v3387 = vpop.f32.mrf.mxu0
        %v3388 = vadd.f32 %v3327, %v3387
        %3389 = vmatmul.bf16.gmra.mxu0 %v2845
        %v3390 = vpop.f32.mrf.mxu0
        %v3391 = vadd.f32 %v3330, %v3390
        %v3392 = vpop.f32.mrf.mxu0
        %3393 = vmatmul.bf16.gmra.mxu0 %v2850
        %v3394 = vpop.f32.mrf.mxu0
        %v3395 = vadd.f32 %v3334, %v3394
        %v3396 = vpop.f32.mrf.mxu0
        %v3397 = vadd.f32 %v3336, %v3396
        %3398 = vmatmul.bf16.gmra.mxu0 %v2855
        %v3399 = vpop.f32.mrf.mxu0
        %v3400 = vpop.f32.mrf.mxu0
        %v3401 = vadd.f32 %v3340, %v3400
        %3402 = vmatmul.bf16.gmra.mxu0 %v2860
        %v3403 = vpop.f32.mrf.mxu0
        %v3404 = vadd.f32 %v3343, %v3403
        %v3405 = vpop.f32.mrf.mxu0
        %3406 = vdwg.mxu0
        %3407 = vmatpush.bf16.msra.mxu0 0
        %3408 = vmatpush.bf16.msra.mxu0 0
        %3409 = vmatpush.bf16.msra.mxu0 0
        %3410 = vmatpush.bf16.msra.mxu0 0
        %3411 = vmatpush.bf16.msra.mxu0 %v3089
        %3412 = vmatpush.bf16.msra.mxu0 %v3088
        %3413 = vmatpush.bf16.msra.mxu0 %v3087
        %3414 = vmatpush.bf16.msra.mxu0 %v3086
        %3415 = vmatmul.bf16.gmra.mxu0 %v3128
        %v3416 = vpop.f32.mrf.mxu0
        %v3417 = vadd.f32 %v3356, %v3416
        %v3418 = vpop.f32.mrf.mxu0
        %v3419 = vadd.f32 %v3358, %v3418
        %3420 = vmatmul.bf16.gmra.mxu0 %v3131
        %v3421 = vpop.f32.mrf.mxu0
        %v3422 = vpop.f32.mrf.mxu0
        %v3423 = vadd.f32 %v3362, %v3422
        %3424 = vmatmul.bf16.gmra.mxu0 %v3134
        %v3425 = vpop.f32.mrf.mxu0
        %v3426 = vadd.f32 %v3365, %v3425
        %v3427 = vpop.f32.mrf.mxu0
        %3428 = vmatmul.bf16.gmra.mxu0 %v3137
        %v3429 = vpop.f32.mrf.mxu0
        %v3430 = vadd.f32 %v3369, %v3429
        %v3431 = vpop.f32.mrf.mxu0
        %v3432 = vadd.f32 %v3371, %v3431
        %3433 = vmatmul.bf16.gmra.mxu0 %v3140
        %v3434 = vpop.f32.mrf.mxu0
        %v3435 = vpop.f32.mrf.mxu0
        %v3436 = vadd.f32 %v3375, %v3435
        %3437 = vmatmul.bf16.gmra.mxu0 %v3143
        %v3438 = vpop.f32.mrf.mxu0
        %v3439 = vadd.f32 %v3378, %v3438
        %v3440 = vpop.f32.mrf.mxu0
        %3441 = vmatmul.bf16.gmra.mxu0 %v3146
        %v3442 = vpop.f32.mrf.mxu0
        %v3443 = vadd.f32 %v3382, %v3442
        %v3444 = vpop.f32.mrf.mxu0
        %v3445 = vadd.f32 %v3384, %v3444
        %3446 = vmatmul.bf16.gmra.mxu0 %v3149
        %v3447 = vpop.f32.mrf.mxu0
        %v3448 = vpop.f32.mrf.mxu0
        %v3449 = vadd.f32 %v3388, %v3448
        %3450 = vmatmul.bf16.gmra.mxu0 %v3152
        %v3451 = vpop.f32.mrf.mxu0
        %v3452 = vadd.f32 %v3391, %v3451
        %v3453 = vpop.f32.mrf.mxu0
        %3454 = vmatmul.bf16.gmra.mxu0 %v3155
        %v3455 = vpop.f32.mrf.mxu0
        %v3456 = vadd.f32 %v3395, %v3455
        %v3457 = vpop.f32.mrf.mxu0
        %v3458 = vadd.f32 %v3397, %v3457
        %3459 = vmatmul.bf16.gmra.mxu0 %v3158
        %v3460 = vpop.f32.mrf.mxu0
        %v3461 = vpop.f32.mrf.mxu0
        %v3462 = vadd.f32 %v3401, %v3461
        %3463 = vmatmul.bf16.gmra.mxu0 %v3161
        %v3464 = vpop.f32.mrf.mxu0
        %v3465 = vadd.f32 %v3404, %v3464
        %v3466 = vpop.f32.mrf.mxu0
        %3467 = vdwg.mxu0
        %v3468 = vld [vmem:[%s2] sm:$0x1]
        %v3470 = vperm.slane %v3468, 0
        %v3472 = vadd.f32 %v3417, %v3470
        %v3473 = vadd.f32 %v3419, %v3470
        %v3474 = vadd.f32 %v3423, %v3470
        %v3475 = vadd.f32 %v3426, %v3470
        %v3476 = vadd.f32 %v3430, %v3470
        %v3477 = vadd.f32 %v3432, %v3470
        %v3478 = vadd.f32 %v3436, %v3470
        %v3479 = vadd.f32 %v3439, %v3470
        %v3480 = vadd.f32 %v3443, %v3470
        %v3481 = vadd.f32 %v3445, %v3470
        %v3482 = vadd.f32 %v3449, %v3470
        %v3483 = vadd.f32 %v3452, %v3470
        %v3484 = vadd.f32 %v3456, %v3470
        %v3485 = vadd.f32 %v3458, %v3470
        %v3486 = vadd.f32 %v3462, %v3470
        %v3487 = vadd.f32 %v3465, %v3470
        %v3488 = vpack.c.bf16 %v3472, %v3472
        %v3489 = vpack.c.bf16 %v3473, %v3473
        %v3490 = vpack.c.bf16 %v3474, %v3474
        %v3491 = vpack.c.bf16 %v3475, %v3475
        %v3492 = vpack.c.bf16 %v3476, %v3476
        %v3493 = vpack.c.bf16 %v3477, %v3477
        %v3494 = vpack.c.bf16 %v3478, %v3478
        %v3495 = vpack.c.bf16 %v3479, %v3479
        %v3496 = vpack.c.bf16 %v3480, %v3480
        %v3497 = vpack.c.bf16 %v3481, %v3481
        %v3498 = vpack.c.bf16 %v3482, %v3482
        %v3499 = vpack.c.bf16 %v3483, %v3483
        %v3500 = vpack.c.bf16 %v3484, %v3484
        %v3501 = vpack.c.bf16 %v3485, %v3485
        %v3502 = vpack.c.bf16 %v3486, %v3486
        %v3503 = vpack.c.bf16 %v3487, %v3487
        %3504 = vst.msk [vmem:[%s177] sm:$0xf] %vm798, %v3488
        %3505 = vst.msk [vmem:[%s177 + $0x4] sm:$0xf] %vm798, %v3489
        %3506 = vst.msk [vmem:[%s177 + $0x8] sm:$0xf] %vm798, %v3490
        %3507 = vst.msk [vmem:[%s177 + $0xc] sm:$0xf] %vm798, %v3491
        %3508 = vst.msk [vmem:[%s177 + $0x10] sm:$0xf] %vm798, %v3492
        %3509 = vst.msk [vmem:[%s177 + $0x14] sm:$0xf] %vm798, %v3493
        %3510 = vst.msk [vmem:[%s177 + $0x18] sm:$0xf] %vm798, %v3494
        %3511 = vst.msk [vmem:[%s177 + $0x1c] sm:$0xf] %vm798, %v3495
        %3512 = vst.msk [vmem:[%s177 + $0x20] sm:$0xf] %vm798, %v3496
        %3513 = vst.msk [vmem:[%s177 + $0x24] sm:$0xf] %vm798, %v3497
        %3514 = vst.msk [vmem:[%s177 + $0x28] sm:$0xf] %vm798, %v3498
        %3515 = vst.msk [vmem:[%s177 + $0x2c] sm:$0xf] %vm798, %v3499
        %3516 = vst.msk [vmem:[%s177 + $0x30] sm:$0xf] %vm798, %v3500
        %3517 = vst.msk [vmem:[%s177 + $0x34] sm:$0xf] %vm798, %v3501
        %3518 = vst.msk [vmem:[%s177 + $0x38] sm:$0xf] %vm798, %v3502
        %3519 = vst.msk [vmem:[%s177 + $0x3c] sm:$0xf] %vm798, %v3503
        %s3520 = sand.u32 %s107, 1
        %s3521 = scalar_lea.sflag [#allocation5], %s3520
        %s3522 = sand.u32 %s107, 1
        %s3523 = smul.addr %s3522, 64
        %s3524 = scalar_lea.vmem [#allocation4], %s3523
        // Predicated region
        $region37: #{tpu_custom_call.1} parent=31 // pred_check
          %p3525 = pneg %p117
        $region38: #{tpu_custom_call.1} parent=31 // pred_check_branch
          %3527 = sbr.rel (%p3525) target = $region40
        $region39: #{tpu_custom_call.1} parent=31 // pred_region
          %s3528 = smul.u32 8, %s22
          %3530 = vsyncadd %s3521, 0
          %s3531 = smul.addr %s3528, 2
          %s3532 = smul.addr %s21, 32
          %s3533 = sadd.s32 %s3531, %s3532
          %s3534 = smul.addr %s3533, 4
          %s3535 = scalar_lea.hbm %s3, %s3534
          %s3536 = sshll.u32 %s3524, 4
          %s3537 = int_to_ptr.vmem [resolvable:$true] %s3536
          %s3538 = sshll.u32 %s3535, 4
          %s3539 = int_to_ptr.hbm [resolvable:$true] %s3538
          %3544 = dma.vmem_to_hbm [thread:$0]  %s3537, 1024, %s3539, %s3521, 64, 64, 4
        $region40: #{tpu_custom_call.1} parent=31 // pred_fallthru
          _
      $region32: #{tpu_custom_call.1} parent=5 // pred_fallthru
        _
      %p3545 = scmp.le.s32.totalorder 2, %s12
      // Predicated region
      $region41: #{tpu_custom_call.1} parent=5 // pred_check
        %p3546 = pneg %p3545
      $region42: #{tpu_custom_call.1} parent=5 // pred_check_branch
        %3548 = sbr.rel (%p3546) target = $region44
      $region43: #{tpu_custom_call.1} parent=5 // pred_region
        %s3549 = ssub.s32 %s12, 2
        // Predicated region
        $region45: #{tpu_custom_call.1} parent=43 // pred_check
          %p3550 = pneg %p123
        $region46: #{tpu_custom_call.1} parent=43 // pred_check_branch
          %3552 = sbr.rel (%p3550) target = $region48
        $region47: #{tpu_custom_call.1} parent=43 // pred_region
          %s3553 = sand.u32 %s108, 1
          %s3554 = scalar_lea.sflag [#allocation5], %s3553
          %s3555 = sand.u32 %s108, 1
          %s3556 = smul.addr %s3555, 64
          %s3557 = scalar_lea.vmem [#allocation4], %s3556
          %3559 = dma.done %s3554, 1024
        $region48: #{tpu_custom_call.1} parent=43 // pred_fallthru
          _
      $region44: #{tpu_custom_call.1} parent=5 // pred_fallthru
        _
    $region6: #{tpu_custom_call.1} parent=1 // loop_footer
      %s16 = sadd.s32 1, %s12
    $region7: #{tpu_custom_call.1} parent=1 // loop_footer_branch
      %11 = sbr.rel target = $region3
    $region8: #{tpu_custom_call.1} parent=1 // loop_exit
      _
    %3560 = vsyncpa [#allocation5], 1
    %s3561 = scalar_lea.sflag [#allocation5], 1
    %3562 = vsyncpa %s3561, 1

</llo_original>
